<compile_context>
chip_gen: v7x
topology: tpu7x:2x2x1
jax: 0.10.0
libtpu: 0.0.40
codegen_flags: <defaults>
</compile_context>

<pallas_src>
import jax
import jax.numpy as jnp
from jax.experimental import pallas as pl
from jax.experimental.pallas import tpu as pltpu

# ---------------- config (small, TPU-tile friendly) ----------------
BATCH = 2
SEQ = 256
DIM = 128          # model dim (lane axis)
HIDDEN = 256       # hidden dim of the synthetic f / g blocks (fills 256-wide MXU)
DEPTH = 2          # number of reversible blocks
TM = 256           # token-tile size (rows per grid step) -> grid of 2 steps


def _bf16_elementwise_ok():
    """bf16 VPU/EUP exists on v6e/v7x; keep GELU in f32 on v5-and-older."""
    try:
        kind = jax.devices()[0].device_kind.lower()
        return not any(tag in kind for tag in ("v2", "v3", "v4", "v5"))
    except Exception:
        return True


GELU_BF16 = _bf16_elementwise_ok()


def _ffn_bf16(x_f32, w1_bf16, b1_f32, w2_bf16, b2_f32):
    """Linear -> GELU(tanh) -> Linear.

    bf16 operands on the MXU with f32 accumulation.  On chips with bf16
    VPU/EUP the bias add + GELU of the hidden activation also run in bf16
    (it is cast to bf16 for the second matmul anyway).
    """
    h = jnp.dot(x_f32.astype(jnp.bfloat16), w1_bf16,
                preferred_element_type=jnp.float32) + b1_f32
    if GELU_BF16:
        h = jax.nn.gelu(h.astype(jnp.bfloat16), approximate=True)
    else:
        h = jax.nn.gelu(h, approximate=True).astype(jnp.bfloat16)
    return jnp.dot(h, w2_bf16, preferred_element_type=jnp.float32) + b2_f32


def reversible_kernel(x_ref,
                      wf1_ref, bf1_ref, wf2_ref, bf2_ref,
                      wg1_ref, bg1_ref, wg2_ref, bg2_ref,
                      o_ref):
    # cat([x, x], dim=-1) then chunk -> the two reversible streams start equal.
    x1 = x_ref[...].astype(jnp.float32)   # residual streams kept in f32
    x2 = x1
    depth = wf1_ref.shape[0]
    for l in range(depth):  # static unroll over reversible blocks
        y1 = x1 + _ffn_bf16(x2, wf1_ref[l], bf1_ref[l], wf2_ref[l], bf2_ref[l])
        y2 = x2 + _ffn_bf16(y1, wg1_ref[l], bg1_ref[l], wg2_ref[l], bg2_ref[l])
        x1, x2 = y1, y2
    # stack(chunk(y, 2, -1)).sum(0) == y1 + y2   (single lane-dense store)
    o_ref[...] = (x1 + x2).astype(o_ref.dtype)


def prepare_params(params):
    """One-time conversion outside the per-call path: weights -> bf16, biases f32."""
    out = dict(params)
    for k in ("wf1", "wf2", "wg1", "wg2"):
        out[k] = params[k].astype(jnp.bfloat16)
    return out


def _reversible_forward(x, params):
    """x: (B, N, D) float32. params: dict with bf16 weights + f32 biases."""
    B, N, D = x.shape
    rows = B * N
    assert rows % TM == 0 and D % 128 == 0
    xf = x.reshape(rows, D)

    w_args = (params["wf1"], params["bf1"], params["wf2"], params["bf2"],
              params["wg1"], params["bg1"], params["wg2"], params["bg2"])

    def const_spec(arr):
        # Constant block index across the grid -> no re-fetch; single-buffer it.
        nd = arr.ndim
        return pl.BlockSpec(arr.shape, lambda i, nd=nd: (0,) * nd,
                            pipeline_mode=pl.Buffered(1))

    # Advisory cost hint: 2 FFNs per reversible block, 2 matmuls per FFN.
    flops = DEPTH * 2 * 2 * 2 * rows * D * HIDDEN
    transcendentals = DEPTH * 2 * rows * HIDDEN
    bytes_accessed = (2 * rows * D * 4                      # input + output (f32)
                      + DEPTH * 4 * D * HIDDEN * 2          # bf16 weights
                      + DEPTH * 2 * (D + HIDDEN) * 4)       # f32 biases
    cost = pl.CostEstimate(flops=flops, transcendentals=transcendentals,
                           bytes_accessed=bytes_accessed)

    out = pl.pallas_call(
        reversible_kernel,
        out_shape=jax.ShapeDtypeStruct((rows, D), x.dtype),
        grid_spec=pltpu.PrefetchScalarGridSpec(
            num_scalar_prefetch=0,
            grid=(rows // TM,),
            in_specs=[pl.BlockSpec((TM, D), lambda i: (i, 0))]
                     + [const_spec(w) for w in w_args],
            out_specs=pl.BlockSpec((TM, D), lambda i: (i, 0)),
        ),
        compiler_params=pltpu.CompilerParams(
            dimension_semantics=("parallel",),
            vmem_limit_bytes=32 * 1024 * 1024,
        ),
        cost_estimate=cost,
    )(xf, *w_args)
    return out.reshape(B, N, D)


reversible_forward = jax.jit(_reversible_forward)


def init_params(key, depth, d, h):
    ks = jax.random.split(key, 8)
    s_in = 1.0 / jnp.sqrt(d)
    s_hid = 1.0 / jnp.sqrt(h)
    return {
        "wf1": jax.random.normal(ks[0], (depth, d, h), jnp.float32) * s_in,
        "bf1": jax.random.normal(ks[1], (depth, h), jnp.float32) * 0.02,
        "wf2": jax.random.normal(ks[2], (depth, h, d), jnp.float32) * s_hid,
        "bf2": jax.random.normal(ks[3], (depth, d), jnp.float32) * 0.02,
        "wg1": jax.random.normal(ks[4], (depth, d, h), jnp.float32) * s_in,
        "bg1": jax.random.normal(ks[5], (depth, h), jnp.float32) * 0.02,
        "wg2": jax.random.normal(ks[6], (depth, h, d), jnp.float32) * s_hid,
        "bg2": jax.random.normal(ks[7], (depth, d), jnp.float32) * 0.02,
    }


def _ffn_ref(x, w1, b1, w2, b2):
    h = jnp.dot(x, w1) + b1
    h = jax.nn.gelu(h, approximate=True)
    return jnp.dot(h, w2) + b2


def reversible_reference(x, params):
    """Pure-JAX f32 reference mirroring the PyTorch Reversible forward."""
    x1 = x.astype(jnp.float32)
    x2 = x.astype(jnp.float32)
    for l in range(DEPTH):
        y1 = x1 + _ffn_ref(x2, params["wf1"][l], params["bf1"][l],
                           params["wf2"][l], params["bf2"][l])
        y2 = x2 + _ffn_ref(y1, params["wg1"][l], params["bg1"][l],
                           params["wg2"][l], params["bg2"][l])
        x1, x2 = y1, y2
    return (x1 + x2).astype(x.dtype)


if __name__ == "__main__":
    key = jax.random.PRNGKey(0)
    kx, kp = jax.random.split(key)
    x = jax.random.normal(kx, (BATCH, SEQ, DIM), jnp.float32)
    params_f32 = init_params(kp, DEPTH, DIM, HIDDEN)
    params_dev = prepare_params(params_f32)   # bf16 weight cast happens once, outside jit

    out = jax.block_until_ready(reversible_forward(x, params_dev))
    ref = reversible_reference(x, params_f32)

    assert out.shape == (BATCH, SEQ, DIM)
    # bf16 MXU operands (+ bf16 GELU on v6e/v7x) with f32 accumulation -> loosened
    # tolerance vs the f32 reference.
    assert jnp.allclose(out, ref, atol=1e-1, rtol=5e-2), "mismatch vs JAX reference"
    print("KERNEL_OK")
</pallas_src>

<mosaic_0001>
module attributes {stable_mosaic.version = 11 : i64} {
  func.func @reversible_kernel(%arg0: i32, %arg1: memref<256x128xf32, #tpu.memory_space<vmem>>, %arg2: memref<2x128x256xbf16, #tpu.memory_space<vmem>>, %arg3: memref<2x256xf32, #tpu.memory_space<vmem>>, %arg4: memref<2x256x128xbf16, #tpu.memory_space<vmem>>, %arg5: memref<2x128xf32, #tpu.memory_space<vmem>>, %arg6: memref<2x128x256xbf16, #tpu.memory_space<vmem>>, %arg7: memref<2x256xf32, #tpu.memory_space<vmem>>, %arg8: memref<2x256x128xbf16, #tpu.memory_space<vmem>>, %arg9: memref<2x128xf32, #tpu.memory_space<vmem>>, %arg10: memref<256x128xf32, #tpu.memory_space<vmem>>) attributes {dimension_semantics = [#tpu.dimension_semantics<parallel>], iteration_bounds = array<i64: 2>, scalar_prefetch = 0 : i64, scratch_operands = 0 : i64, tpu.core_type = #tpu.core_type<tc>, window_params = [{transform_indices = @transform_0, window_bounds = array<i64: 256, 128>}, {pipeline_mode = #tpu.pipeline_mode<synchronous>, transform_indices = @transform_1, window_bounds = array<i64: 2, 128, 256>}, {pipeline_mode = #tpu.pipeline_mode<synchronous>, transform_indices = @transform_2, window_bounds = array<i64: 2, 256>}, {pipeline_mode = #tpu.pipeline_mode<synchronous>, transform_indices = @transform_3, window_bounds = array<i64: 2, 256, 128>}, {pipeline_mode = #tpu.pipeline_mode<synchronous>, transform_indices = @transform_4, window_bounds = array<i64: 2, 128>}, {pipeline_mode = #tpu.pipeline_mode<synchronous>, transform_indices = @transform_5, window_bounds = array<i64: 2, 128, 256>}, {pipeline_mode = #tpu.pipeline_mode<synchronous>, transform_indices = @transform_6, window_bounds = array<i64: 2, 256>}, {pipeline_mode = #tpu.pipeline_mode<synchronous>, transform_indices = @transform_7, window_bounds = array<i64: 2, 256, 128>}, {pipeline_mode = #tpu.pipeline_mode<synchronous>, transform_indices = @transform_8, window_bounds = array<i64: 2, 128>}, {transform_indices = @transform_9, window_bounds = array<i64: 256, 128>}]} {
    %c0 = arith.constant 0 : index
    %c0_0 = arith.constant 0 : index
    %0 = vector.load %arg1[%c0, %c0_0] : memref<256x128xf32, #tpu.memory_space<vmem>>, vector<256x128xf32>
    %c0_1 = arith.constant 0 : index
    %c0_2 = arith.constant 0 : index
    %c0_3 = arith.constant 0 : index
    %1 = vector.load %arg2[%c0_1, %c0_2, %c0_3] : memref<2x128x256xbf16, #tpu.memory_space<vmem>>, vector<1x128x256xbf16>
    %2 = vector.shape_cast %1 : vector<1x128x256xbf16> to vector<128x256xbf16>
    %c0_4 = arith.constant 0 : index
    %c0_5 = arith.constant 0 : index
    %3 = vector.load %arg3[%c0_4, %c0_5] : memref<2x256xf32, #tpu.memory_space<vmem>>, vector<1x256xf32>
    %4 = vector.shape_cast %3 : vector<1x256xf32> to vector<256xf32>
    %c0_6 = arith.constant 0 : index
    %c0_7 = arith.constant 0 : index
    %c0_8 = arith.constant 0 : index
    %5 = vector.load %arg4[%c0_6, %c0_7, %c0_8] : memref<2x256x128xbf16, #tpu.memory_space<vmem>>, vector<1x256x128xbf16>
    %6 = vector.shape_cast %5 : vector<1x256x128xbf16> to vector<256x128xbf16>
    %c0_9 = arith.constant 0 : index
    %c0_10 = arith.constant 0 : index
    %7 = vector.load %arg5[%c0_9, %c0_10] : memref<2x128xf32, #tpu.memory_space<vmem>>, vector<1x128xf32>
    %8 = vector.shape_cast %7 : vector<1x128xf32> to vector<128xf32>
    %9 = arith.truncf %0 : vector<256x128xf32> to vector<256x128xbf16>
    %cst = arith.constant dense<0.000000e+00> : vector<256x256xf32>
    %10 = tpu.matmul %9, %2, %cst {dimension_numbers = #tpu.dot_dimension_numbers<[1], [0], [0], [1], [0, 0, 1, 1], [], []>} : vector<256x128xbf16>, vector<128x256xbf16>, vector<256x256xf32> -> vector<256x256xf32>
    %11 = vector.shape_cast %4 : vector<256xf32> to vector<1x256xf32>
    %12 = vector.broadcast %11 : vector<1x256xf32> to vector<256x256xf32>
    %13 = arith.addf %10, %12 : vector<256x256xf32>
    %14 = arith.truncf %13 : vector<256x256xf32> to vector<256x256xbf16>
    %15 = arith.mulf %14, %14 : vector<256x256xbf16>
    %16 = arith.mulf %14, %15 : vector<256x256xbf16>
    %cst_11 = arith.constant 4.467770e-02 : bf16
    %17 = vector.broadcast %cst_11 : bf16 to vector<256x256xbf16>
    %18 = arith.mulf %17, %16 : vector<256x256xbf16>
    %19 = arith.addf %14, %18 : vector<256x256xbf16>
    %cst_12 = arith.constant 7.968750e-01 : bf16
    %20 = vector.broadcast %cst_12 : bf16 to vector<256x256xbf16>
    %21 = arith.mulf %20, %19 : vector<256x256xbf16>
    %22 = math.tanh %21 : vector<256x256xbf16>
    %cst_13 = arith.constant 1.000000e+00 : bf16
    %23 = vector.broadcast %cst_13 : bf16 to vector<256x256xbf16>
    %24 = arith.addf %23, %22 : vector<256x256xbf16>
    %cst_14 = arith.constant 5.000000e-01 : bf16
    %25 = vector.broadcast %cst_14 : bf16 to vector<256x256xbf16>
    %26 = arith.mulf %25, %24 : vector<256x256xbf16>
    %27 = arith.mulf %14, %26 : vector<256x256xbf16>
    %cst_15 = arith.constant dense<0.000000e+00> : vector<256x128xf32>
    %28 = tpu.matmul %27, %6, %cst_15 {dimension_numbers = #tpu.dot_dimension_numbers<[1], [0], [0], [1], [0, 0, 1, 1], [], []>} : vector<256x256xbf16>, vector<256x128xbf16>, vector<256x128xf32> -> vector<256x128xf32>
    %29 = vector.shape_cast %8 : vector<128xf32> to vector<1x128xf32>
    %30 = vector.broadcast %29 : vector<1x128xf32> to vector<256x128xf32>
    %31 = arith.addf %28, %30 : vector<256x128xf32>
    %32 = arith.addf %0, %31 : vector<256x128xf32>
    %c0_16 = arith.constant 0 : index
    %c0_17 = arith.constant 0 : index
    %c0_18 = arith.constant 0 : index
    %33 = vector.load %arg6[%c0_16, %c0_17, %c0_18] : memref<2x128x256xbf16, #tpu.memory_space<vmem>>, vector<1x128x256xbf16>
    %34 = vector.shape_cast %33 : vector<1x128x256xbf16> to vector<128x256xbf16>
    %c0_19 = arith.constant 0 : index
    %c0_20 = arith.constant 0 : index
    %35 = vector.load %arg7[%c0_19, %c0_20] : memref<2x256xf32, #tpu.memory_space<vmem>>, vector<1x256xf32>
    %36 = vector.shape_cast %35 : vector<1x256xf32> to vector<256xf32>
    %c0_21 = arith.constant 0 : index
    %c0_22 = arith.constant 0 : index
    %c0_23 = arith.constant 0 : index
    %37 = vector.load %arg8[%c0_21, %c0_22, %c0_23] : memref<2x256x128xbf16, #tpu.memory_space<vmem>>, vector<1x256x128xbf16>
    %38 = vector.shape_cast %37 : vector<1x256x128xbf16> to vector<256x128xbf16>
    %c0_24 = arith.constant 0 : index
    %c0_25 = arith.constant 0 : index
    %39 = vector.load %arg9[%c0_24, %c0_25] : memref<2x128xf32, #tpu.memory_space<vmem>>, vector<1x128xf32>
    %40 = vector.shape_cast %39 : vector<1x128xf32> to vector<128xf32>
    %41 = arith.truncf %32 : vector<256x128xf32> to vector<256x128xbf16>
    %cst_26 = arith.constant dense<0.000000e+00> : vector<256x256xf32>
    %42 = tpu.matmul %41, %34, %cst_26 {dimension_numbers = #tpu.dot_dimension_numbers<[1], [0], [0], [1], [0, 0, 1, 1], [], []>} : vector<256x128xbf16>, vector<128x256xbf16>, vector<256x256xf32> -> vector<256x256xf32>
    %43 = vector.shape_cast %36 : vector<256xf32> to vector<1x256xf32>
    %44 = vector.broadcast %43 : vector<1x256xf32> to vector<256x256xf32>
    %45 = arith.addf %42, %44 : vector<256x256xf32>
    %46 = arith.truncf %45 : vector<256x256xf32> to vector<256x256xbf16>
    %47 = arith.mulf %46, %46 : vector<256x256xbf16>
    %48 = arith.mulf %46, %47 : vector<256x256xbf16>
    %cst_27 = arith.constant 4.467770e-02 : bf16
    %49 = vector.broadcast %cst_27 : bf16 to vector<256x256xbf16>
    %50 = arith.mulf %49, %48 : vector<256x256xbf16>
    %51 = arith.addf %46, %50 : vector<256x256xbf16>
    %cst_28 = arith.constant 7.968750e-01 : bf16
    %52 = vector.broadcast %cst_28 : bf16 to vector<256x256xbf16>
    %53 = arith.mulf %52, %51 : vector<256x256xbf16>
    %54 = math.tanh %53 : vector<256x256xbf16>
    %cst_29 = arith.constant 1.000000e+00 : bf16
    %55 = vector.broadcast %cst_29 : bf16 to vector<256x256xbf16>
    %56 = arith.addf %55, %54 : vector<256x256xbf16>
    %cst_30 = arith.constant 5.000000e-01 : bf16
    %57 = vector.broadcast %cst_30 : bf16 to vector<256x256xbf16>
    %58 = arith.mulf %57, %56 : vector<256x256xbf16>
    %59 = arith.mulf %46, %58 : vector<256x256xbf16>
    %cst_31 = arith.constant dense<0.000000e+00> : vector<256x128xf32>
    %60 = tpu.matmul %59, %38, %cst_31 {dimension_numbers = #tpu.dot_dimension_numbers<[1], [0], [0], [1], [0, 0, 1, 1], [], []>} : vector<256x256xbf16>, vector<256x128xbf16>, vector<256x128xf32> -> vector<256x128xf32>
    %61 = vector.shape_cast %40 : vector<128xf32> to vector<1x128xf32>
    %62 = vector.broadcast %61 : vector<1x128xf32> to vector<256x128xf32>
    %63 = arith.addf %60, %62 : vector<256x128xf32>
    %64 = arith.addf %0, %63 : vector<256x128xf32>
    %c1 = arith.constant 1 : index
    %c0_32 = arith.constant 0 : index
    %c0_33 = arith.constant 0 : index
    %65 = vector.load %arg2[%c1, %c0_32, %c0_33] : memref<2x128x256xbf16, #tpu.memory_space<vmem>>, vector<1x128x256xbf16>
    %66 = vector.shape_cast %65 : vector<1x128x256xbf16> to vector<128x256xbf16>
    %c1_34 = arith.constant 1 : index
    %c0_35 = arith.constant 0 : index
    %67 = vector.load %arg3[%c1_34, %c0_35] : memref<2x256xf32, #tpu.memory_space<vmem>>, vector<1x256xf32>
    %68 = vector.shape_cast %67 : vector<1x256xf32> to vector<256xf32>
    %c1_36 = arith.constant 1 : index
    %c0_37 = arith.constant 0 : index
    %c0_38 = arith.constant 0 : index
    %69 = vector.load %arg4[%c1_36, %c0_37, %c0_38] : memref<2x256x128xbf16, #tpu.memory_space<vmem>>, vector<1x256x128xbf16>
    %70 = vector.shape_cast %69 : vector<1x256x128xbf16> to vector<256x128xbf16>
    %c1_39 = arith.constant 1 : index
    %c0_40 = arith.constant 0 : index
    %71 = vector.load %arg5[%c1_39, %c0_40] : memref<2x128xf32, #tpu.memory_space<vmem>>, vector<1x128xf32>
    %72 = vector.shape_cast %71 : vector<1x128xf32> to vector<128xf32>
    %73 = arith.truncf %64 : vector<256x128xf32> to vector<256x128xbf16>
    %cst_41 = arith.constant dense<0.000000e+00> : vector<256x256xf32>
    %74 = tpu.matmul %73, %66, %cst_41 {dimension_numbers = #tpu.dot_dimension_numbers<[1], [0], [0], [1], [0, 0, 1, 1], [], []>} : vector<256x128xbf16>, vector<128x256xbf16>, vector<256x256xf32> -> vector<256x256xf32>
    %75 = vector.shape_cast %68 : vector<256xf32> to vector<1x256xf32>
    %76 = vector.broadcast %75 : vector<1x256xf32> to vector<256x256xf32>
    %77 = arith.addf %74, %76 : vector<256x256xf32>
    %78 = arith.truncf %77 : vector<256x256xf32> to vector<256x256xbf16>
    %79 = arith.mulf %78, %78 : vector<256x256xbf16>
    %80 = arith.mulf %78, %79 : vector<256x256xbf16>
    %cst_42 = arith.constant 4.467770e-02 : bf16
    %81 = vector.broadcast %cst_42 : bf16 to vector<256x256xbf16>
    %82 = arith.mulf %81, %80 : vector<256x256xbf16>
    %83 = arith.addf %78, %82 : vector<256x256xbf16>
    %cst_43 = arith.constant 7.968750e-01 : bf16
    %84 = vector.broadcast %cst_43 : bf16 to vector<256x256xbf16>
    %85 = arith.mulf %84, %83 : vector<256x256xbf16>
    %86 = math.tanh %85 : vector<256x256xbf16>
    %cst_44 = arith.constant 1.000000e+00 : bf16
    %87 = vector.broadcast %cst_44 : bf16 to vector<256x256xbf16>
    %88 = arith.addf %87, %86 : vector<256x256xbf16>
    %cst_45 = arith.constant 5.000000e-01 : bf16
    %89 = vector.broadcast %cst_45 : bf16 to vector<256x256xbf16>
    %90 = arith.mulf %89, %88 : vector<256x256xbf16>
    %91 = arith.mulf %78, %90 : vector<256x256xbf16>
    %cst_46 = arith.constant dense<0.000000e+00> : vector<256x128xf32>
    %92 = tpu.matmul %91, %70, %cst_46 {dimension_numbers = #tpu.dot_dimension_numbers<[1], [0], [0], [1], [0, 0, 1, 1], [], []>} : vector<256x256xbf16>, vector<256x128xbf16>, vector<256x128xf32> -> vector<256x128xf32>
    %93 = vector.shape_cast %72 : vector<128xf32> to vector<1x128xf32>
    %94 = vector.broadcast %93 : vector<1x128xf32> to vector<256x128xf32>
    %95 = arith.addf %92, %94 : vector<256x128xf32>
    %96 = arith.addf %32, %95 : vector<256x128xf32>
    %c1_47 = arith.constant 1 : index
    %c0_48 = arith.constant 0 : index
    %c0_49 = arith.constant 0 : index
    %97 = vector.load %arg6[%c1_47, %c0_48, %c0_49] : memref<2x128x256xbf16, #tpu.memory_space<vmem>>, vector<1x128x256xbf16>
    %98 = vector.shape_cast %97 : vector<1x128x256xbf16> to vector<128x256xbf16>
    %c1_50 = arith.constant 1 : index
    %c0_51 = arith.constant 0 : index
    %99 = vector.load %arg7[%c1_50, %c0_51] : memref<2x256xf32, #tpu.memory_space<vmem>>, vector<1x256xf32>
    %100 = vector.shape_cast %99 : vector<1x256xf32> to vector<256xf32>
    %c1_52 = arith.constant 1 : index
    %c0_53 = arith.constant 0 : index
    %c0_54 = arith.constant 0 : index
    %101 = vector.load %arg8[%c1_52, %c0_53, %c0_54] : memref<2x256x128xbf16, #tpu.memory_space<vmem>>, vector<1x256x128xbf16>
    %102 = vector.shape_cast %101 : vector<1x256x128xbf16> to vector<256x128xbf16>
    %c1_55 = arith.constant 1 : index
    %c0_56 = arith.constant 0 : index
    %103 = vector.load %arg9[%c1_55, %c0_56] : memref<2x128xf32, #tpu.memory_space<vmem>>, vector<1x128xf32>
    %104 = vector.shape_cast %103 : vector<1x128xf32> to vector<128xf32>
    %105 = arith.truncf %96 : vector<256x128xf32> to vector<256x128xbf16>
    %cst_57 = arith.constant dense<0.000000e+00> : vector<256x256xf32>
    %106 = tpu.matmul %105, %98, %cst_57 {dimension_numbers = #tpu.dot_dimension_numbers<[1], [0], [0], [1], [0, 0, 1, 1], [], []>} : vector<256x128xbf16>, vector<128x256xbf16>, vector<256x256xf32> -> vector<256x256xf32>
    %107 = vector.shape_cast %100 : vector<256xf32> to vector<1x256xf32>
    %108 = vector.broadcast %107 : vector<1x256xf32> to vector<256x256xf32>
    %109 = arith.addf %106, %108 : vector<256x256xf32>
    %110 = arith.truncf %109 : vector<256x256xf32> to vector<256x256xbf16>
    %111 = arith.mulf %110, %110 : vector<256x256xbf16>
    %112 = arith.mulf %110, %111 : vector<256x256xbf16>
    %cst_58 = arith.constant 4.467770e-02 : bf16
    %113 = vector.broadcast %cst_58 : bf16 to vector<256x256xbf16>
    %114 = arith.mulf %113, %112 : vector<256x256xbf16>
    %115 = arith.addf %110, %114 : vector<256x256xbf16>
    %cst_59 = arith.constant 7.968750e-01 : bf16
    %116 = vector.broadcast %cst_59 : bf16 to vector<256x256xbf16>
    %117 = arith.mulf %116, %115 : vector<256x256xbf16>
    %118 = math.tanh %117 : vector<256x256xbf16>
    %cst_60 = arith.constant 1.000000e+00 : bf16
    %119 = vector.broadcast %cst_60 : bf16 to vector<256x256xbf16>
    %120 = arith.addf %119, %118 : vector<256x256xbf16>
    %cst_61 = arith.constant 5.000000e-01 : bf16
    %121 = vector.broadcast %cst_61 : bf16 to vector<256x256xbf16>
    %122 = arith.mulf %121, %120 : vector<256x256xbf16>
    %123 = arith.mulf %110, %122 : vector<256x256xbf16>
    %cst_62 = arith.constant dense<0.000000e+00> : vector<256x128xf32>
    %124 = tpu.matmul %123, %102, %cst_62 {dimension_numbers = #tpu.dot_dimension_numbers<[1], [0], [0], [1], [0, 0, 1, 1], [], []>} : vector<256x256xbf16>, vector<256x128xbf16>, vector<256x128xf32> -> vector<256x128xf32>
    %125 = vector.shape_cast %104 : vector<128xf32> to vector<1x128xf32>
    %126 = vector.broadcast %125 : vector<1x128xf32> to vector<256x128xf32>
    %127 = arith.addf %124, %126 : vector<256x128xf32>
    %128 = arith.addf %64, %127 : vector<256x128xf32>
    %129 = arith.addf %96, %128 : vector<256x128xf32>
    %c0_63 = arith.constant 0 : index
    %c0_64 = arith.constant 0 : index
    %130 = vector.load %arg10[%c0_63, %c0_64] : memref<256x128xf32, #tpu.memory_space<vmem>>, vector<256x128xf32>
    tpu.vector_store %arg10[%c0_63, %c0_64], %129 {strides = array<i32>} : memref<256x128xf32, #tpu.memory_space<vmem>>, vector<256x128xf32>,
    return
  }
  func.func @transform_0(%arg0: i32) -> (i32, i32) {
    %c0_i32 = arith.constant 0 : i32
    %c0_i32_0 = arith.constant 0 : i32
    return %arg0, %c0_i32 : i32, i32
  }
  func.func @transform_1(%arg0: i32) -> (i32, i32, i32) {
    %c0_i32 = arith.constant 0 : i32
    %c0_i32_0 = arith.constant 0 : i32
    %c0_i32_1 = arith.constant 0 : i32
    %c0_i32_2 = arith.constant 0 : i32
    return %c0_i32, %c0_i32_0, %c0_i32_1 : i32, i32, i32
  }
  func.func @transform_2(%arg0: i32) -> (i32, i32) {
    %c0_i32 = arith.constant 0 : i32
    %c0_i32_0 = arith.constant 0 : i32
    %c0_i32_1 = arith.constant 0 : i32
    return %c0_i32, %c0_i32_0 : i32, i32
  }
  func.func @transform_3(%arg0: i32) -> (i32, i32, i32) {
    %c0_i32 = arith.constant 0 : i32
    %c0_i32_0 = arith.constant 0 : i32
    %c0_i32_1 = arith.constant 0 : i32
    %c0_i32_2 = arith.constant 0 : i32
    return %c0_i32, %c0_i32_0, %c0_i32_1 : i32, i32, i32
  }
  func.func @transform_4(%arg0: i32) -> (i32, i32) {
    %c0_i32 = arith.constant 0 : i32
    %c0_i32_0 = arith.constant 0 : i32
    %c0_i32_1 = arith.constant 0 : i32
    return %c0_i32, %c0_i32_0 : i32, i32
  }
  func.func @transform_5(%arg0: i32) -> (i32, i32, i32) {
    %c0_i32 = arith.constant 0 : i32
    %c0_i32_0 = arith.constant 0 : i32
    %c0_i32_1 = arith.constant 0 : i32
    %c0_i32_2 = arith.constant 0 : i32
    return %c0_i32, %c0_i32_0, %c0_i32_1 : i32, i32, i32
  }
  func.func @transform_6(%arg0: i32) -> (i32, i32) {
    %c0_i32 = arith.constant 0 : i32
    %c0_i32_0 = arith.constant 0 : i32
    %c0_i32_1 = arith.constant 0 : i32
    return %c0_i32, %c0_i32_0 : i32, i32
  }
  func.func @transform_7(%arg0: i32) -> (i32, i32, i32) {
    %c0_i32 = arith.constant 0 : i32
    %c0_i32_0 = arith.constant 0 : i32
    %c0_i32_1 = arith.constant 0 : i32
    %c0_i32_2 = arith.constant 0 : i32
    return %c0_i32, %c0_i32_0, %c0_i32_1 : i32, i32, i32
  }
  func.func @transform_8(%arg0: i32) -> (i32, i32) {
    %c0_i32 = arith.constant 0 : i32
    %c0_i32_0 = arith.constant 0 : i32
    %c0_i32_1 = arith.constant 0 : i32
    return %c0_i32, %c0_i32_0 : i32, i32
  }
  func.func @transform_9(%arg0: i32) -> (i32, i32) {
    %c0_i32 = arith.constant 0 : i32
    %c0_i32_0 = arith.constant 0 : i32
    return %arg0, %c0_i32 : i32, i32
  }
}

</mosaic_0001>

<llo_original>
// kernel: _reversible_forward.1
$region0: #{_reversible_forward.1}
  #allocation0 [shape = 'u32[]', space=smem, size = 0x4, offset = 0x4, fixed_abs, tag = 'smem constant byte address 0x4 - core index']
  #allocation1 [shape = 'u32[144,128]{1,0:T(1,128)}', space=vmem, size = 0x12000, scoped, tag = 'internal scratch']
  %s0 = inlined_call_operand.hbm [shape: f32[512,128], index: 0, kind: input, shape index: {}]
  %s1 = inlined_call_operand.hbm [shape: bf16[2,128,256], index: 1, kind: input, shape index: {}]
  %s2 = inlined_call_operand.vmem [shape: f32[2,256], index: 2, kind: input, shape index: {}]
  %s3 = inlined_call_operand.hbm [shape: bf16[2,256,128], index: 3, kind: input, shape index: {}]
  %s4 = inlined_call_operand.vmem [shape: f32[2,128], index: 4, kind: input, shape index: {}]
  %s5 = inlined_call_operand.hbm [shape: bf16[2,128,256], index: 5, kind: input, shape index: {}]
  %s6 = inlined_call_operand.vmem [shape: f32[2,256], index: 6, kind: input, shape index: {}]
  %s7 = inlined_call_operand.hbm [shape: bf16[2,256,128], index: 7, kind: input, shape index: {}]
  %s8 = inlined_call_operand.vmem [shape: f32[2,128], index: 8, kind: input, shape index: {}]
  %s9 = inlined_call_operand.hbm [shape: f32[512,128], index: 9, kind: output, shape index: {}]
  %s10 = sld [smem:[#allocation0]]
  $region89: #{_reversible_forward.1} parent=0
    _
  %s12 = ssub.s32 1, %s10
  %s13 = scalar_select 0, %s12, %s10
  $region1: #{_reversible_forward.1} parent=0
    #allocation2 [shape = 'u8[262144]{0}', space=vmem, size = 0x40000, scoped, tag = 'input window, operand 0']
    #allocation3 [shape = 's32[2]{0}', space=sflag, size = 0x8, scoped, tag = 'scoped memory for _reversible_forward.1']
    #allocation4 [shape = 's32[2]{0}', space=sflag, size = 0x8, scoped, tag = 'scoped memory for _reversible_forward.1']
    #allocation5 [shape = 'u8[131072]{0}', space=vmem, size = 0x20000, scoped, tag = 'input window, operand 1, single buffered']
    #allocation6 [shape = 's32[1]{0}', space=sflag, size = 0x4, scoped, tag = 'scoped memory for _reversible_forward.1']
    #allocation7 [shape = 'u8[131072]{0}', space=vmem, size = 0x20000, scoped, tag = 'input window, operand 3, single buffered']
    #allocation8 [shape = 'u8[131072]{0}', space=vmem, size = 0x20000, scoped, tag = 'input window, operand 5, single buffered']
    #allocation9 [shape = 's32[1]{0}', space=sflag, size = 0x4, scoped, tag = 'scoped memory for _reversible_forward.1']
    #allocation10 [shape = 'u8[131072]{0}', space=vmem, size = 0x20000, scoped, tag = 'input window, operand 7, single buffered']
    #allocation11 [shape = 'u8[262144]{0}', space=vmem, size = 0x40000, scoped, tag = 'output window, operand 0']
    %14 = vsyncpa [#allocation3], 0
    %s15 = scalar_lea.sflag [#allocation3], 1
    %16 = vsyncpa %s15, 0
    %17 = vsyncpa [#allocation6], 0
    %18 = vsyncpa [#allocation9], 0
    %19 = vsyncpa [#allocation4], 0
    %s20 = scalar_lea.sflag [#allocation4], 1
    %21 = vsyncpa %s20, 0
    loop: start=0, step=1, limit=4
    $region2: #{_reversible_forward.1} parent=1 // loop_pre_header
      _
    $region3: #{_reversible_forward.1} parent=1 // loop_header
      %s23 = sphi 0, %s27
      %p24 = scmp.ge.s32.totalorder %s23, 4
      %s33 = sphi 0, %s35
      %s36 = sphi 0, %s33
      %s37 = sphi 0, %s36
      %s53 = sphi 0, %s37
      %s57 = sphi 0, %s57
      %s59 = sphi 0, %s57
      %s60 = sphi 0, %s59
      %s74 = sphi 0, %s60
      %s78 = sphi 0, %s78
      %s80 = sphi 0, %s78
      %s81 = sphi 0, %s80
      %s95 = sphi 0, %s81
      %s99 = sphi 0, %s99
      %s101 = sphi 0, %s99
      %s102 = sphi 0, %s101
      %s116 = sphi 0, %s102
      %s120 = sphi 0, %s120
      %s122 = sphi 0, %s120
      %s123 = sphi 0, %s122
      %s137 = sphi 0, %s123
      %s141 = sphi 0, %s141
      %s143 = sphi 0, %s141
      %s144 = sphi 0, %s143
      %s158 = sphi 0, %s144
      %s162 = sphi 0, %s162
      %s164 = sphi 0, %s162
      %s165 = sphi 0, %s164
      %s179 = sphi 0, %s165
      %s183 = sphi 0, %s183
      %s185 = sphi 0, %s183
      %s186 = sphi 0, %s185
      %s200 = sphi 0, %s186
      %s204 = sphi 0, %s204
      %s206 = sphi 0, %s204
      %s207 = sphi 0, %s206
      %s221 = sphi 0, %s207
      %s227 = sphi 0, %s229
      %s230 = sphi 0, %s227
      %s231 = sphi 0, %s230
      %s247 = sphi 0, %s231
    $region4: #{_reversible_forward.1} parent=1 // loop_header_branch
      %26 = sbr.rel (%p24) target = $region8
    $region5: #{_reversible_forward.1} parent=1 // loop_body
      %s28 = ssub.s32 %s23, 1
      %s29 = ssub.s32 %s23, 2
      %s30 = sadd.s32 %s23, 1
      %s31 = ssub.s32 %s23, %s30
      %p32 = scmp.eq.s32.totalorder %s31, 0
      %s34 = sadd.s32 %s33, 1
      %s35 = scalar_select %p32, %s33, %s34
      %p38 = pneg %p32
      %p39 = scmp.eq.s32.totalorder %s23, 1
      %p40 = por %p38, %p39
      %p41 = scmp.ne.s32.totalorder %s33, %s36
      %p42 = scmp.eq.s32.totalorder %s23, 0
      %p43 = por %p41, %p42
      %p44 = scmp.ne.s32.totalorder %s33, %s36
      %p45 = scmp.eq.s32.totalorder %s28, 1
      %p46 = por %p44, %p45
      %p47 = scmp.ne.s32.totalorder %s36, %s37
      %p48 = scmp.eq.s32.totalorder %s28, 0
      %p49 = por %p47, %p48
      %p50 = scmp.ne.s32.totalorder %s36, %s37
      %p51 = scmp.eq.s32.totalorder %s29, 1
      %p52 = por %p50, %p51
      %p54 = scmp.ne.s32.totalorder %s37, %s53
      %p55 = scmp.eq.s32.totalorder %s29, 0
      %p56 = por %p54, %p55
      %s58 = sadd.s32 %s57, 1
      %p61 = scmp.eq.s32.totalorder %s23, 1
      %p62 = scmp.ne.s32.totalorder %s57, %s59
      %p63 = scmp.eq.s32.totalorder %s23, 0
      %p64 = por %p62, %p63
      %p65 = scmp.ne.s32.totalorder %s57, %s59
      %p66 = scmp.eq.s32.totalorder %s28, 1
      %p67 = por %p65, %p66
      %p68 = scmp.ne.s32.totalorder %s59, %s60
      %p69 = scmp.eq.s32.totalorder %s28, 0
      %p70 = por %p68, %p69
      %p71 = scmp.ne.s32.totalorder %s59, %s60
      %p72 = scmp.eq.s32.totalorder %s29, 1
      %p73 = por %p71, %p72
      %p75 = scmp.ne.s32.totalorder %s60, %s74
      %p76 = scmp.eq.s32.totalorder %s29, 0
      %p77 = por %p75, %p76
      %s79 = sadd.s32 %s78, 1
      %p82 = scmp.eq.s32.totalorder %s23, 1
      %p83 = scmp.ne.s32.totalorder %s78, %s80
      %p84 = scmp.eq.s32.totalorder %s23, 0
      %p85 = por %p83, %p84
      %p86 = scmp.ne.s32.totalorder %s78, %s80
      %p87 = scmp.eq.s32.totalorder %s28, 1
      %p88 = por %p86, %p87
      %p89 = scmp.ne.s32.totalorder %s80, %s81
      %p90 = scmp.eq.s32.totalorder %s28, 0
      %p91 = por %p89, %p90
      %p92 = scmp.ne.s32.totalorder %s80, %s81
      %p93 = scmp.eq.s32.totalorder %s29, 1
      %p94 = por %p92, %p93
      %p96 = scmp.ne.s32.totalorder %s81, %s95
      %p97 = scmp.eq.s32.totalorder %s29, 0
      %p98 = por %p96, %p97
      %s100 = sadd.s32 %s99, 1
      %p103 = scmp.eq.s32.totalorder %s23, 1
      %p104 = scmp.ne.s32.totalorder %s99, %s101
      %p105 = scmp.eq.s32.totalorder %s23, 0
      %p106 = por %p104, %p105
      %p107 = scmp.ne.s32.totalorder %s99, %s101
      %p108 = scmp.eq.s32.totalorder %s28, 1
      %p109 = por %p107, %p108
      %p110 = scmp.ne.s32.totalorder %s101, %s102
      %p111 = scmp.eq.s32.totalorder %s28, 0
      %p112 = por %p110, %p111
      %p113 = scmp.ne.s32.totalorder %s101, %s102
      %p114 = scmp.eq.s32.totalorder %s29, 1
      %p115 = por %p113, %p114
      %p117 = scmp.ne.s32.totalorder %s102, %s116
      %p118 = scmp.eq.s32.totalorder %s29, 0
      %p119 = por %p117, %p118
      %s121 = sadd.s32 %s120, 1
      %p124 = scmp.eq.s32.totalorder %s23, 1
      %p125 = scmp.ne.s32.totalorder %s120, %s122
      %p126 = scmp.eq.s32.totalorder %s23, 0
      %p127 = por %p125, %p126
      %p128 = scmp.ne.s32.totalorder %s120, %s122
      %p129 = scmp.eq.s32.totalorder %s28, 1
      %p130 = por %p128, %p129
      %p131 = scmp.ne.s32.totalorder %s122, %s123
      %p132 = scmp.eq.s32.totalorder %s28, 0
      %p133 = por %p131, %p132
      %p134 = scmp.ne.s32.totalorder %s122, %s123
      %p135 = scmp.eq.s32.totalorder %s29, 1
      %p136 = por %p134, %p135
      %p138 = scmp.ne.s32.totalorder %s123, %s137
      %p139 = scmp.eq.s32.totalorder %s29, 0
      %p140 = por %p138, %p139
      %s142 = sadd.s32 %s141, 1
      %p145 = scmp.eq.s32.totalorder %s23, 1
      %p146 = scmp.ne.s32.totalorder %s141, %s143
      %p147 = scmp.eq.s32.totalorder %s23, 0
      %p148 = por %p146, %p147
      %p149 = scmp.ne.s32.totalorder %s141, %s143
      %p150 = scmp.eq.s32.totalorder %s28, 1
      %p151 = por %p149, %p150
      %p152 = scmp.ne.s32.totalorder %s143, %s144
      %p153 = scmp.eq.s32.totalorder %s28, 0
      %p154 = por %p152, %p153
      %p155 = scmp.ne.s32.totalorder %s143, %s144
      %p156 = scmp.eq.s32.totalorder %s29, 1
      %p157 = por %p155, %p156
      %p159 = scmp.ne.s32.totalorder %s144, %s158
      %p160 = scmp.eq.s32.totalorder %s29, 0
      %p161 = por %p159, %p160
      %s163 = sadd.s32 %s162, 1
      %p166 = scmp.eq.s32.totalorder %s23, 1
      %p167 = scmp.ne.s32.totalorder %s162, %s164
      %p168 = scmp.eq.s32.totalorder %s23, 0
      %p169 = por %p167, %p168
      %p170 = scmp.ne.s32.totalorder %s162, %s164
      %p171 = scmp.eq.s32.totalorder %s28, 1
      %p172 = por %p170, %p171
      %p173 = scmp.ne.s32.totalorder %s164, %s165
      %p174 = scmp.eq.s32.totalorder %s28, 0
      %p175 = por %p173, %p174
      %p176 = scmp.ne.s32.totalorder %s164, %s165
      %p177 = scmp.eq.s32.totalorder %s29, 1
      %p178 = por %p176, %p177
      %p180 = scmp.ne.s32.totalorder %s165, %s179
      %p181 = scmp.eq.s32.totalorder %s29, 0
      %p182 = por %p180, %p181
      %s184 = sadd.s32 %s183, 1
      %p187 = scmp.eq.s32.totalorder %s23, 1
      %p188 = scmp.ne.s32.totalorder %s183, %s185
      %p189 = scmp.eq.s32.totalorder %s23, 0
      %p190 = por %p188, %p189
      %p191 = scmp.ne.s32.totalorder %s183, %s185
      %p192 = scmp.eq.s32.totalorder %s28, 1
      %p193 = por %p191, %p192
      %p194 = scmp.ne.s32.totalorder %s185, %s186
      %p195 = scmp.eq.s32.totalorder %s28, 0
      %p196 = por %p194, %p195
      %p197 = scmp.ne.s32.totalorder %s185, %s186
      %p198 = scmp.eq.s32.totalorder %s29, 1
      %p199 = por %p197, %p198
      %p201 = scmp.ne.s32.totalorder %s186, %s200
      %p202 = scmp.eq.s32.totalorder %s29, 0
      %p203 = por %p201, %p202
      %s205 = sadd.s32 %s204, 1
      %p208 = scmp.eq.s32.totalorder %s23, 1
      %p209 = scmp.ne.s32.totalorder %s204, %s206
      %p210 = scmp.eq.s32.totalorder %s23, 0
      %p211 = por %p209, %p210
      %p212 = scmp.ne.s32.totalorder %s204, %s206
      %p213 = scmp.eq.s32.totalorder %s28, 1
      %p214 = por %p212, %p213
      %p215 = scmp.ne.s32.totalorder %s206, %s207
      %p216 = scmp.eq.s32.totalorder %s28, 0
      %p217 = por %p215, %p216
      %p218 = scmp.ne.s32.totalorder %s206, %s207
      %p219 = scmp.eq.s32.totalorder %s29, 1
      %p220 = por %p218, %p219
      %p222 = scmp.ne.s32.totalorder %s207, %s221
      %p223 = scmp.eq.s32.totalorder %s29, 0
      %p224 = por %p222, %p223
      %s225 = ssub.s32 %s23, %s30
      %p226 = scmp.eq.s32.totalorder %s225, 0
      %s228 = sadd.s32 %s227, 1
      %s229 = scalar_select %p226, %s227, %s228
      %p232 = pneg %p226
      %p233 = scmp.eq.s32.totalorder %s23, 1
      %p234 = por %p232, %p233
      %p235 = scmp.ne.s32.totalorder %s227, %s230
      %p236 = scmp.eq.s32.totalorder %s23, 0
      %p237 = por %p235, %p236
      %p238 = scmp.ne.s32.totalorder %s227, %s230
      %p239 = scmp.eq.s32.totalorder %s28, 1
      %p240 = por %p238, %p239
      %p241 = scmp.ne.s32.totalorder %s230, %s231
      %p242 = scmp.eq.s32.totalorder %s28, 0
      %p243 = por %p241, %p242
      %p244 = scmp.ne.s32.totalorder %s230, %s231
      %p245 = scmp.eq.s32.totalorder %s29, 1
      %p246 = por %p244, %p245
      %p248 = scmp.ne.s32.totalorder %s231, %s247
      %p249 = scmp.eq.s32.totalorder %s29, 0
      %p250 = por %p248, %p249
      %p251 = scmp.le.s32.totalorder 1, %s23
      %p252 = scmp.lt.s32.totalorder %s23, 3
      %p253 = pnand %p251, %p252
      %p254 = pneg %p253
      // Predicated region
      $region9: #{_reversible_forward.1} parent=5 // pred_check
        _
      $region10: #{_reversible_forward.1} parent=5 // pred_check_branch
        %256 = sbr.rel (%p253) target = $region12
      $region11: #{_reversible_forward.1} parent=5 // pred_region
        %s257 = ssub.s32 %s23, 1
        // Predicated region
        $region13: #{_reversible_forward.1} parent=11 // pred_check
          %p258 = pneg %p70
        $region14: #{_reversible_forward.1} parent=11 // pred_check_branch
          %260 = sbr.rel (%p258) target = $region16
        $region15: #{_reversible_forward.1} parent=11 // pred_region
          %s262 = ssub.s32 4096, 4096
          %263 = vsyncadd [#allocation6], %s262
          %s264 = sshll.u32 [#allocation5], 4
          %s265 = int_to_ptr.vmem [resolvable:$true] %s264
          %270 = dma.hbm_to_vmem [thread:$0]  %s1, 4096, %s265, [#allocation6], 128, 128, 8
        $region16: #{_reversible_forward.1} parent=11 // pred_fallthru
          _
        // Predicated region
        $region17: #{_reversible_forward.1} parent=11 // pred_check
          %p271 = pneg %p91
        $region18: #{_reversible_forward.1} parent=11 // pred_check_branch
          %273 = sbr.rel (%p271) target = $region20
        $region19: #{_reversible_forward.1} parent=11 // pred_region
          _
        $region20: #{_reversible_forward.1} parent=11 // pred_fallthru
          _
        // Predicated region
        $region21: #{_reversible_forward.1} parent=11 // pred_check
          %p274 = pneg %p112
        $region22: #{_reversible_forward.1} parent=11 // pred_check_branch
          %276 = sbr.rel (%p274) target = $region24
        $region23: #{_reversible_forward.1} parent=11 // pred_region
          %s278 = ssub.s32 4096, 4096
          %279 = vsyncadd [#allocation6], %s278
          %s280 = sshll.u32 [#allocation7], 4
          %s281 = int_to_ptr.vmem [resolvable:$true] %s280
          %286 = dma.hbm_to_vmem [thread:$0]  %s3, 4096, %s281, [#allocation6], 64, 64, 4
        $region24: #{_reversible_forward.1} parent=11 // pred_fallthru
          _
        // Predicated region
        $region25: #{_reversible_forward.1} parent=11 // pred_check
          %p287 = pneg %p133
        $region26: #{_reversible_forward.1} parent=11 // pred_check_branch
          %289 = sbr.rel (%p287) target = $region28
        $region27: #{_reversible_forward.1} parent=11 // pred_region
          _
        $region28: #{_reversible_forward.1} parent=11 // pred_fallthru
          _
        // Predicated region
        $region29: #{_reversible_forward.1} parent=11 // pred_check
          %p290 = pneg %p154
        $region30: #{_reversible_forward.1} parent=11 // pred_check_branch
          %292 = sbr.rel (%p290) target = $region32
        $region31: #{_reversible_forward.1} parent=11 // pred_region
          %s294 = ssub.s32 4096, 4096
          %295 = vsyncadd [#allocation9], %s294
          %s296 = sshll.u32 [#allocation8], 4
          %s297 = int_to_ptr.vmem [resolvable:$true] %s296
          %302 = dma.hbm_to_vmem [thread:$0]  %s5, 4096, %s297, [#allocation9], 128, 128, 8
        $region32: #{_reversible_forward.1} parent=11 // pred_fallthru
          _
        // Predicated region
        $region33: #{_reversible_forward.1} parent=11 // pred_check
          %p303 = pneg %p175
        $region34: #{_reversible_forward.1} parent=11 // pred_check_branch
          %305 = sbr.rel (%p303) target = $region36
        $region35: #{_reversible_forward.1} parent=11 // pred_region
          _
        $region36: #{_reversible_forward.1} parent=11 // pred_fallthru
          _
        // Predicated region
        $region37: #{_reversible_forward.1} parent=11 // pred_check
          %p306 = pneg %p196
        $region38: #{_reversible_forward.1} parent=11 // pred_check_branch
          %308 = sbr.rel (%p306) target = $region40
        $region39: #{_reversible_forward.1} parent=11 // pred_region
          %s310 = ssub.s32 4096, 4096
          %311 = vsyncadd [#allocation9], %s310
          %s312 = sshll.u32 [#allocation10], 4
          %s313 = int_to_ptr.vmem [resolvable:$true] %s312
          %318 = dma.hbm_to_vmem [thread:$0]  %s7, 4096, %s313, [#allocation9], 64, 64, 4
        $region40: #{_reversible_forward.1} parent=11 // pred_fallthru
          _
        // Predicated region
        $region41: #{_reversible_forward.1} parent=11 // pred_check
          %p319 = pneg %p217
        $region42: #{_reversible_forward.1} parent=11 // pred_check_branch
          %321 = sbr.rel (%p319) target = $region44
        $region43: #{_reversible_forward.1} parent=11 // pred_region
          _
        $region44: #{_reversible_forward.1} parent=11 // pred_fallthru
          _
      $region12: #{_reversible_forward.1} parent=5 // pred_fallthru
        _
      %p322 = scmp.lt.s32.totalorder %s23, 2
      // Predicated region
      $region45: #{_reversible_forward.1} parent=5 // pred_check
        %p323 = pneg %p322
      $region46: #{_reversible_forward.1} parent=5 // pred_check_branch
        %325 = sbr.rel (%p323) target = $region48
      $region47: #{_reversible_forward.1} parent=5 // pred_region
        // Predicated region
        $region49: #{_reversible_forward.1} parent=47 // pred_check
          %p326 = pneg %p43
        $region50: #{_reversible_forward.1} parent=47 // pred_check_branch
          %328 = sbr.rel (%p326) target = $region52
        $region51: #{_reversible_forward.1} parent=47 // pred_region
          %s329 = sand.u32 %s33, 1
          %s330 = scalar_lea.sflag [#allocation3], %s329
          %s331 = sand.u32 %s33, 1
          %s332 = smul.addr %s331, 256
          %s333 = scalar_lea.vmem [#allocation2], %s332
          %s334 = smul.u32 32, %s23
          %s336 = ssub.s32 4096, 4096
          %337 = vsyncadd %s330, %s336
          %s338 = smul.addr %s334, 128
          %s339 = scalar_lea.hbm %s0, %s338
          %s340 = sshll.u32 %s333, 4
          %s341 = int_to_ptr.vmem [resolvable:$true] %s340
          %346 = dma.hbm_to_vmem [thread:$0]  %s339, 4096, %s341, %s330, 128, 128, 8
        $region52: #{_reversible_forward.1} parent=47 // pred_fallthru
          _
      $region48: #{_reversible_forward.1} parent=5 // pred_fallthru
        _
      %p347 = scmp.le.s32.totalorder 1, %s23
      %p348 = scmp.lt.s32.totalorder %s23, 3
      %p349 = pnand %p347, %p348
      %p350 = pneg %p349
      // Predicated region
      $region53: #{_reversible_forward.1} parent=5 // pred_check
        _
      $region54: #{_reversible_forward.1} parent=5 // pred_check_branch
        %352 = sbr.rel (%p349) target = $region56
      $region55: #{_reversible_forward.1} parent=5 // pred_region
        %s353 = ssub.s32 %s23, 1
        %s354 = sand.u32 %s36, 1
        %s355 = scalar_lea.sflag [#allocation3], %s354
        %s356 = sand.u32 %s36, 1
        %s357 = smul.addr %s356, 256
        %s358 = scalar_lea.vmem [#allocation2], %s357
        // Predicated region
        $region57: #{_reversible_forward.1} parent=55 // pred_check
          %p359 = pneg %p49
        $region58: #{_reversible_forward.1} parent=55 // pred_check_branch
          %361 = sbr.rel (%p359) target = $region60
        $region59: #{_reversible_forward.1} parent=55 // pred_region
          %362 = dma.done %s355, 4096
        $region60: #{_reversible_forward.1} parent=55 // pred_fallthru
          _
        // Predicated region
        $region61: #{_reversible_forward.1} parent=55 // pred_check
          %p363 = pneg %p70
        $region62: #{_reversible_forward.1} parent=55 // pred_check_branch
          %365 = sbr.rel (%p363) target = $region64
        $region63: #{_reversible_forward.1} parent=55 // pred_region
          %366 = dma.done [#allocation6], 4096
        $region64: #{_reversible_forward.1} parent=55 // pred_fallthru
          _
        // Predicated region
        $region65: #{_reversible_forward.1} parent=55 // pred_check
          %p367 = pneg %p112
        $region66: #{_reversible_forward.1} parent=55 // pred_check_branch
          %369 = sbr.rel (%p367) target = $region68
        $region67: #{_reversible_forward.1} parent=55 // pred_region
          %370 = dma.done [#allocation6], 4096
        $region68: #{_reversible_forward.1} parent=55 // pred_fallthru
          _
        // Predicated region
        $region69: #{_reversible_forward.1} parent=55 // pred_check
          %p371 = pneg %p154
        $region70: #{_reversible_forward.1} parent=55 // pred_check_branch
          %373 = sbr.rel (%p371) target = $region72
        $region71: #{_reversible_forward.1} parent=55 // pred_region
          %374 = dma.done [#allocation9], 4096
        $region72: #{_reversible_forward.1} parent=55 // pred_fallthru
          _
        // Predicated region
        $region73: #{_reversible_forward.1} parent=55 // pred_check
          %p375 = pneg %p196
        $region74: #{_reversible_forward.1} parent=55 // pred_check_branch
          %377 = sbr.rel (%p375) target = $region76
        $region75: #{_reversible_forward.1} parent=55 // pred_region
          %378 = dma.done [#allocation9], 4096
        $region76: #{_reversible_forward.1} parent=55 // pred_fallthru
          _
        %s379 = sand.u32 %s36, 1
        %s380 = scalar_lea.sflag [#allocation3], %s379
        %s381 = sand.u32 %s36, 1
        %s382 = smul.addr %s381, 256
        %s383 = scalar_lea.vmem [#allocation2], %s382
        %p384 = pneg %p49
        %p385 = pneg %p46
        %p386 = pneg %p70
        %p387 = pneg %p67
        %p388 = pneg %p91
        %p389 = pneg %p88
        %p390 = pneg %p112
        %p391 = pneg %p109
        %p392 = pneg %p133
        %p393 = pneg %p130
        %p394 = pneg %p154
        %p395 = pneg %p151
        %p396 = pneg %p175
        %p397 = pneg %p172
        %p398 = pneg %p196
        %p399 = pneg %p193
        %p400 = pneg %p217
        %p401 = pneg %p214
        %p402 = pneg %p243
        %p403 = pneg %p240
        %s404 = sand.u32 %s230, 1
        %s405 = scalar_lea.sflag [#allocation4], %s404
        %s406 = sand.u32 %s230, 1
        %s407 = smul.addr %s406, 256
        %s408 = scalar_lea.vmem [#allocation11], %s407
        %s409 = smul.u32 32, %s28
        %s410 = smul.u32 32, %s28
        %v416 = vld [vmem:[%s358] sm:$0xff]
        %v417 = vld [vmem:[%s358 + $0x8] sm:$0xff]
        %v418 = vld [vmem:[%s358 + $0x10] sm:$0xff]
        %v419 = vld [vmem:[%s358 + $0x18] sm:$0xff]
        %v420 = vld [vmem:[%s358 + $0x20] sm:$0xff]
        %v421 = vld [vmem:[%s358 + $0x28] sm:$0xff]
        %v422 = vld [vmem:[%s358 + $0x30] sm:$0xff]
        %v423 = vld [vmem:[%s358 + $0x38] sm:$0xff]
        %v424 = vld [vmem:[%s358 + $0x40] sm:$0xff]
        %v425 = vld [vmem:[%s358 + $0x48] sm:$0xff]
        %v426 = vld [vmem:[%s358 + $0x50] sm:$0xff]
        %v427 = vld [vmem:[%s358 + $0x58] sm:$0xff]
        %v428 = vld [vmem:[%s358 + $0x60] sm:$0xff]
        %v429 = vld [vmem:[%s358 + $0x68] sm:$0xff]
        %v430 = vld [vmem:[%s358 + $0x70] sm:$0xff]
        %v431 = vld [vmem:[%s358 + $0x78] sm:$0xff]
        %v432 = vld [vmem:[%s358 + $0x80] sm:$0xff]
        %v433 = vld [vmem:[%s358 + $0x88] sm:$0xff]
        %v434 = vld [vmem:[%s358 + $0x90] sm:$0xff]
        %v435 = vld [vmem:[%s358 + $0x98] sm:$0xff]
        %v436 = vld [vmem:[%s358 + $0xa0] sm:$0xff]
        %v437 = vld [vmem:[%s358 + $0xa8] sm:$0xff]
        %v438 = vld [vmem:[%s358 + $0xb0] sm:$0xff]
        %v439 = vld [vmem:[%s358 + $0xb8] sm:$0xff]
        %v440 = vld [vmem:[%s358 + $0xc0] sm:$0xff]
        %v441 = vld [vmem:[%s358 + $0xc8] sm:$0xff]
        %v442 = vld [vmem:[%s358 + $0xd0] sm:$0xff]
        %v443 = vld [vmem:[%s358 + $0xd8] sm:$0xff]
        %v444 = vld [vmem:[%s358 + $0xe0] sm:$0xff]
        %v445 = vld [vmem:[%s358 + $0xe8] sm:$0xff]
        %v446 = vld [vmem:[%s358 + $0xf0] sm:$0xff]
        %v447 = vld [vmem:[%s358 + $0xf8] sm:$0xff]
        %v448 = vld [vmem:[#allocation5] sm:$0xff]
        %v449 = vld [vmem:[#allocation5 + $0x8] sm:$0xff]
        %v450 = vld [vmem:[#allocation5 + $0x10] sm:$0xff]
        %v451 = vld [vmem:[#allocation5 + $0x18] sm:$0xff]
        %v452 = vld [vmem:[#allocation5 + $0x20] sm:$0xff]
        %v453 = vld [vmem:[#allocation5 + $0x28] sm:$0xff]
        %v454 = vld [vmem:[#allocation5 + $0x30] sm:$0xff]
        %v455 = vld [vmem:[#allocation5 + $0x38] sm:$0xff]
        %v456 = vld [vmem:[#allocation5 + $0x40] sm:$0xff]
        %v457 = vld [vmem:[#allocation5 + $0x48] sm:$0xff]
        %v458 = vld [vmem:[#allocation5 + $0x50] sm:$0xff]
        %v459 = vld [vmem:[#allocation5 + $0x58] sm:$0xff]
        %v460 = vld [vmem:[#allocation5 + $0x60] sm:$0xff]
        %v461 = vld [vmem:[#allocation5 + $0x68] sm:$0xff]
        %v462 = vld [vmem:[#allocation5 + $0x70] sm:$0xff]
        %v463 = vld [vmem:[#allocation5 + $0x78] sm:$0xff]
        %v464 = vld [vmem:[%s2] ss:$2 sm:$0x3]
        %v465 = vld [vmem:[#allocation7] sm:$0xf]
        %v466 = vld [vmem:[#allocation7 + $0x4] sm:$0xf]
        %v467 = vld [vmem:[#allocation7 + $0x8] sm:$0xf]
        %v468 = vld [vmem:[#allocation7 + $0xc] sm:$0xf]
        %v469 = vld [vmem:[#allocation7 + $0x10] sm:$0xf]
        %v470 = vld [vmem:[#allocation7 + $0x14] sm:$0xf]
        %v471 = vld [vmem:[#allocation7 + $0x18] sm:$0xf]
        %v472 = vld [vmem:[#allocation7 + $0x1c] sm:$0xf]
        %v473 = vld [vmem:[#allocation7 + $0x20] sm:$0xf]
        %v474 = vld [vmem:[#allocation7 + $0x24] sm:$0xf]
        %v475 = vld [vmem:[#allocation7 + $0x28] sm:$0xf]
        %v476 = vld [vmem:[#allocation7 + $0x2c] sm:$0xf]
        %v477 = vld [vmem:[#allocation7 + $0x30] sm:$0xf]
        %v478 = vld [vmem:[#allocation7 + $0x34] sm:$0xf]
        %v479 = vld [vmem:[#allocation7 + $0x38] sm:$0xf]
        %v480 = vld [vmem:[#allocation7 + $0x3c] sm:$0xf]
        %v481 = vld [vmem:[#allocation7 + $0x40] sm:$0xf]
        %v482 = vld [vmem:[#allocation7 + $0x44] sm:$0xf]
        %v483 = vld [vmem:[#allocation7 + $0x48] sm:$0xf]
        %v484 = vld [vmem:[#allocation7 + $0x4c] sm:$0xf]
        %v485 = vld [vmem:[#allocation7 + $0x50] sm:$0xf]
        %v486 = vld [vmem:[#allocation7 + $0x54] sm:$0xf]
        %v487 = vld [vmem:[#allocation7 + $0x58] sm:$0xf]
        %v488 = vld [vmem:[#allocation7 + $0x5c] sm:$0xf]
        %v489 = vld [vmem:[#allocation7 + $0x60] sm:$0xf]
        %v490 = vld [vmem:[#allocation7 + $0x64] sm:$0xf]
        %v491 = vld [vmem:[#allocation7 + $0x68] sm:$0xf]
        %v492 = vld [vmem:[#allocation7 + $0x6c] sm:$0xf]
        %v493 = vld [vmem:[#allocation7 + $0x70] sm:$0xf]
        %v494 = vld [vmem:[#allocation7 + $0x74] sm:$0xf]
        %v495 = vld [vmem:[#allocation7 + $0x78] sm:$0xf]
        %v496 = vld [vmem:[#allocation7 + $0x7c] sm:$0xf]
        %v497 = vld [vmem:[%s4] sm:$0x1]
        %v498 = vpack.c.bf16 %v417, %v416
        %v499 = vpack.c.bf16 %v419, %v418
        %v500 = vpack.c.bf16 %v421, %v420
        %v501 = vpack.c.bf16 %v423, %v422
        %v502 = vpack.c.bf16 %v425, %v424
        %v503 = vpack.c.bf16 %v427, %v426
        %v504 = vpack.c.bf16 %v429, %v428
        %v505 = vpack.c.bf16 %v431, %v430
        %v506 = vpack.c.bf16 %v433, %v432
        %v507 = vpack.c.bf16 %v435, %v434
        %v508 = vpack.c.bf16 %v437, %v436
        %v509 = vpack.c.bf16 %v439, %v438
        %v510 = vpack.c.bf16 %v441, %v440
        %v511 = vpack.c.bf16 %v443, %v442
        %v512 = vpack.c.bf16 %v445, %v444
        %v513 = vpack.c.bf16 %v447, %v446
        %v515 = vlaneseq
        %v516 = vshrl.u32 %v515, 7
        %v517 = vsub.s32 0, %v516
        %v518 = vrot.slane %v464, %v517
        %v519 = vlaneseq
        %v520 = vshrl.u32 %v519, 7
        %v521 = vsub.s32 1, %v520
        %v522 = vrot.slane %v464, %v521
        %v541 = vunpack.c.l.b16 %v448
        %v542 = vunpack.c.h.b16 %v448
        %v543 = vunpack.c.l.b16 %v449
        %v544 = vunpack.c.h.b16 %v449
        %v545 = vunpack.c.l.b16 %v450
        %v546 = vunpack.c.h.b16 %v450
        %v547 = vunpack.c.l.b16 %v451
        %v548 = vunpack.c.h.b16 %v451
        %v549 = vunpack.c.l.b16 %v452
        %v550 = vunpack.c.h.b16 %v452
        %v551 = vunpack.c.l.b16 %v453
        %v552 = vunpack.c.h.b16 %v453
        %v553 = vunpack.c.l.b16 %v454
        %v554 = vunpack.c.h.b16 %v454
        %v555 = vunpack.c.l.b16 %v455
        %v556 = vunpack.c.h.b16 %v455
        %v557 = vunpack.c.l.b16 %v456
        %v558 = vunpack.c.h.b16 %v456
        %v559 = vunpack.c.l.b16 %v457
        %v560 = vunpack.c.h.b16 %v457
        %v561 = vunpack.c.l.b16 %v458
        %v562 = vunpack.c.h.b16 %v458
        %v563 = vunpack.c.l.b16 %v459
        %v564 = vunpack.c.h.b16 %v459
        %v565 = vunpack.c.l.b16 %v460
        %v566 = vunpack.c.h.b16 %v460
        %v567 = vunpack.c.l.b16 %v461
        %v568 = vunpack.c.h.b16 %v461
        %v569 = vunpack.c.l.b16 %v462
        %v570 = vunpack.c.h.b16 %v462
        %v571 = vunpack.c.l.b16 %v463
        %v572 = vunpack.c.h.b16 %v463
        %v573 = vpack.c.b16 %v543, %v541
        %v574 = vpack.c.b16 %v544, %v542
        %v575 = vpack.c.b16 %v547, %v545
        %v576 = vpack.c.b16 %v548, %v546
        %v577 = vpack.c.b16 %v551, %v549
        %v578 = vpack.c.b16 %v552, %v550
        %v579 = vpack.c.b16 %v555, %v553
        %v580 = vpack.c.b16 %v556, %v554
        %v581 = vpack.c.b16 %v559, %v557
        %v582 = vpack.c.b16 %v560, %v558
        %v583 = vpack.c.b16 %v563, %v561
        %v584 = vpack.c.b16 %v564, %v562
        %v585 = vpack.c.b16 %v567, %v565
        %v586 = vpack.c.b16 %v568, %v566
        %v587 = vpack.c.b16 %v571, %v569
        %v588 = vpack.c.b16 %v572, %v570
        %605 = vmatprep.subr.bf16.mxu0 %v574
        %606 = vmatpush1.bf16.msra.mxu0 %v573
        %607 = vmatprep.subr.bf16.mxu0 %v576
        %608 = vmatpush1.bf16.msra.mxu0 %v575
        %609 = vmatprep.subr.bf16.mxu0 %v578
        %610 = vmatpush1.bf16.msra.mxu0 %v577
        %611 = vmatprep.subr.bf16.mxu0 %v580
        %612 = vmatpush1.bf16.msra.mxu0 %v579
        %613 = vmatprep.subr.bf16.mxu0 %v582
        %614 = vmatpush1.bf16.msra.mxu0 %v581
        %615 = vmatprep.subr.bf16.mxu0 %v584
        %616 = vmatpush1.bf16.msra.mxu0 %v583
        %617 = vmatprep.subr.bf16.mxu0 %v586
        %618 = vmatpush1.bf16.msra.mxu0 %v585
        %619 = vmatprep.subr.bf16.mxu0 %v588
        %620 = vmatpush1.bf16.msra.mxu0 %v587
        %621 = vmatprep.subr.bf16.mxu0 0
        %622 = vmatpush1.bf16.msra.mxu0 0
        %623 = vmatprep.subr.bf16.mxu0 0
        %624 = vmatpush1.bf16.msra.mxu0 0
        %625 = vmatprep.subr.bf16.mxu0 0
        %626 = vmatpush1.bf16.msra.mxu0 0
        %627 = vmatprep.subr.bf16.mxu0 0
        %628 = vmatpush1.bf16.msra.mxu0 0
        %629 = vmatprep.subr.bf16.mxu0 0
        %630 = vmatpush1.bf16.msra.mxu0 0
        %631 = vmatprep.subr.bf16.mxu0 0
        %632 = vmatpush1.bf16.msra.mxu0 0
        %633 = vmatprep.subr.bf16.mxu0 0
        %634 = vmatpush1.bf16.msra.mxu0 0
        %635 = vmatprep.subr.bf16.mxu0 0
        %636 = vmatpush1.bf16.msra.mxu0 0
        %637 = vmatprep.mubr.bf16.mxu0 0
        %638 = vmatmul.mubr.bf16.gmra.mrb[0].mxu0 %v498
        %v639 = vpop.f32.mrb[0].mxu0
        %v640 = vadd.f32 %v518, %v639
        %v641 = vpop.f32.mrb[0].mxu0
        %v642 = vadd.f32 %v522, %v641
        %v643 = vpop.f32.mrb[0].mxu0
        %v644 = vadd.f32 %v518, %v643
        %v645 = vpop.f32.mrb[0].mxu0
        %v646 = vadd.f32 %v522, %v645
        %647 = vmatprep.mubr.bf16.mxu0 0
        %648 = vmatmul.mubr.bf16.gmra.mrb[0].mxu0 %v499
        %v649 = vpop.f32.mrb[0].mxu0
        %v650 = vadd.f32 %v518, %v649
        %v651 = vpop.f32.mrb[0].mxu0
        %v652 = vadd.f32 %v522, %v651
        %v653 = vpop.f32.mrb[0].mxu0
        %v654 = vadd.f32 %v518, %v653
        %v655 = vpop.f32.mrb[0].mxu0
        %v656 = vadd.f32 %v522, %v655
        %657 = vmatprep.mubr.bf16.mxu0 0
        %658 = vmatmul.mubr.bf16.gmra.mrb[0].mxu0 %v500
        %v659 = vpop.f32.mrb[0].mxu0
        %v660 = vadd.f32 %v518, %v659
        %v661 = vpop.f32.mrb[0].mxu0
        %v662 = vadd.f32 %v522, %v661
        %v663 = vpop.f32.mrb[0].mxu0
        %v664 = vadd.f32 %v518, %v663
        %v665 = vpop.f32.mrb[0].mxu0
        %v666 = vadd.f32 %v522, %v665
        %667 = vmatprep.mubr.bf16.mxu0 0
        %668 = vmatmul.mubr.bf16.gmra.mrb[0].mxu0 %v501
        %v669 = vpop.f32.mrb[0].mxu0
        %v670 = vadd.f32 %v518, %v669
        %v671 = vpop.f32.mrb[0].mxu0
        %v672 = vadd.f32 %v522, %v671
        %v673 = vpop.f32.mrb[0].mxu0
        %v674 = vadd.f32 %v518, %v673
        %v675 = vpop.f32.mrb[0].mxu0
        %v676 = vadd.f32 %v522, %v675
        %677 = vmatprep.mubr.bf16.mxu0 0
        %678 = vmatmul.mubr.bf16.gmra.mrb[0].mxu0 %v502
        %v679 = vpop.f32.mrb[0].mxu0
        %v680 = vadd.f32 %v518, %v679
        %v681 = vpop.f32.mrb[0].mxu0
        %v682 = vadd.f32 %v522, %v681
        %v683 = vpop.f32.mrb[0].mxu0
        %v684 = vadd.f32 %v518, %v683
        %v685 = vpop.f32.mrb[0].mxu0
        %v686 = vadd.f32 %v522, %v685
        %687 = vmatprep.mubr.bf16.mxu0 0
        %688 = vmatmul.mubr.bf16.gmra.mrb[0].mxu0 %v503
        %v689 = vpop.f32.mrb[0].mxu0
        %v690 = vadd.f32 %v518, %v689
        %v691 = vpop.f32.mrb[0].mxu0
        %v692 = vadd.f32 %v522, %v691
        %v693 = vpop.f32.mrb[0].mxu0
        %v694 = vadd.f32 %v518, %v693
        %v695 = vpop.f32.mrb[0].mxu0
        %v696 = vadd.f32 %v522, %v695
        %697 = vmatprep.mubr.bf16.mxu0 0
        %698 = vmatmul.mubr.bf16.gmra.mrb[0].mxu0 %v504
        %v699 = vpop.f32.mrb[0].mxu0
        %v700 = vadd.f32 %v518, %v699
        %v701 = vpop.f32.mrb[0].mxu0
        %v702 = vadd.f32 %v522, %v701
        %v703 = vpop.f32.mrb[0].mxu0
        %v704 = vadd.f32 %v518, %v703
        %v705 = vpop.f32.mrb[0].mxu0
        %v706 = vadd.f32 %v522, %v705
        %707 = vmatprep.mubr.bf16.mxu0 0
        %708 = vmatmul.mubr.bf16.gmra.mrb[0].mxu0 %v505
        %v709 = vpop.f32.mrb[0].mxu0
        %v710 = vadd.f32 %v518, %v709
        %v711 = vpop.f32.mrb[0].mxu0
        %v712 = vadd.f32 %v522, %v711
        %v713 = vpop.f32.mrb[0].mxu0
        %v714 = vadd.f32 %v518, %v713
        %v715 = vpop.f32.mrb[0].mxu0
        %v716 = vadd.f32 %v522, %v715
        %717 = vmatprep.mubr.bf16.mxu0 0
        %718 = vmatmul.mubr.bf16.gmra.mrb[0].mxu0 %v506
        %v719 = vpop.f32.mrb[0].mxu0
        %v720 = vadd.f32 %v518, %v719
        %v721 = vpop.f32.mrb[0].mxu0
        %v722 = vadd.f32 %v522, %v721
        %v723 = vpop.f32.mrb[0].mxu0
        %v724 = vadd.f32 %v518, %v723
        %v725 = vpop.f32.mrb[0].mxu0
        %v726 = vadd.f32 %v522, %v725
        %727 = vmatprep.mubr.bf16.mxu0 0
        %728 = vmatmul.mubr.bf16.gmra.mrb[0].mxu0 %v507
        %v729 = vpop.f32.mrb[0].mxu0
        %v730 = vadd.f32 %v518, %v729
        %v731 = vpop.f32.mrb[0].mxu0
        %v732 = vadd.f32 %v522, %v731
        %v733 = vpop.f32.mrb[0].mxu0
        %v734 = vadd.f32 %v518, %v733
        %v735 = vpop.f32.mrb[0].mxu0
        %v736 = vadd.f32 %v522, %v735
        %737 = vmatprep.mubr.bf16.mxu0 0
        %738 = vmatmul.mubr.bf16.gmra.mrb[0].mxu0 %v508
        %v739 = vpop.f32.mrb[0].mxu0
        %v740 = vadd.f32 %v518, %v739
        %v741 = vpop.f32.mrb[0].mxu0
        %v742 = vadd.f32 %v522, %v741
        %v743 = vpop.f32.mrb[0].mxu0
        %v744 = vadd.f32 %v518, %v743
        %v745 = vpop.f32.mrb[0].mxu0
        %v746 = vadd.f32 %v522, %v745
        %747 = vmatprep.mubr.bf16.mxu0 0
        %748 = vmatmul.mubr.bf16.gmra.mrb[0].mxu0 %v509
        %v749 = vpop.f32.mrb[0].mxu0
        %v750 = vadd.f32 %v518, %v749
        %v751 = vpop.f32.mrb[0].mxu0
        %v752 = vadd.f32 %v522, %v751
        %v753 = vpop.f32.mrb[0].mxu0
        %v754 = vadd.f32 %v518, %v753
        %v755 = vpop.f32.mrb[0].mxu0
        %v756 = vadd.f32 %v522, %v755
        %757 = vmatprep.mubr.bf16.mxu0 0
        %758 = vmatmul.mubr.bf16.gmra.mrb[0].mxu0 %v510
        %v759 = vpop.f32.mrb[0].mxu0
        %v760 = vadd.f32 %v518, %v759
        %v761 = vpop.f32.mrb[0].mxu0
        %v762 = vadd.f32 %v522, %v761
        %v763 = vpop.f32.mrb[0].mxu0
        %v764 = vadd.f32 %v518, %v763
        %v765 = vpop.f32.mrb[0].mxu0
        %v766 = vadd.f32 %v522, %v765
        %767 = vmatprep.mubr.bf16.mxu0 0
        %768 = vmatmul.mubr.bf16.gmra.mrb[0].mxu0 %v511
        %v769 = vpop.f32.mrb[0].mxu0
        %v770 = vadd.f32 %v518, %v769
        %v771 = vpop.f32.mrb[0].mxu0
        %v772 = vadd.f32 %v522, %v771
        %v773 = vpop.f32.mrb[0].mxu0
        %v774 = vadd.f32 %v518, %v773
        %v775 = vpop.f32.mrb[0].mxu0
        %v776 = vadd.f32 %v522, %v775
        %777 = vmatprep.mubr.bf16.mxu0 0
        %778 = vmatmul.mubr.bf16.gmra.mrb[0].mxu0 %v512
        %v779 = vpop.f32.mrb[0].mxu0
        %v780 = vadd.f32 %v518, %v779
        %v781 = vpop.f32.mrb[0].mxu0
        %v782 = vadd.f32 %v522, %v781
        %v783 = vpop.f32.mrb[0].mxu0
        %v784 = vadd.f32 %v518, %v783
        %v785 = vpop.f32.mrb[0].mxu0
        %v786 = vadd.f32 %v522, %v785
        %787 = vmatprep.mubr.bf16.mxu0 0
        %788 = vmatmul.mubr.bf16.gmra.mrb[0].mxu0 %v513
        %v789 = vpop.f32.mrb[0].mxu0
        %v790 = vadd.f32 %v518, %v789
        %v791 = vpop.f32.mrb[0].mxu0
        %v792 = vadd.f32 %v522, %v791
        %v793 = vpop.f32.mrb[0].mxu0
        %v794 = vadd.f32 %v518, %v793
        %v795 = vpop.f32.mrb[0].mxu0
        %v796 = vadd.f32 %v522, %v795
        %797 = vdwg.mxu0
        %v798 = vpack.c.bf16 %v644, %v640
        %v799 = vpack.c.bf16 %v646, %v642
        %v800 = vpack.c.bf16 %v654, %v650
        %v801 = vpack.c.bf16 %v656, %v652
        %v802 = vpack.c.bf16 %v664, %v660
        %v803 = vpack.c.bf16 %v666, %v662
        %v804 = vpack.c.bf16 %v674, %v670
        %v805 = vpack.c.bf16 %v676, %v672
        %v806 = vpack.c.bf16 %v684, %v680
        %v807 = vpack.c.bf16 %v686, %v682
        %v808 = vpack.c.bf16 %v694, %v690
        %v809 = vpack.c.bf16 %v696, %v692
        %v810 = vpack.c.bf16 %v704, %v700
        %v811 = vpack.c.bf16 %v706, %v702
        %v812 = vpack.c.bf16 %v714, %v710
        %v813 = vpack.c.bf16 %v716, %v712
        %v814 = vpack.c.bf16 %v724, %v720
        %v815 = vpack.c.bf16 %v726, %v722
        %v816 = vpack.c.bf16 %v734, %v730
        %v817 = vpack.c.bf16 %v736, %v732
        %v818 = vpack.c.bf16 %v744, %v740
        %v819 = vpack.c.bf16 %v746, %v742
        %v820 = vpack.c.bf16 %v754, %v750
        %v821 = vpack.c.bf16 %v756, %v752
        %v822 = vpack.c.bf16 %v764, %v760
        %v823 = vpack.c.bf16 %v766, %v762
        %v824 = vpack.c.bf16 %v774, %v770
        %v825 = vpack.c.bf16 %v776, %v772
        %v826 = vpack.c.bf16 %v784, %v780
        %v827 = vpack.c.bf16 %v786, %v782
        %v828 = vpack.c.bf16 %v794, %v790
        %v829 = vpack.c.bf16 %v796, %v792
        %v830 = vmul.bf16 %v798, %v798
        %v831 = vmul.bf16 %v799, %v799
        %v832 = vmul.bf16 %v800, %v800
        %v833 = vmul.bf16 %v801, %v801
        %v834 = vmul.bf16 %v802, %v802
        %v835 = vmul.bf16 %v803, %v803
        %v836 = vmul.bf16 %v804, %v804
        %v837 = vmul.bf16 %v805, %v805
        %v838 = vmul.bf16 %v806, %v806
        %v839 = vmul.bf16 %v807, %v807
        %v840 = vmul.bf16 %v808, %v808
        %v841 = vmul.bf16 %v809, %v809
        %v842 = vmul.bf16 %v810, %v810
        %v843 = vmul.bf16 %v811, %v811
        %v844 = vmul.bf16 %v812, %v812
        %v845 = vmul.bf16 %v813, %v813
        %v846 = vmul.bf16 %v814, %v814
        %v847 = vmul.bf16 %v815, %v815
        %v848 = vmul.bf16 %v816, %v816
        %v849 = vmul.bf16 %v817, %v817
        %v850 = vmul.bf16 %v818, %v818
        %v851 = vmul.bf16 %v819, %v819
        %v852 = vmul.bf16 %v820, %v820
        %v853 = vmul.bf16 %v821, %v821
        %v854 = vmul.bf16 %v822, %v822
        %v855 = vmul.bf16 %v823, %v823
        %v856 = vmul.bf16 %v824, %v824
        %v857 = vmul.bf16 %v825, %v825
        %v858 = vmul.bf16 %v826, %v826
        %v859 = vmul.bf16 %v827, %v827
        %v860 = vmul.bf16 %v828, %v828
        %v861 = vmul.bf16 %v829, %v829
        %v862 = vmul.bf16 %v798, %v830
        %v863 = vmul.bf16 %v799, %v831
        %v864 = vmul.bf16 %v800, %v832
        %v865 = vmul.bf16 %v801, %v833
        %v866 = vmul.bf16 %v802, %v834
        %v867 = vmul.bf16 %v803, %v835
        %v868 = vmul.bf16 %v804, %v836
        %v869 = vmul.bf16 %v805, %v837
        %v870 = vmul.bf16 %v806, %v838
        %v871 = vmul.bf16 %v807, %v839
        %v872 = vmul.bf16 %v808, %v840
        %v873 = vmul.bf16 %v809, %v841
        %v874 = vmul.bf16 %v810, %v842
        %v875 = vmul.bf16 %v811, %v843
        %v876 = vmul.bf16 %v812, %v844
        %v877 = vmul.bf16 %v813, %v845
        %v878 = vmul.bf16 %v814, %v846
        %v879 = vmul.bf16 %v815, %v847
        %v880 = vmul.bf16 %v816, %v848
        %v881 = vmul.bf16 %v817, %v849
        %v882 = vmul.bf16 %v818, %v850
        %v883 = vmul.bf16 %v819, %v851
        %v884 = vmul.bf16 %v820, %v852
        %v885 = vmul.bf16 %v821, %v853
        %v886 = vmul.bf16 %v822, %v854
        %v887 = vmul.bf16 %v823, %v855
        %v888 = vmul.bf16 %v824, %v856
        %v889 = vmul.bf16 %v825, %v857
        %v890 = vmul.bf16 %v826, %v858
        %v891 = vmul.bf16 %v827, %v859
        %v892 = vmul.bf16 %v828, %v860
        %v893 = vmul.bf16 %v829, %v861
        %v894 = vmul.bf16 %v862, 1027030327
        %v895 = vmul.bf16 %v863, 1027030327
        %v896 = vmul.bf16 %v864, 1027030327
        %v897 = vmul.bf16 %v865, 1027030327
        %v898 = vmul.bf16 %v866, 1027030327
        %v899 = vmul.bf16 %v867, 1027030327
        %v900 = vmul.bf16 %v868, 1027030327
        %v901 = vmul.bf16 %v869, 1027030327
        %v902 = vmul.bf16 %v870, 1027030327
        %v903 = vmul.bf16 %v871, 1027030327
        %v904 = vmul.bf16 %v872, 1027030327
        %v905 = vmul.bf16 %v873, 1027030327
        %v906 = vmul.bf16 %v874, 1027030327
        %v907 = vmul.bf16 %v875, 1027030327
        %v908 = vmul.bf16 %v876, 1027030327
        %v909 = vmul.bf16 %v877, 1027030327
        %v910 = vmul.bf16 %v878, 1027030327
        %v911 = vmul.bf16 %v879, 1027030327
        %v912 = vmul.bf16 %v880, 1027030327
        %v913 = vmul.bf16 %v881, 1027030327
        %v914 = vmul.bf16 %v882, 1027030327
        %v915 = vmul.bf16 %v883, 1027030327
        %v916 = vmul.bf16 %v884, 1027030327
        %v917 = vmul.bf16 %v885, 1027030327
        %v918 = vmul.bf16 %v886, 1027030327
        %v919 = vmul.bf16 %v887, 1027030327
        %v920 = vmul.bf16 %v888, 1027030327
        %v921 = vmul.bf16 %v889, 1027030327
        %v922 = vmul.bf16 %v890, 1027030327
        %v923 = vmul.bf16 %v891, 1027030327
        %v924 = vmul.bf16 %v892, 1027030327
        %v925 = vmul.bf16 %v893, 1027030327
        %v926 = vadd.bf16 %v798, %v894
        %v927 = vadd.bf16 %v799, %v895
        %v928 = vadd.bf16 %v800, %v896
        %v929 = vadd.bf16 %v801, %v897
        %v930 = vadd.bf16 %v802, %v898
        %v931 = vadd.bf16 %v803, %v899
        %v932 = vadd.bf16 %v804, %v900
        %v933 = vadd.bf16 %v805, %v901
        %v934 = vadd.bf16 %v806, %v902
        %v935 = vadd.bf16 %v807, %v903
        %v936 = vadd.bf16 %v808, %v904
        %v937 = vadd.bf16 %v809, %v905
        %v938 = vadd.bf16 %v810, %v906
        %v939 = vadd.bf16 %v811, %v907
        %v940 = vadd.bf16 %v812, %v908
        %v941 = vadd.bf16 %v813, %v909
        %v942 = vadd.bf16 %v814, %v910
        %v943 = vadd.bf16 %v815, %v911
        %v944 = vadd.bf16 %v816, %v912
        %v945 = vadd.bf16 %v817, %v913
        %v946 = vadd.bf16 %v818, %v914
        %v947 = vadd.bf16 %v819, %v915
        %v948 = vadd.bf16 %v820, %v916
        %v949 = vadd.bf16 %v821, %v917
        %v950 = vadd.bf16 %v822, %v918
        %v951 = vadd.bf16 %v823, %v919
        %v952 = vadd.bf16 %v824, %v920
        %v953 = vadd.bf16 %v825, %v921
        %v954 = vadd.bf16 %v826, %v922
        %v955 = vadd.bf16 %v827, %v923
        %v956 = vadd.bf16 %v828, %v924
        %v957 = vadd.bf16 %v829, %v925
        %v958 = vmul.bf16 %v926, 1061961548
        %v959 = vmul.bf16 %v927, 1061961548
        %v960 = vmul.bf16 %v928, 1061961548
        %v961 = vmul.bf16 %v929, 1061961548
        %v962 = vmul.bf16 %v930, 1061961548
        %v963 = vmul.bf16 %v931, 1061961548
        %v964 = vmul.bf16 %v932, 1061961548
        %v965 = vmul.bf16 %v933, 1061961548
        %v966 = vmul.bf16 %v934, 1061961548
        %v967 = vmul.bf16 %v935, 1061961548
        %v968 = vmul.bf16 %v936, 1061961548
        %v969 = vmul.bf16 %v937, 1061961548
        %v970 = vmul.bf16 %v938, 1061961548
        %v971 = vmul.bf16 %v939, 1061961548
        %v972 = vmul.bf16 %v940, 1061961548
        %v973 = vmul.bf16 %v941, 1061961548
        %v974 = vmul.bf16 %v942, 1061961548
        %v975 = vmul.bf16 %v943, 1061961548
        %v976 = vmul.bf16 %v944, 1061961548
        %v977 = vmul.bf16 %v945, 1061961548
        %v978 = vmul.bf16 %v946, 1061961548
        %v979 = vmul.bf16 %v947, 1061961548
        %v980 = vmul.bf16 %v948, 1061961548
        %v981 = vmul.bf16 %v949, 1061961548
        %v982 = vmul.bf16 %v950, 1061961548
        %v983 = vmul.bf16 %v951, 1061961548
        %v984 = vmul.bf16 %v952, 1061961548
        %v985 = vmul.bf16 %v953, 1061961548
        %v986 = vmul.bf16 %v954, 1061961548
        %v987 = vmul.bf16 %v955, 1061961548
        %v988 = vmul.bf16 %v956, 1061961548
        %v989 = vmul.bf16 %v957, 1061961548
        %v990 = vtanh.bf16.pop %v958
        %v991 = vtanh.bf16.pop %v959
        %v992 = vtanh.bf16.pop %v960
        %v993 = vtanh.bf16.pop %v961
        %v994 = vtanh.bf16.pop %v962
        %v995 = vtanh.bf16.pop %v963
        %v996 = vtanh.bf16.pop %v964
        %v997 = vtanh.bf16.pop %v965
        %v998 = vtanh.bf16.pop %v966
        %v999 = vtanh.bf16.pop %v967
        %v1000 = vtanh.bf16.pop %v968
        %v1001 = vtanh.bf16.pop %v969
        %v1002 = vtanh.bf16.pop %v970
        %v1003 = vtanh.bf16.pop %v971
        %v1004 = vtanh.bf16.pop %v972
        %v1005 = vtanh.bf16.pop %v973
        %v1006 = vtanh.bf16.pop %v974
        %v1007 = vtanh.bf16.pop %v975
        %v1008 = vtanh.bf16.pop %v976
        %v1009 = vtanh.bf16.pop %v977
        %v1010 = vtanh.bf16.pop %v978
        %v1011 = vtanh.bf16.pop %v979
        %v1012 = vtanh.bf16.pop %v980
        %v1013 = vtanh.bf16.pop %v981
        %v1014 = vtanh.bf16.pop %v982
        %v1015 = vtanh.bf16.pop %v983
        %v1016 = vtanh.bf16.pop %v984
        %v1017 = vtanh.bf16.pop %v985
        %v1018 = vtanh.bf16.pop %v986
        %v1019 = vtanh.bf16.pop %v987
        %v1020 = vtanh.bf16.pop %v988
        %v1021 = vtanh.bf16.pop %v989
        %v1022 = vadd.bf16 %v990, 1065369472
        %v1023 = vadd.bf16 %v991, 1065369472
        %v1024 = vadd.bf16 %v992, 1065369472
        %v1025 = vadd.bf16 %v993, 1065369472
        %v1026 = vadd.bf16 %v994, 1065369472
        %v1027 = vadd.bf16 %v995, 1065369472
        %v1028 = vadd.bf16 %v996, 1065369472
        %v1029 = vadd.bf16 %v997, 1065369472
        %v1030 = vadd.bf16 %v998, 1065369472
        %v1031 = vadd.bf16 %v999, 1065369472
        %v1032 = vadd.bf16 %v1000, 1065369472
        %v1033 = vadd.bf16 %v1001, 1065369472
        %v1034 = vadd.bf16 %v1002, 1065369472
        %v1035 = vadd.bf16 %v1003, 1065369472
        %v1036 = vadd.bf16 %v1004, 1065369472
        %v1037 = vadd.bf16 %v1005, 1065369472
        %v1038 = vadd.bf16 %v1006, 1065369472
        %v1039 = vadd.bf16 %v1007, 1065369472
        %v1040 = vadd.bf16 %v1008, 1065369472
        %v1041 = vadd.bf16 %v1009, 1065369472
        %v1042 = vadd.bf16 %v1010, 1065369472
        %v1043 = vadd.bf16 %v1011, 1065369472
        %v1044 = vadd.bf16 %v1012, 1065369472
        %v1045 = vadd.bf16 %v1013, 1065369472
        %v1046 = vadd.bf16 %v1014, 1065369472
        %v1047 = vadd.bf16 %v1015, 1065369472
        %v1048 = vadd.bf16 %v1016, 1065369472
        %v1049 = vadd.bf16 %v1017, 1065369472
        %v1050 = vadd.bf16 %v1018, 1065369472
        %v1051 = vadd.bf16 %v1019, 1065369472
        %v1052 = vadd.bf16 %v1020, 1065369472
        %v1053 = vadd.bf16 %v1021, 1065369472
        %v1054 = vmul.bf16 %v1022, 1056980736
        %v1055 = vmul.bf16 %v1023, 1056980736
        %v1056 = vmul.bf16 %v1024, 1056980736
        %v1057 = vmul.bf16 %v1025, 1056980736
        %v1058 = vmul.bf16 %v1026, 1056980736
        %v1059 = vmul.bf16 %v1027, 1056980736
        %v1060 = vmul.bf16 %v1028, 1056980736
        %v1061 = vmul.bf16 %v1029, 1056980736
        %v1062 = vmul.bf16 %v1030, 1056980736
        %v1063 = vmul.bf16 %v1031, 1056980736
        %v1064 = vmul.bf16 %v1032, 1056980736
        %v1065 = vmul.bf16 %v1033, 1056980736
        %v1066 = vmul.bf16 %v1034, 1056980736
        %v1067 = vmul.bf16 %v1035, 1056980736
        %v1068 = vmul.bf16 %v1036, 1056980736
        %v1069 = vmul.bf16 %v1037, 1056980736
        %v1070 = vmul.bf16 %v1038, 1056980736
        %v1071 = vmul.bf16 %v1039, 1056980736
        %v1072 = vmul.bf16 %v1040, 1056980736
        %v1073 = vmul.bf16 %v1041, 1056980736
        %v1074 = vmul.bf16 %v1042, 1056980736
        %v1075 = vmul.bf16 %v1043, 1056980736
        %v1076 = vmul.bf16 %v1044, 1056980736
        %v1077 = vmul.bf16 %v1045, 1056980736
        %v1078 = vmul.bf16 %v1046, 1056980736
        %v1079 = vmul.bf16 %v1047, 1056980736
        %v1080 = vmul.bf16 %v1048, 1056980736
        %v1081 = vmul.bf16 %v1049, 1056980736
        %v1082 = vmul.bf16 %v1050, 1056980736
        %v1083 = vmul.bf16 %v1051, 1056980736
        %v1084 = vmul.bf16 %v1052, 1056980736
        %v1085 = vmul.bf16 %v1053, 1056980736
        %v1086 = vmul.bf16 %v798, %v1054
        %v1087 = vmul.bf16 %v799, %v1055
        %v1088 = vmul.bf16 %v800, %v1056
        %v1089 = vmul.bf16 %v801, %v1057
        %v1090 = vmul.bf16 %v802, %v1058
        %v1091 = vmul.bf16 %v803, %v1059
        %v1092 = vmul.bf16 %v804, %v1060
        %v1093 = vmul.bf16 %v805, %v1061
        %v1094 = vmul.bf16 %v806, %v1062
        %v1095 = vmul.bf16 %v807, %v1063
        %v1096 = vmul.bf16 %v808, %v1064
        %v1097 = vmul.bf16 %v809, %v1065
        %v1098 = vmul.bf16 %v810, %v1066
        %v1099 = vmul.bf16 %v811, %v1067
        %v1100 = vmul.bf16 %v812, %v1068
        %v1101 = vmul.bf16 %v813, %v1069
        %v1102 = vmul.bf16 %v814, %v1070
        %v1103 = vmul.bf16 %v815, %v1071
        %v1104 = vmul.bf16 %v816, %v1072
        %v1105 = vmul.bf16 %v817, %v1073
        %v1106 = vmul.bf16 %v818, %v1074
        %v1107 = vmul.bf16 %v819, %v1075
        %v1108 = vmul.bf16 %v820, %v1076
        %v1109 = vmul.bf16 %v821, %v1077
        %v1110 = vmul.bf16 %v822, %v1078
        %v1111 = vmul.bf16 %v823, %v1079
        %v1112 = vmul.bf16 %v824, %v1080
        %v1113 = vmul.bf16 %v825, %v1081
        %v1114 = vmul.bf16 %v826, %v1082
        %v1115 = vmul.bf16 %v827, %v1083
        %v1116 = vmul.bf16 %v828, %v1084
        %v1117 = vmul.bf16 %v829, %v1085
        %v1118 = vlaneseq
        %v1119 = vshrl.u32 %v1118, 7
        %v1120 = vsub.s32 0, %v1119
        %v1121 = vrot.slane %v497, %v1120
        %v1154 = vunpack.c.l.b16 %v465
        %v1155 = vunpack.c.l.b16 %v466
        %v1156 = vunpack.c.l.b16 %v467
        %v1157 = vunpack.c.l.b16 %v468
        %v1158 = vunpack.c.l.b16 %v469
        %v1159 = vunpack.c.l.b16 %v470
        %v1160 = vunpack.c.l.b16 %v471
        %v1161 = vunpack.c.l.b16 %v472
        %v1162 = vunpack.c.l.b16 %v473
        %v1163 = vunpack.c.l.b16 %v474
        %v1164 = vunpack.c.l.b16 %v475
        %v1165 = vunpack.c.l.b16 %v476
        %v1166 = vunpack.c.l.b16 %v477
        %v1167 = vunpack.c.l.b16 %v478
        %v1168 = vunpack.c.l.b16 %v479
        %v1169 = vunpack.c.l.b16 %v480
        %v1170 = vunpack.c.l.b16 %v481
        %v1171 = vunpack.c.l.b16 %v482
        %v1172 = vunpack.c.l.b16 %v483
        %v1173 = vunpack.c.l.b16 %v484
        %v1174 = vunpack.c.l.b16 %v485
        %v1175 = vunpack.c.l.b16 %v486
        %v1176 = vunpack.c.l.b16 %v487
        %v1177 = vunpack.c.l.b16 %v488
        %v1178 = vunpack.c.l.b16 %v489
        %v1179 = vunpack.c.l.b16 %v490
        %v1180 = vunpack.c.l.b16 %v491
        %v1181 = vunpack.c.l.b16 %v492
        %v1182 = vunpack.c.l.b16 %v493
        %v1183 = vunpack.c.l.b16 %v494
        %v1184 = vunpack.c.l.b16 %v495
        %v1185 = vunpack.c.l.b16 %v496
        %v1186 = vpack.c.b16 %v1155, %v1154
        %v1187 = vpack.c.b16 %v1157, %v1156
        %v1188 = vpack.c.b16 %v1159, %v1158
        %v1189 = vpack.c.b16 %v1161, %v1160
        %v1190 = vpack.c.b16 %v1163, %v1162
        %v1191 = vpack.c.b16 %v1165, %v1164
        %v1192 = vpack.c.b16 %v1167, %v1166
        %v1193 = vpack.c.b16 %v1169, %v1168
        %v1194 = vpack.c.b16 %v1171, %v1170
        %v1195 = vpack.c.b16 %v1173, %v1172
        %v1196 = vpack.c.b16 %v1175, %v1174
        %v1197 = vpack.c.b16 %v1177, %v1176
        %v1198 = vpack.c.b16 %v1179, %v1178
        %v1199 = vpack.c.b16 %v1181, %v1180
        %v1200 = vpack.c.b16 %v1183, %v1182
        %v1201 = vpack.c.b16 %v1185, %v1184
        %1218 = vmatprep.subr.bf16.mxu0 0
        %1219 = vmatpush1.bf16.msra.mxu0 %v1186
        %1220 = vmatprep.subr.bf16.mxu0 0
        %1221 = vmatpush1.bf16.msra.mxu0 %v1187
        %1222 = vmatprep.subr.bf16.mxu0 0
        %1223 = vmatpush1.bf16.msra.mxu0 %v1188
        %1224 = vmatprep.subr.bf16.mxu0 0
        %1225 = vmatpush1.bf16.msra.mxu0 %v1189
        %1226 = vmatprep.subr.bf16.mxu0 0
        %1227 = vmatpush1.bf16.msra.mxu0 %v1190
        %1228 = vmatprep.subr.bf16.mxu0 0
        %1229 = vmatpush1.bf16.msra.mxu0 %v1191
        %1230 = vmatprep.subr.bf16.mxu0 0
        %1231 = vmatpush1.bf16.msra.mxu0 %v1192
        %1232 = vmatprep.subr.bf16.mxu0 0
        %1233 = vmatpush1.bf16.msra.mxu0 %v1193
        %1234 = vmatprep.subr.bf16.mxu0 0
        %1235 = vmatpush1.bf16.msra.mxu0 %v1194
        %1236 = vmatprep.subr.bf16.mxu0 0
        %1237 = vmatpush1.bf16.msra.mxu0 %v1195
        %1238 = vmatprep.subr.bf16.mxu0 0
        %1239 = vmatpush1.bf16.msra.mxu0 %v1196
        %1240 = vmatprep.subr.bf16.mxu0 0
        %1241 = vmatpush1.bf16.msra.mxu0 %v1197
        %1242 = vmatprep.subr.bf16.mxu0 0
        %1243 = vmatpush1.bf16.msra.mxu0 %v1198
        %1244 = vmatprep.subr.bf16.mxu0 0
        %1245 = vmatpush1.bf16.msra.mxu0 %v1199
        %1246 = vmatprep.subr.bf16.mxu0 0
        %1247 = vmatpush1.bf16.msra.mxu0 %v1200
        %1248 = vmatprep.subr.bf16.mxu0 0
        %1249 = vmatpush1.bf16.msra.mxu0 %v1201
        %1250 = vmatprep.mubr.bf16.mxu0 %v1087
        %1251 = vmatmul.mubr.bf16.gmra.mrb[0].mxu0 %v1086
        %v1252 = vpop.f32.mrb[0].mxu0
        %v1253 = vadd.f32 %v1121, %v1252
        %v1254 = vpop.f32.mrb[0].mxu0
        %v1255 = vpop.f32.mrb[0].mxu0
        %v1256 = vadd.f32 %v1121, %v1255
        %v1257 = vpop.f32.mrb[0].mxu0
        %1258 = vmatprep.mubr.bf16.mxu0 %v1089
        %1259 = vmatmul.mubr.bf16.gmra.mrb[0].mxu0 %v1088
        %v1260 = vpop.f32.mrb[0].mxu0
        %v1261 = vadd.f32 %v1121, %v1260
        %v1262 = vpop.f32.mrb[0].mxu0
        %v1263 = vpop.f32.mrb[0].mxu0
        %v1264 = vadd.f32 %v1121, %v1263
        %v1265 = vpop.f32.mrb[0].mxu0
        %1266 = vmatprep.mubr.bf16.mxu0 %v1091
        %1267 = vmatmul.mubr.bf16.gmra.mrb[0].mxu0 %v1090
        %v1268 = vpop.f32.mrb[0].mxu0
        %v1269 = vadd.f32 %v1121, %v1268
        %v1270 = vpop.f32.mrb[0].mxu0
        %v1271 = vpop.f32.mrb[0].mxu0
        %v1272 = vadd.f32 %v1121, %v1271
        %v1273 = vpop.f32.mrb[0].mxu0
        %1274 = vmatprep.mubr.bf16.mxu0 %v1093
        %1275 = vmatmul.mubr.bf16.gmra.mrb[0].mxu0 %v1092
        %v1276 = vpop.f32.mrb[0].mxu0
        %v1277 = vadd.f32 %v1121, %v1276
        %v1278 = vpop.f32.mrb[0].mxu0
        %v1279 = vpop.f32.mrb[0].mxu0
        %v1280 = vadd.f32 %v1121, %v1279
        %v1281 = vpop.f32.mrb[0].mxu0
        %1282 = vmatprep.mubr.bf16.mxu0 %v1095
        %1283 = vmatmul.mubr.bf16.gmra.mrb[0].mxu0 %v1094
        %v1284 = vpop.f32.mrb[0].mxu0
        %v1285 = vadd.f32 %v1121, %v1284
        %v1286 = vpop.f32.mrb[0].mxu0
        %v1287 = vpop.f32.mrb[0].mxu0
        %v1288 = vadd.f32 %v1121, %v1287
        %v1289 = vpop.f32.mrb[0].mxu0
        %1290 = vmatprep.mubr.bf16.mxu0 %v1097
        %1291 = vmatmul.mubr.bf16.gmra.mrb[0].mxu0 %v1096
        %v1292 = vpop.f32.mrb[0].mxu0
        %v1293 = vadd.f32 %v1121, %v1292
        %v1294 = vpop.f32.mrb[0].mxu0
        %v1295 = vpop.f32.mrb[0].mxu0
        %v1296 = vadd.f32 %v1121, %v1295
        %v1297 = vpop.f32.mrb[0].mxu0
        %1298 = vmatprep.mubr.bf16.mxu0 %v1099
        %1299 = vmatmul.mubr.bf16.gmra.mrb[0].mxu0 %v1098
        %v1300 = vpop.f32.mrb[0].mxu0
        %v1301 = vadd.f32 %v1121, %v1300
        %v1302 = vpop.f32.mrb[0].mxu0
        %v1303 = vpop.f32.mrb[0].mxu0
        %v1304 = vadd.f32 %v1121, %v1303
        %v1305 = vpop.f32.mrb[0].mxu0
        %1306 = vmatprep.mubr.bf16.mxu0 %v1101
        %1307 = vmatmul.mubr.bf16.gmra.mrb[0].mxu0 %v1100
        %v1308 = vpop.f32.mrb[0].mxu0
        %v1309 = vadd.f32 %v1121, %v1308
        %v1310 = vpop.f32.mrb[0].mxu0
        %v1311 = vpop.f32.mrb[0].mxu0
        %v1312 = vadd.f32 %v1121, %v1311
        %v1313 = vpop.f32.mrb[0].mxu0
        %1314 = vmatprep.mubr.bf16.mxu0 %v1103
        %1315 = vmatmul.mubr.bf16.gmra.mrb[0].mxu0 %v1102
        %v1316 = vpop.f32.mrb[0].mxu0
        %v1317 = vadd.f32 %v1121, %v1316
        %v1318 = vpop.f32.mrb[0].mxu0
        %v1319 = vpop.f32.mrb[0].mxu0
        %v1320 = vadd.f32 %v1121, %v1319
        %v1321 = vpop.f32.mrb[0].mxu0
        %1322 = vmatprep.mubr.bf16.mxu0 %v1105
        %1323 = vmatmul.mubr.bf16.gmra.mrb[0].mxu0 %v1104
        %v1324 = vpop.f32.mrb[0].mxu0
        %v1325 = vadd.f32 %v1121, %v1324
        %v1326 = vpop.f32.mrb[0].mxu0
        %v1327 = vpop.f32.mrb[0].mxu0
        %v1328 = vadd.f32 %v1121, %v1327
        %v1329 = vpop.f32.mrb[0].mxu0
        %1330 = vmatprep.mubr.bf16.mxu0 %v1107
        %1331 = vmatmul.mubr.bf16.gmra.mrb[0].mxu0 %v1106
        %v1332 = vpop.f32.mrb[0].mxu0
        %v1333 = vadd.f32 %v1121, %v1332
        %v1334 = vpop.f32.mrb[0].mxu0
        %v1335 = vpop.f32.mrb[0].mxu0
        %v1336 = vadd.f32 %v1121, %v1335
        %v1337 = vpop.f32.mrb[0].mxu0
        %1338 = vmatprep.mubr.bf16.mxu0 %v1109
        %1339 = vmatmul.mubr.bf16.gmra.mrb[0].mxu0 %v1108
        %v1340 = vpop.f32.mrb[0].mxu0
        %v1341 = vadd.f32 %v1121, %v1340
        %v1342 = vpop.f32.mrb[0].mxu0
        %v1343 = vpop.f32.mrb[0].mxu0
        %v1344 = vadd.f32 %v1121, %v1343
        %v1345 = vpop.f32.mrb[0].mxu0
        %1346 = vmatprep.mubr.bf16.mxu0 %v1111
        %1347 = vmatmul.mubr.bf16.gmra.mrb[0].mxu0 %v1110
        %v1348 = vpop.f32.mrb[0].mxu0
        %v1349 = vadd.f32 %v1121, %v1348
        %v1350 = vpop.f32.mrb[0].mxu0
        %v1351 = vpop.f32.mrb[0].mxu0
        %v1352 = vadd.f32 %v1121, %v1351
        %v1353 = vpop.f32.mrb[0].mxu0
        %1354 = vmatprep.mubr.bf16.mxu0 %v1113
        %1355 = vmatmul.mubr.bf16.gmra.mrb[0].mxu0 %v1112
        %v1356 = vpop.f32.mrb[0].mxu0
        %v1357 = vadd.f32 %v1121, %v1356
        %v1358 = vpop.f32.mrb[0].mxu0
        %v1359 = vpop.f32.mrb[0].mxu0
        %v1360 = vadd.f32 %v1121, %v1359
        %v1361 = vpop.f32.mrb[0].mxu0
        %1362 = vmatprep.mubr.bf16.mxu0 %v1115
        %1363 = vmatmul.mubr.bf16.gmra.mrb[0].mxu0 %v1114
        %v1364 = vpop.f32.mrb[0].mxu0
        %v1365 = vadd.f32 %v1121, %v1364
        %v1366 = vpop.f32.mrb[0].mxu0
        %v1367 = vpop.f32.mrb[0].mxu0
        %v1368 = vadd.f32 %v1121, %v1367
        %v1369 = vpop.f32.mrb[0].mxu0
        %1370 = vmatprep.mubr.bf16.mxu0 %v1117
        %1371 = vmatmul.mubr.bf16.gmra.mrb[0].mxu0 %v1116
        %v1372 = vpop.f32.mrb[0].mxu0
        %v1373 = vadd.f32 %v1121, %v1372
        %v1374 = vpop.f32.mrb[0].mxu0
        %v1375 = vpop.f32.mrb[0].mxu0
        %v1376 = vadd.f32 %v1121, %v1375
        %v1377 = vpop.f32.mrb[0].mxu0
        %1378 = vdwg.mxu0
        %v1379 = vadd.f32 %v416, %v1253
        %v1380 = vadd.f32 %v417, %v1256
        %v1381 = vadd.f32 %v418, %v1261
        %v1382 = vadd.f32 %v419, %v1264
        %v1383 = vadd.f32 %v420, %v1269
        %v1384 = vadd.f32 %v421, %v1272
        %v1385 = vadd.f32 %v422, %v1277
        %v1386 = vadd.f32 %v423, %v1280
        %v1387 = vadd.f32 %v424, %v1285
        %v1388 = vadd.f32 %v425, %v1288
        %v1389 = vadd.f32 %v426, %v1293
        %v1390 = vadd.f32 %v427, %v1296
        %v1391 = vadd.f32 %v428, %v1301
        %v1392 = vadd.f32 %v429, %v1304
        %v1393 = vadd.f32 %v430, %v1309
        %v1394 = vadd.f32 %v431, %v1312
        %v1395 = vadd.f32 %v432, %v1317
        %v1396 = vadd.f32 %v433, %v1320
        %v1397 = vadd.f32 %v434, %v1325
        %v1398 = vadd.f32 %v435, %v1328
        %v1399 = vadd.f32 %v436, %v1333
        %v1400 = vadd.f32 %v437, %v1336
        %v1401 = vadd.f32 %v438, %v1341
        %v1402 = vadd.f32 %v439, %v1344
        %v1403 = vadd.f32 %v440, %v1349
        %v1404 = vadd.f32 %v441, %v1352
        %v1405 = vadd.f32 %v442, %v1357
        %v1406 = vadd.f32 %v443, %v1360
        %v1407 = vadd.f32 %v444, %v1365
        %v1408 = vadd.f32 %v445, %v1368
        %v1409 = vadd.f32 %v446, %v1373
        %v1410 = vadd.f32 %v447, %v1376
        %v1411 = vld [vmem:[#allocation8] sm:$0xff]
        %v1412 = vld [vmem:[#allocation8 + $0x8] sm:$0xff]
        %v1413 = vld [vmem:[#allocation8 + $0x10] sm:$0xff]
        %v1414 = vld [vmem:[#allocation8 + $0x18] sm:$0xff]
        %v1415 = vld [vmem:[#allocation8 + $0x20] sm:$0xff]
        %v1416 = vld [vmem:[#allocation8 + $0x28] sm:$0xff]
        %v1417 = vld [vmem:[#allocation8 + $0x30] sm:$0xff]
        %v1418 = vld [vmem:[#allocation8 + $0x38] sm:$0xff]
        %v1419 = vld [vmem:[#allocation8 + $0x40] sm:$0xff]
        %v1420 = vld [vmem:[#allocation8 + $0x48] sm:$0xff]
        %v1421 = vld [vmem:[#allocation8 + $0x50] sm:$0xff]
        %v1422 = vld [vmem:[#allocation8 + $0x58] sm:$0xff]
        %v1423 = vld [vmem:[#allocation8 + $0x60] sm:$0xff]
        %v1424 = vld [vmem:[#allocation8 + $0x68] sm:$0xff]
        %v1425 = vld [vmem:[#allocation8 + $0x70] sm:$0xff]
        %v1426 = vld [vmem:[#allocation8 + $0x78] sm:$0xff]
        %v1427 = vld [vmem:[%s6] ss:$2 sm:$0x3]
        %v1428 = vld [vmem:[#allocation10] sm:$0xf]
        %v1429 = vld [vmem:[#allocation10 + $0x4] sm:$0xf]
        %v1430 = vld [vmem:[#allocation10 + $0x8] sm:$0xf]
        %v1431 = vld [vmem:[#allocation10 + $0xc] sm:$0xf]
        %v1432 = vld [vmem:[#allocation10 + $0x10] sm:$0xf]
        %v1433 = vld [vmem:[#allocation10 + $0x14] sm:$0xf]
        %v1434 = vld [vmem:[#allocation10 + $0x18] sm:$0xf]
        %v1435 = vld [vmem:[#allocation10 + $0x1c] sm:$0xf]
        %v1436 = vld [vmem:[#allocation10 + $0x20] sm:$0xf]
        %v1437 = vld [vmem:[#allocation10 + $0x24] sm:$0xf]
        %v1438 = vld [vmem:[#allocation10 + $0x28] sm:$0xf]
        %v1439 = vld [vmem:[#allocation10 + $0x2c] sm:$0xf]
        %v1440 = vld [vmem:[#allocation10 + $0x30] sm:$0xf]
        %v1441 = vld [vmem:[#allocation10 + $0x34] sm:$0xf]
        %v1442 = vld [vmem:[#allocation10 + $0x38] sm:$0xf]
        %v1443 = vld [vmem:[#allocation10 + $0x3c] sm:$0xf]
        %v1444 = vld [vmem:[#allocation10 + $0x40] sm:$0xf]
        %v1445 = vld [vmem:[#allocation10 + $0x44] sm:$0xf]
        %v1446 = vld [vmem:[#allocation10 + $0x48] sm:$0xf]
        %v1447 = vld [vmem:[#allocation10 + $0x4c] sm:$0xf]
        %v1448 = vld [vmem:[#allocation10 + $0x50] sm:$0xf]
        %v1449 = vld [vmem:[#allocation10 + $0x54] sm:$0xf]
        %v1450 = vld [vmem:[#allocation10 + $0x58] sm:$0xf]
        %v1451 = vld [vmem:[#allocation10 + $0x5c] sm:$0xf]
        %v1452 = vld [vmem:[#allocation10 + $0x60] sm:$0xf]
        %v1453 = vld [vmem:[#allocation10 + $0x64] sm:$0xf]
        %v1454 = vld [vmem:[#allocation10 + $0x68] sm:$0xf]
        %v1455 = vld [vmem:[#allocation10 + $0x6c] sm:$0xf]
        %v1456 = vld [vmem:[#allocation10 + $0x70] sm:$0xf]
        %v1457 = vld [vmem:[#allocation10 + $0x74] sm:$0xf]
        %v1458 = vld [vmem:[#allocation10 + $0x78] sm:$0xf]
        %v1459 = vld [vmem:[#allocation10 + $0x7c] sm:$0xf]
        %v1460 = vld [vmem:[%s8] sm:$0x1]
        %v1461 = vpack.c.bf16 %v1380, %v1379
        %v1462 = vpack.c.bf16 %v1382, %v1381
        %v1463 = vpack.c.bf16 %v1384, %v1383
        %v1464 = vpack.c.bf16 %v1386, %v1385
        %v1465 = vpack.c.bf16 %v1388, %v1387
        %v1466 = vpack.c.bf16 %v1390, %v1389
        %v1467 = vpack.c.bf16 %v1392, %v1391
        %v1468 = vpack.c.bf16 %v1394, %v1393
        %v1469 = vpack.c.bf16 %v1396, %v1395
        %v1470 = vpack.c.bf16 %v1398, %v1397
        %v1471 = vpack.c.bf16 %v1400, %v1399
        %v1472 = vpack.c.bf16 %v1402, %v1401
        %v1473 = vpack.c.bf16 %v1404, %v1403
        %v1474 = vpack.c.bf16 %v1406, %v1405
        %v1475 = vpack.c.bf16 %v1408, %v1407
        %v1476 = vpack.c.bf16 %v1410, %v1409
        %v1478 = vlaneseq
        %v1479 = vshrl.u32 %v1478, 7
        %v1480 = vsub.s32 0, %v1479
        %v1481 = vrot.slane %v1427, %v1480
        %v1482 = vlaneseq
        %v1483 = vshrl.u32 %v1482, 7
        %v1484 = vsub.s32 1, %v1483
        %v1485 = vrot.slane %v1427, %v1484
        %v1504 = vunpack.c.l.b16 %v1411
        %v1505 = vunpack.c.h.b16 %v1411
        %v1506 = vunpack.c.l.b16 %v1412
        %v1507 = vunpack.c.h.b16 %v1412
        %v1508 = vunpack.c.l.b16 %v1413
        %v1509 = vunpack.c.h.b16 %v1413
        %v1510 = vunpack.c.l.b16 %v1414
        %v1511 = vunpack.c.h.b16 %v1414
        %v1512 = vunpack.c.l.b16 %v1415
        %v1513 = vunpack.c.h.b16 %v1415
        %v1514 = vunpack.c.l.b16 %v1416
        %v1515 = vunpack.c.h.b16 %v1416
        %v1516 = vunpack.c.l.b16 %v1417
        %v1517 = vunpack.c.h.b16 %v1417
        %v1518 = vunpack.c.l.b16 %v1418
        %v1519 = vunpack.c.h.b16 %v1418
        %v1520 = vunpack.c.l.b16 %v1419
        %v1521 = vunpack.c.h.b16 %v1419
        %v1522 = vunpack.c.l.b16 %v1420
        %v1523 = vunpack.c.h.b16 %v1420
        %v1524 = vunpack.c.l.b16 %v1421
        %v1525 = vunpack.c.h.b16 %v1421
        %v1526 = vunpack.c.l.b16 %v1422
        %v1527 = vunpack.c.h.b16 %v1422
        %v1528 = vunpack.c.l.b16 %v1423
        %v1529 = vunpack.c.h.b16 %v1423
        %v1530 = vunpack.c.l.b16 %v1424
        %v1531 = vunpack.c.h.b16 %v1424
        %v1532 = vunpack.c.l.b16 %v1425
        %v1533 = vunpack.c.h.b16 %v1425
        %v1534 = vunpack.c.l.b16 %v1426
        %v1535 = vunpack.c.h.b16 %v1426
        %v1536 = vpack.c.b16 %v1506, %v1504
        %v1537 = vpack.c.b16 %v1507, %v1505
        %v1538 = vpack.c.b16 %v1510, %v1508
        %v1539 = vpack.c.b16 %v1511, %v1509
        %v1540 = vpack.c.b16 %v1514, %v1512
        %v1541 = vpack.c.b16 %v1515, %v1513
        %v1542 = vpack.c.b16 %v1518, %v1516
        %v1543 = vpack.c.b16 %v1519, %v1517
        %v1544 = vpack.c.b16 %v1522, %v1520
        %v1545 = vpack.c.b16 %v1523, %v1521
        %v1546 = vpack.c.b16 %v1526, %v1524
        %v1547 = vpack.c.b16 %v1527, %v1525
        %v1548 = vpack.c.b16 %v1530, %v1528
        %v1549 = vpack.c.b16 %v1531, %v1529
        %v1550 = vpack.c.b16 %v1534, %v1532
        %v1551 = vpack.c.b16 %v1535, %v1533
        %1568 = vmatprep.subr.bf16.mxu0 %v1537
        %1569 = vmatpush1.bf16.msra.mxu0 %v1536
        %1570 = vmatprep.subr.bf16.mxu0 %v1539
        %1571 = vmatpush1.bf16.msra.mxu0 %v1538
        %1572 = vmatprep.subr.bf16.mxu0 %v1541
        %1573 = vmatpush1.bf16.msra.mxu0 %v1540
        %1574 = vmatprep.subr.bf16.mxu0 %v1543
        %1575 = vmatpush1.bf16.msra.mxu0 %v1542
        %1576 = vmatprep.subr.bf16.mxu0 %v1545
        %1577 = vmatpush1.bf16.msra.mxu0 %v1544
        %1578 = vmatprep.subr.bf16.mxu0 %v1547
        %1579 = vmatpush1.bf16.msra.mxu0 %v1546
        %1580 = vmatprep.subr.bf16.mxu0 %v1549
        %1581 = vmatpush1.bf16.msra.mxu0 %v1548
        %1582 = vmatprep.subr.bf16.mxu0 %v1551
        %1583 = vmatpush1.bf16.msra.mxu0 %v1550
        %1584 = vmatprep.subr.bf16.mxu0 0
        %1585 = vmatpush1.bf16.msra.mxu0 0
        %1586 = vmatprep.subr.bf16.mxu0 0
        %1587 = vmatpush1.bf16.msra.mxu0 0
        %1588 = vmatprep.subr.bf16.mxu0 0
        %1589 = vmatpush1.bf16.msra.mxu0 0
        %1590 = vmatprep.subr.bf16.mxu0 0
        %1591 = vmatpush1.bf16.msra.mxu0 0
        %1592 = vmatprep.subr.bf16.mxu0 0
        %1593 = vmatpush1.bf16.msra.mxu0 0
        %1594 = vmatprep.subr.bf16.mxu0 0
        %1595 = vmatpush1.bf16.msra.mxu0 0
        %1596 = vmatprep.subr.bf16.mxu0 0
        %1597 = vmatpush1.bf16.msra.mxu0 0
        %1598 = vmatprep.subr.bf16.mxu0 0
        %1599 = vmatpush1.bf16.msra.mxu0 0
        %1600 = vmatprep.mubr.bf16.mxu0 0
        %1601 = vmatmul.mubr.bf16.gmra.mrb[0].mxu0 %v1461
        %v1602 = vpop.f32.mrb[0].mxu0
        %v1603 = vadd.f32 %v1481, %v1602
        %v1604 = vpop.f32.mrb[0].mxu0
        %v1605 = vadd.f32 %v1485, %v1604
        %v1606 = vpop.f32.mrb[0].mxu0
        %v1607 = vadd.f32 %v1481, %v1606
        %v1608 = vpop.f32.mrb[0].mxu0
        %v1609 = vadd.f32 %v1485, %v1608
        %1610 = vmatprep.mubr.bf16.mxu0 0
        %1611 = vmatmul.mubr.bf16.gmra.mrb[0].mxu0 %v1462
        %v1612 = vpop.f32.mrb[0].mxu0
        %v1613 = vadd.f32 %v1481, %v1612
        %v1614 = vpop.f32.mrb[0].mxu0
        %v1615 = vadd.f32 %v1485, %v1614
        %v1616 = vpop.f32.mrb[0].mxu0
        %v1617 = vadd.f32 %v1481, %v1616
        %v1618 = vpop.f32.mrb[0].mxu0
        %v1619 = vadd.f32 %v1485, %v1618
        %1620 = vmatprep.mubr.bf16.mxu0 0
        %1621 = vmatmul.mubr.bf16.gmra.mrb[0].mxu0 %v1463
        %v1622 = vpop.f32.mrb[0].mxu0
        %v1623 = vadd.f32 %v1481, %v1622
        %v1624 = vpop.f32.mrb[0].mxu0
        %v1625 = vadd.f32 %v1485, %v1624
        %v1626 = vpop.f32.mrb[0].mxu0
        %v1627 = vadd.f32 %v1481, %v1626
        %v1628 = vpop.f32.mrb[0].mxu0
        %v1629 = vadd.f32 %v1485, %v1628
        %1630 = vmatprep.mubr.bf16.mxu0 0
        %1631 = vmatmul.mubr.bf16.gmra.mrb[0].mxu0 %v1464
        %v1632 = vpop.f32.mrb[0].mxu0
        %v1633 = vadd.f32 %v1481, %v1632
        %v1634 = vpop.f32.mrb[0].mxu0
        %v1635 = vadd.f32 %v1485, %v1634
        %v1636 = vpop.f32.mrb[0].mxu0
        %v1637 = vadd.f32 %v1481, %v1636
        %v1638 = vpop.f32.mrb[0].mxu0
        %v1639 = vadd.f32 %v1485, %v1638
        %1640 = vmatprep.mubr.bf16.mxu0 0
        %1641 = vmatmul.mubr.bf16.gmra.mrb[0].mxu0 %v1465
        %v1642 = vpop.f32.mrb[0].mxu0
        %v1643 = vadd.f32 %v1481, %v1642
        %v1644 = vpop.f32.mrb[0].mxu0
        %v1645 = vadd.f32 %v1485, %v1644
        %v1646 = vpop.f32.mrb[0].mxu0
        %v1647 = vadd.f32 %v1481, %v1646
        %v1648 = vpop.f32.mrb[0].mxu0
        %v1649 = vadd.f32 %v1485, %v1648
        %1650 = vmatprep.mubr.bf16.mxu0 0
        %1651 = vmatmul.mubr.bf16.gmra.mrb[0].mxu0 %v1466
        %v1652 = vpop.f32.mrb[0].mxu0
        %v1653 = vadd.f32 %v1481, %v1652
        %v1654 = vpop.f32.mrb[0].mxu0
        %v1655 = vadd.f32 %v1485, %v1654
        %v1656 = vpop.f32.mrb[0].mxu0
        %v1657 = vadd.f32 %v1481, %v1656
        %v1658 = vpop.f32.mrb[0].mxu0
        %v1659 = vadd.f32 %v1485, %v1658
        %1660 = vmatprep.mubr.bf16.mxu0 0
        %1661 = vmatmul.mubr.bf16.gmra.mrb[0].mxu0 %v1467
        %v1662 = vpop.f32.mrb[0].mxu0
        %v1663 = vadd.f32 %v1481, %v1662
        %v1664 = vpop.f32.mrb[0].mxu0
        %v1665 = vadd.f32 %v1485, %v1664
        %v1666 = vpop.f32.mrb[0].mxu0
        %v1667 = vadd.f32 %v1481, %v1666
        %v1668 = vpop.f32.mrb[0].mxu0
        %v1669 = vadd.f32 %v1485, %v1668
        %1670 = vmatprep.mubr.bf16.mxu0 0
        %1671 = vmatmul.mubr.bf16.gmra.mrb[0].mxu0 %v1468
        %v1672 = vpop.f32.mrb[0].mxu0
        %v1673 = vadd.f32 %v1481, %v1672
        %v1674 = vpop.f32.mrb[0].mxu0
        %v1675 = vadd.f32 %v1485, %v1674
        %v1676 = vpop.f32.mrb[0].mxu0
        %v1677 = vadd.f32 %v1481, %v1676
        %v1678 = vpop.f32.mrb[0].mxu0
        %v1679 = vadd.f32 %v1485, %v1678
        %1680 = vmatprep.mubr.bf16.mxu0 0
        %1681 = vmatmul.mubr.bf16.gmra.mrb[0].mxu0 %v1469
        %v1682 = vpop.f32.mrb[0].mxu0
        %v1683 = vadd.f32 %v1481, %v1682
        %v1684 = vpop.f32.mrb[0].mxu0
        %v1685 = vadd.f32 %v1485, %v1684
        %v1686 = vpop.f32.mrb[0].mxu0
        %v1687 = vadd.f32 %v1481, %v1686
        %v1688 = vpop.f32.mrb[0].mxu0
        %v1689 = vadd.f32 %v1485, %v1688
        %1690 = vmatprep.mubr.bf16.mxu0 0
        %1691 = vmatmul.mubr.bf16.gmra.mrb[0].mxu0 %v1470
        %v1692 = vpop.f32.mrb[0].mxu0
        %v1693 = vadd.f32 %v1481, %v1692
        %v1694 = vpop.f32.mrb[0].mxu0
        %v1695 = vadd.f32 %v1485, %v1694
        %v1696 = vpop.f32.mrb[0].mxu0
        %v1697 = vadd.f32 %v1481, %v1696
        %v1698 = vpop.f32.mrb[0].mxu0
        %v1699 = vadd.f32 %v1485, %v1698
        %1700 = vmatprep.mubr.bf16.mxu0 0
        %1701 = vmatmul.mubr.bf16.gmra.mrb[0].mxu0 %v1471
        %v1702 = vpop.f32.mrb[0].mxu0
        %v1703 = vadd.f32 %v1481, %v1702
        %v1704 = vpop.f32.mrb[0].mxu0
        %v1705 = vadd.f32 %v1485, %v1704
        %v1706 = vpop.f32.mrb[0].mxu0
        %v1707 = vadd.f32 %v1481, %v1706
        %v1708 = vpop.f32.mrb[0].mxu0
        %v1709 = vadd.f32 %v1485, %v1708
        %1710 = vmatprep.mubr.bf16.mxu0 0
        %1711 = vmatmul.mubr.bf16.gmra.mrb[0].mxu0 %v1472
        %v1712 = vpop.f32.mrb[0].mxu0
        %v1713 = vadd.f32 %v1481, %v1712
        %v1714 = vpop.f32.mrb[0].mxu0
        %v1715 = vadd.f32 %v1485, %v1714
        %v1716 = vpop.f32.mrb[0].mxu0
        %v1717 = vadd.f32 %v1481, %v1716
        %v1718 = vpop.f32.mrb[0].mxu0
        %v1719 = vadd.f32 %v1485, %v1718
        %1720 = vmatprep.mubr.bf16.mxu0 0
        %1721 = vmatmul.mubr.bf16.gmra.mrb[0].mxu0 %v1473
        %v1722 = vpop.f32.mrb[0].mxu0
        %v1723 = vadd.f32 %v1481, %v1722
        %v1724 = vpop.f32.mrb[0].mxu0
        %v1725 = vadd.f32 %v1485, %v1724
        %v1726 = vpop.f32.mrb[0].mxu0
        %v1727 = vadd.f32 %v1481, %v1726
        %v1728 = vpop.f32.mrb[0].mxu0
        %v1729 = vadd.f32 %v1485, %v1728
        %1730 = vmatprep.mubr.bf16.mxu0 0
        %1731 = vmatmul.mubr.bf16.gmra.mrb[0].mxu0 %v1474
        %v1732 = vpop.f32.mrb[0].mxu0
        %v1733 = vadd.f32 %v1481, %v1732
        %v1734 = vpop.f32.mrb[0].mxu0
        %v1735 = vadd.f32 %v1485, %v1734
        %v1736 = vpop.f32.mrb[0].mxu0
        %v1737 = vadd.f32 %v1481, %v1736
        %v1738 = vpop.f32.mrb[0].mxu0
        %v1739 = vadd.f32 %v1485, %v1738
        %1740 = vmatprep.mubr.bf16.mxu0 0
        %1741 = vmatmul.mubr.bf16.gmra.mrb[0].mxu0 %v1475
        %v1742 = vpop.f32.mrb[0].mxu0
        %v1743 = vadd.f32 %v1481, %v1742
        %v1744 = vpop.f32.mrb[0].mxu0
        %v1745 = vadd.f32 %v1485, %v1744
        %v1746 = vpop.f32.mrb[0].mxu0
        %v1747 = vadd.f32 %v1481, %v1746
        %v1748 = vpop.f32.mrb[0].mxu0
        %v1749 = vadd.f32 %v1485, %v1748
        %1750 = vmatprep.mubr.bf16.mxu0 0
        %1751 = vmatmul.mubr.bf16.gmra.mrb[0].mxu0 %v1476
        %v1752 = vpop.f32.mrb[0].mxu0
        %v1753 = vadd.f32 %v1481, %v1752
        %v1754 = vpop.f32.mrb[0].mxu0
        %v1755 = vadd.f32 %v1485, %v1754
        %v1756 = vpop.f32.mrb[0].mxu0
        %v1757 = vadd.f32 %v1481, %v1756
        %v1758 = vpop.f32.mrb[0].mxu0
        %v1759 = vadd.f32 %v1485, %v1758
        %1760 = vdwg.mxu0
        %v1761 = vpack.c.bf16 %v1607, %v1603
        %v1762 = vpack.c.bf16 %v1609, %v1605
        %v1763 = vpack.c.bf16 %v1617, %v1613
        %v1764 = vpack.c.bf16 %v1619, %v1615
        %v1765 = vpack.c.bf16 %v1627, %v1623
        %v1766 = vpack.c.bf16 %v1629, %v1625
        %v1767 = vpack.c.bf16 %v1637, %v1633
        %v1768 = vpack.c.bf16 %v1639, %v1635
        %v1769 = vpack.c.bf16 %v1647, %v1643
        %v1770 = vpack.c.bf16 %v1649, %v1645
        %v1771 = vpack.c.bf16 %v1657, %v1653
        %v1772 = vpack.c.bf16 %v1659, %v1655
        %v1773 = vpack.c.bf16 %v1667, %v1663
        %v1774 = vpack.c.bf16 %v1669, %v1665
        %v1775 = vpack.c.bf16 %v1677, %v1673
        %v1776 = vpack.c.bf16 %v1679, %v1675
        %v1777 = vpack.c.bf16 %v1687, %v1683
        %v1778 = vpack.c.bf16 %v1689, %v1685
        %v1779 = vpack.c.bf16 %v1697, %v1693
        %v1780 = vpack.c.bf16 %v1699, %v1695
        %v1781 = vpack.c.bf16 %v1707, %v1703
        %v1782 = vpack.c.bf16 %v1709, %v1705
        %v1783 = vpack.c.bf16 %v1717, %v1713
        %v1784 = vpack.c.bf16 %v1719, %v1715
        %v1785 = vpack.c.bf16 %v1727, %v1723
        %v1786 = vpack.c.bf16 %v1729, %v1725
        %v1787 = vpack.c.bf16 %v1737, %v1733
        %v1788 = vpack.c.bf16 %v1739, %v1735
        %v1789 = vpack.c.bf16 %v1747, %v1743
        %v1790 = vpack.c.bf16 %v1749, %v1745
        %v1791 = vpack.c.bf16 %v1757, %v1753
        %v1792 = vpack.c.bf16 %v1759, %v1755
        %v1793 = vmul.bf16 %v1761, %v1761
        %v1794 = vmul.bf16 %v1762, %v1762
        %v1795 = vmul.bf16 %v1763, %v1763
        %v1796 = vmul.bf16 %v1764, %v1764
        %v1797 = vmul.bf16 %v1765, %v1765
        %v1798 = vmul.bf16 %v1766, %v1766
        %v1799 = vmul.bf16 %v1767, %v1767
        %v1800 = vmul.bf16 %v1768, %v1768
        %v1801 = vmul.bf16 %v1769, %v1769
        %v1802 = vmul.bf16 %v1770, %v1770
        %v1803 = vmul.bf16 %v1771, %v1771
        %v1804 = vmul.bf16 %v1772, %v1772
        %v1805 = vmul.bf16 %v1773, %v1773
        %v1806 = vmul.bf16 %v1774, %v1774
        %v1807 = vmul.bf16 %v1775, %v1775
        %v1808 = vmul.bf16 %v1776, %v1776
        %v1809 = vmul.bf16 %v1777, %v1777
        %v1810 = vmul.bf16 %v1778, %v1778
        %v1811 = vmul.bf16 %v1779, %v1779
        %v1812 = vmul.bf16 %v1780, %v1780
        %v1813 = vmul.bf16 %v1781, %v1781
        %v1814 = vmul.bf16 %v1782, %v1782
        %v1815 = vmul.bf16 %v1783, %v1783
        %v1816 = vmul.bf16 %v1784, %v1784
        %v1817 = vmul.bf16 %v1785, %v1785
        %v1818 = vmul.bf16 %v1786, %v1786
        %v1819 = vmul.bf16 %v1787, %v1787
        %v1820 = vmul.bf16 %v1788, %v1788
        %v1821 = vmul.bf16 %v1789, %v1789
        %v1822 = vmul.bf16 %v1790, %v1790
        %v1823 = vmul.bf16 %v1791, %v1791
        %v1824 = vmul.bf16 %v1792, %v1792
        %v1825 = vmul.bf16 %v1761, %v1793
        %v1826 = vmul.bf16 %v1762, %v1794
        %v1827 = vmul.bf16 %v1763, %v1795
        %v1828 = vmul.bf16 %v1764, %v1796
        %v1829 = vmul.bf16 %v1765, %v1797
        %v1830 = vmul.bf16 %v1766, %v1798
        %v1831 = vmul.bf16 %v1767, %v1799
        %v1832 = vmul.bf16 %v1768, %v1800
        %v1833 = vmul.bf16 %v1769, %v1801
        %v1834 = vmul.bf16 %v1770, %v1802
        %v1835 = vmul.bf16 %v1771, %v1803
        %v1836 = vmul.bf16 %v1772, %v1804
        %v1837 = vmul.bf16 %v1773, %v1805
        %v1838 = vmul.bf16 %v1774, %v1806
        %v1839 = vmul.bf16 %v1775, %v1807
        %v1840 = vmul.bf16 %v1776, %v1808
        %v1841 = vmul.bf16 %v1777, %v1809
        %v1842 = vmul.bf16 %v1778, %v1810
        %v1843 = vmul.bf16 %v1779, %v1811
        %v1844 = vmul.bf16 %v1780, %v1812
        %v1845 = vmul.bf16 %v1781, %v1813
        %v1846 = vmul.bf16 %v1782, %v1814
        %v1847 = vmul.bf16 %v1783, %v1815
        %v1848 = vmul.bf16 %v1784, %v1816
        %v1849 = vmul.bf16 %v1785, %v1817
        %v1850 = vmul.bf16 %v1786, %v1818
        %v1851 = vmul.bf16 %v1787, %v1819
        %v1852 = vmul.bf16 %v1788, %v1820
        %v1853 = vmul.bf16 %v1789, %v1821
        %v1854 = vmul.bf16 %v1790, %v1822
        %v1855 = vmul.bf16 %v1791, %v1823
        %v1856 = vmul.bf16 %v1792, %v1824
        %v1857 = vmul.bf16 %v1825, 1027030327
        %v1858 = vmul.bf16 %v1826, 1027030327
        %v1859 = vmul.bf16 %v1827, 1027030327
        %v1860 = vmul.bf16 %v1828, 1027030327
        %v1861 = vmul.bf16 %v1829, 1027030327
        %v1862 = vmul.bf16 %v1830, 1027030327
        %v1863 = vmul.bf16 %v1831, 1027030327
        %v1864 = vmul.bf16 %v1832, 1027030327
        %v1865 = vmul.bf16 %v1833, 1027030327
        %v1866 = vmul.bf16 %v1834, 1027030327
        %v1867 = vmul.bf16 %v1835, 1027030327
        %v1868 = vmul.bf16 %v1836, 1027030327
        %v1869 = vmul.bf16 %v1837, 1027030327
        %v1870 = vmul.bf16 %v1838, 1027030327
        %v1871 = vmul.bf16 %v1839, 1027030327
        %v1872 = vmul.bf16 %v1840, 1027030327
        %v1873 = vmul.bf16 %v1841, 1027030327
        %v1874 = vmul.bf16 %v1842, 1027030327
        %v1875 = vmul.bf16 %v1843, 1027030327
        %v1876 = vmul.bf16 %v1844, 1027030327
        %v1877 = vmul.bf16 %v1845, 1027030327
        %v1878 = vmul.bf16 %v1846, 1027030327
        %v1879 = vmul.bf16 %v1847, 1027030327
        %v1880 = vmul.bf16 %v1848, 1027030327
        %v1881 = vmul.bf16 %v1849, 1027030327
        %v1882 = vmul.bf16 %v1850, 1027030327
        %v1883 = vmul.bf16 %v1851, 1027030327
        %v1884 = vmul.bf16 %v1852, 1027030327
        %v1885 = vmul.bf16 %v1853, 1027030327
        %v1886 = vmul.bf16 %v1854, 1027030327
        %v1887 = vmul.bf16 %v1855, 1027030327
        %v1888 = vmul.bf16 %v1856, 1027030327
        %v1889 = vadd.bf16 %v1761, %v1857
        %v1890 = vadd.bf16 %v1762, %v1858
        %v1891 = vadd.bf16 %v1763, %v1859
        %v1892 = vadd.bf16 %v1764, %v1860
        %v1893 = vadd.bf16 %v1765, %v1861
        %v1894 = vadd.bf16 %v1766, %v1862
        %v1895 = vadd.bf16 %v1767, %v1863
        %v1896 = vadd.bf16 %v1768, %v1864
        %v1897 = vadd.bf16 %v1769, %v1865
        %v1898 = vadd.bf16 %v1770, %v1866
        %v1899 = vadd.bf16 %v1771, %v1867
        %v1900 = vadd.bf16 %v1772, %v1868
        %v1901 = vadd.bf16 %v1773, %v1869
        %v1902 = vadd.bf16 %v1774, %v1870
        %v1903 = vadd.bf16 %v1775, %v1871
        %v1904 = vadd.bf16 %v1776, %v1872
        %v1905 = vadd.bf16 %v1777, %v1873
        %v1906 = vadd.bf16 %v1778, %v1874
        %v1907 = vadd.bf16 %v1779, %v1875
        %v1908 = vadd.bf16 %v1780, %v1876
        %v1909 = vadd.bf16 %v1781, %v1877
        %v1910 = vadd.bf16 %v1782, %v1878
        %v1911 = vadd.bf16 %v1783, %v1879
        %v1912 = vadd.bf16 %v1784, %v1880
        %v1913 = vadd.bf16 %v1785, %v1881
        %v1914 = vadd.bf16 %v1786, %v1882
        %v1915 = vadd.bf16 %v1787, %v1883
        %v1916 = vadd.bf16 %v1788, %v1884
        %v1917 = vadd.bf16 %v1789, %v1885
        %v1918 = vadd.bf16 %v1790, %v1886
        %v1919 = vadd.bf16 %v1791, %v1887
        %v1920 = vadd.bf16 %v1792, %v1888
        %v1921 = vmul.bf16 %v1889, 1061961548
        %v1922 = vmul.bf16 %v1890, 1061961548
        %v1923 = vmul.bf16 %v1891, 1061961548
        %v1924 = vmul.bf16 %v1892, 1061961548
        %v1925 = vmul.bf16 %v1893, 1061961548
        %v1926 = vmul.bf16 %v1894, 1061961548
        %v1927 = vmul.bf16 %v1895, 1061961548
        %v1928 = vmul.bf16 %v1896, 1061961548
        %v1929 = vmul.bf16 %v1897, 1061961548
        %v1930 = vmul.bf16 %v1898, 1061961548
        %v1931 = vmul.bf16 %v1899, 1061961548
        %v1932 = vmul.bf16 %v1900, 1061961548
        %v1933 = vmul.bf16 %v1901, 1061961548
        %v1934 = vmul.bf16 %v1902, 1061961548
        %v1935 = vmul.bf16 %v1903, 1061961548
        %v1936 = vmul.bf16 %v1904, 1061961548
        %v1937 = vmul.bf16 %v1905, 1061961548
        %v1938 = vmul.bf16 %v1906, 1061961548
        %v1939 = vmul.bf16 %v1907, 1061961548
        %v1940 = vmul.bf16 %v1908, 1061961548
        %v1941 = vmul.bf16 %v1909, 1061961548
        %v1942 = vmul.bf16 %v1910, 1061961548
        %v1943 = vmul.bf16 %v1911, 1061961548
        %v1944 = vmul.bf16 %v1912, 1061961548
        %v1945 = vmul.bf16 %v1913, 1061961548
        %v1946 = vmul.bf16 %v1914, 1061961548
        %v1947 = vmul.bf16 %v1915, 1061961548
        %v1948 = vmul.bf16 %v1916, 1061961548
        %v1949 = vmul.bf16 %v1917, 1061961548
        %v1950 = vmul.bf16 %v1918, 1061961548
        %v1951 = vmul.bf16 %v1919, 1061961548
        %v1952 = vmul.bf16 %v1920, 1061961548
        %v1953 = vtanh.bf16.pop %v1921
        %v1954 = vtanh.bf16.pop %v1922
        %v1955 = vtanh.bf16.pop %v1923
        %v1956 = vtanh.bf16.pop %v1924
        %v1957 = vtanh.bf16.pop %v1925
        %v1958 = vtanh.bf16.pop %v1926
        %v1959 = vtanh.bf16.pop %v1927
        %v1960 = vtanh.bf16.pop %v1928
        %v1961 = vtanh.bf16.pop %v1929
        %v1962 = vtanh.bf16.pop %v1930
        %v1963 = vtanh.bf16.pop %v1931
        %v1964 = vtanh.bf16.pop %v1932
        %v1965 = vtanh.bf16.pop %v1933
        %v1966 = vtanh.bf16.pop %v1934
        %v1967 = vtanh.bf16.pop %v1935
        %v1968 = vtanh.bf16.pop %v1936
        %v1969 = vtanh.bf16.pop %v1937
        %v1970 = vtanh.bf16.pop %v1938
        %v1971 = vtanh.bf16.pop %v1939
        %v1972 = vtanh.bf16.pop %v1940
        %v1973 = vtanh.bf16.pop %v1941
        %v1974 = vtanh.bf16.pop %v1942
        %v1975 = vtanh.bf16.pop %v1943
        %v1976 = vtanh.bf16.pop %v1944
        %v1977 = vtanh.bf16.pop %v1945
        %v1978 = vtanh.bf16.pop %v1946
        %v1979 = vtanh.bf16.pop %v1947
        %v1980 = vtanh.bf16.pop %v1948
        %v1981 = vtanh.bf16.pop %v1949
        %v1982 = vtanh.bf16.pop %v1950
        %v1983 = vtanh.bf16.pop %v1951
        %v1984 = vtanh.bf16.pop %v1952
        %v1985 = vadd.bf16 %v1953, 1065369472
        %v1986 = vadd.bf16 %v1954, 1065369472
        %v1987 = vadd.bf16 %v1955, 1065369472
        %v1988 = vadd.bf16 %v1956, 1065369472
        %v1989 = vadd.bf16 %v1957, 1065369472
        %v1990 = vadd.bf16 %v1958, 1065369472
        %v1991 = vadd.bf16 %v1959, 1065369472
        %v1992 = vadd.bf16 %v1960, 1065369472
        %v1993 = vadd.bf16 %v1961, 1065369472
        %v1994 = vadd.bf16 %v1962, 1065369472
        %v1995 = vadd.bf16 %v1963, 1065369472
        %v1996 = vadd.bf16 %v1964, 1065369472
        %v1997 = vadd.bf16 %v1965, 1065369472
        %v1998 = vadd.bf16 %v1966, 1065369472
        %v1999 = vadd.bf16 %v1967, 1065369472
        %v2000 = vadd.bf16 %v1968, 1065369472
        %v2001 = vadd.bf16 %v1969, 1065369472
        %v2002 = vadd.bf16 %v1970, 1065369472
        %v2003 = vadd.bf16 %v1971, 1065369472
        %v2004 = vadd.bf16 %v1972, 1065369472
        %v2005 = vadd.bf16 %v1973, 1065369472
        %v2006 = vadd.bf16 %v1974, 1065369472
        %v2007 = vadd.bf16 %v1975, 1065369472
        %v2008 = vadd.bf16 %v1976, 1065369472
        %v2009 = vadd.bf16 %v1977, 1065369472
        %v2010 = vadd.bf16 %v1978, 1065369472
        %v2011 = vadd.bf16 %v1979, 1065369472
        %v2012 = vadd.bf16 %v1980, 1065369472
        %v2013 = vadd.bf16 %v1981, 1065369472
        %v2014 = vadd.bf16 %v1982, 1065369472
        %v2015 = vadd.bf16 %v1983, 1065369472
        %v2016 = vadd.bf16 %v1984, 1065369472
        %v2017 = vmul.bf16 %v1985, 1056980736
        %v2018 = vmul.bf16 %v1986, 1056980736
        %v2019 = vmul.bf16 %v1987, 1056980736
        %v2020 = vmul.bf16 %v1988, 1056980736
        %v2021 = vmul.bf16 %v1989, 1056980736
        %v2022 = vmul.bf16 %v1990, 1056980736
        %v2023 = vmul.bf16 %v1991, 1056980736
        %v2024 = vmul.bf16 %v1992, 1056980736
        %v2025 = vmul.bf16 %v1993, 1056980736
        %v2026 = vmul.bf16 %v1994, 1056980736
        %v2027 = vmul.bf16 %v1995, 1056980736
        %v2028 = vmul.bf16 %v1996, 1056980736
        %v2029 = vmul.bf16 %v1997, 1056980736
        %v2030 = vmul.bf16 %v1998, 1056980736
        %v2031 = vmul.bf16 %v1999, 1056980736
        %v2032 = vmul.bf16 %v2000, 1056980736
        %v2033 = vmul.bf16 %v2001, 1056980736
        %v2034 = vmul.bf16 %v2002, 1056980736
        %v2035 = vmul.bf16 %v2003, 1056980736
        %v2036 = vmul.bf16 %v2004, 1056980736
        %v2037 = vmul.bf16 %v2005, 1056980736
        %v2038 = vmul.bf16 %v2006, 1056980736
        %v2039 = vmul.bf16 %v2007, 1056980736
        %v2040 = vmul.bf16 %v2008, 1056980736
        %v2041 = vmul.bf16 %v2009, 1056980736
        %v2042 = vmul.bf16 %v2010, 1056980736
        %v2043 = vmul.bf16 %v2011, 1056980736
        %v2044 = vmul.bf16 %v2012, 1056980736
        %v2045 = vmul.bf16 %v2013, 1056980736
        %v2046 = vmul.bf16 %v2014, 1056980736
        %v2047 = vmul.bf16 %v2015, 1056980736
        %v2048 = vmul.bf16 %v2016, 1056980736
        %v2049 = vmul.bf16 %v1761, %v2017
        %v2050 = vmul.bf16 %v1762, %v2018
        %v2051 = vmul.bf16 %v1763, %v2019
        %v2052 = vmul.bf16 %v1764, %v2020
        %v2053 = vmul.bf16 %v1765, %v2021
        %v2054 = vmul.bf16 %v1766, %v2022
        %v2055 = vmul.bf16 %v1767, %v2023
        %v2056 = vmul.bf16 %v1768, %v2024
        %v2057 = vmul.bf16 %v1769, %v2025
        %v2058 = vmul.bf16 %v1770, %v2026
        %v2059 = vmul.bf16 %v1771, %v2027
        %v2060 = vmul.bf16 %v1772, %v2028
        %v2061 = vmul.bf16 %v1773, %v2029
        %v2062 = vmul.bf16 %v1774, %v2030
        %v2063 = vmul.bf16 %v1775, %v2031
        %v2064 = vmul.bf16 %v1776, %v2032
        %v2065 = vmul.bf16 %v1777, %v2033
        %v2066 = vmul.bf16 %v1778, %v2034
        %v2067 = vmul.bf16 %v1779, %v2035
        %v2068 = vmul.bf16 %v1780, %v2036
        %v2069 = vmul.bf16 %v1781, %v2037
        %v2070 = vmul.bf16 %v1782, %v2038
        %v2071 = vmul.bf16 %v1783, %v2039
        %v2072 = vmul.bf16 %v1784, %v2040
        %v2073 = vmul.bf16 %v1785, %v2041
        %v2074 = vmul.bf16 %v1786, %v2042
        %v2075 = vmul.bf16 %v1787, %v2043
        %v2076 = vmul.bf16 %v1788, %v2044
        %v2077 = vmul.bf16 %v1789, %v2045
        %v2078 = vmul.bf16 %v1790, %v2046
        %v2079 = vmul.bf16 %v1791, %v2047
        %v2080 = vmul.bf16 %v1792, %v2048
        %v2081 = vlaneseq
        %v2082 = vshrl.u32 %v2081, 7
        %v2083 = vsub.s32 0, %v2082
        %v2084 = vrot.slane %v1460, %v2083
        %v2117 = vunpack.c.l.b16 %v1428
        %v2118 = vunpack.c.l.b16 %v1429
        %v2119 = vunpack.c.l.b16 %v1430
        %v2120 = vunpack.c.l.b16 %v1431
        %v2121 = vunpack.c.l.b16 %v1432
        %v2122 = vunpack.c.l.b16 %v1433
        %v2123 = vunpack.c.l.b16 %v1434
        %v2124 = vunpack.c.l.b16 %v1435
        %v2125 = vunpack.c.l.b16 %v1436
        %v2126 = vunpack.c.l.b16 %v1437
        %v2127 = vunpack.c.l.b16 %v1438
        %v2128 = vunpack.c.l.b16 %v1439
        %v2129 = vunpack.c.l.b16 %v1440
        %v2130 = vunpack.c.l.b16 %v1441
        %v2131 = vunpack.c.l.b16 %v1442
        %v2132 = vunpack.c.l.b16 %v1443
        %v2133 = vunpack.c.l.b16 %v1444
        %v2134 = vunpack.c.l.b16 %v1445
        %v2135 = vunpack.c.l.b16 %v1446
        %v2136 = vunpack.c.l.b16 %v1447
        %v2137 = vunpack.c.l.b16 %v1448
        %v2138 = vunpack.c.l.b16 %v1449
        %v2139 = vunpack.c.l.b16 %v1450
        %v2140 = vunpack.c.l.b16 %v1451
        %v2141 = vunpack.c.l.b16 %v1452
        %v2142 = vunpack.c.l.b16 %v1453
        %v2143 = vunpack.c.l.b16 %v1454
        %v2144 = vunpack.c.l.b16 %v1455
        %v2145 = vunpack.c.l.b16 %v1456
        %v2146 = vunpack.c.l.b16 %v1457
        %v2147 = vunpack.c.l.b16 %v1458
        %v2148 = vunpack.c.l.b16 %v1459
        %v2149 = vpack.c.b16 %v2118, %v2117
        %v2150 = vpack.c.b16 %v2120, %v2119
        %v2151 = vpack.c.b16 %v2122, %v2121
        %v2152 = vpack.c.b16 %v2124, %v2123
        %v2153 = vpack.c.b16 %v2126, %v2125
        %v2154 = vpack.c.b16 %v2128, %v2127
        %v2155 = vpack.c.b16 %v2130, %v2129
        %v2156 = vpack.c.b16 %v2132, %v2131
        %v2157 = vpack.c.b16 %v2134, %v2133
        %v2158 = vpack.c.b16 %v2136, %v2135
        %v2159 = vpack.c.b16 %v2138, %v2137
        %v2160 = vpack.c.b16 %v2140, %v2139
        %v2161 = vpack.c.b16 %v2142, %v2141
        %v2162 = vpack.c.b16 %v2144, %v2143
        %v2163 = vpack.c.b16 %v2146, %v2145
        %v2164 = vpack.c.b16 %v2148, %v2147
        %2181 = vmatprep.subr.bf16.mxu0 0
        %2182 = vmatpush1.bf16.msra.mxu0 %v2149
        %2183 = vmatprep.subr.bf16.mxu0 0
        %2184 = vmatpush1.bf16.msra.mxu0 %v2150
        %2185 = vmatprep.subr.bf16.mxu0 0
        %2186 = vmatpush1.bf16.msra.mxu0 %v2151
        %2187 = vmatprep.subr.bf16.mxu0 0
        %2188 = vmatpush1.bf16.msra.mxu0 %v2152
        %2189 = vmatprep.subr.bf16.mxu0 0
        %2190 = vmatpush1.bf16.msra.mxu0 %v2153
        %2191 = vmatprep.subr.bf16.mxu0 0
        %2192 = vmatpush1.bf16.msra.mxu0 %v2154
        %2193 = vmatprep.subr.bf16.mxu0 0
        %2194 = vmatpush1.bf16.msra.mxu0 %v2155
        %2195 = vmatprep.subr.bf16.mxu0 0
        %2196 = vmatpush1.bf16.msra.mxu0 %v2156
        %2197 = vmatprep.subr.bf16.mxu0 0
        %2198 = vmatpush1.bf16.msra.mxu0 %v2157
        %2199 = vmatprep.subr.bf16.mxu0 0
        %2200 = vmatpush1.bf16.msra.mxu0 %v2158
        %2201 = vmatprep.subr.bf16.mxu0 0
        %2202 = vmatpush1.bf16.msra.mxu0 %v2159
        %2203 = vmatprep.subr.bf16.mxu0 0
        %2204 = vmatpush1.bf16.msra.mxu0 %v2160
        %2205 = vmatprep.subr.bf16.mxu0 0
        %2206 = vmatpush1.bf16.msra.mxu0 %v2161
        %2207 = vmatprep.subr.bf16.mxu0 0
        %2208 = vmatpush1.bf16.msra.mxu0 %v2162
        %2209 = vmatprep.subr.bf16.mxu0 0
        %2210 = vmatpush1.bf16.msra.mxu0 %v2163
        %2211 = vmatprep.subr.bf16.mxu0 0
        %2212 = vmatpush1.bf16.msra.mxu0 %v2164
        %2213 = vmatprep.mubr.bf16.mxu0 %v2050
        %2214 = vmatmul.mubr.bf16.gmra.mrb[0].mxu0 %v2049
        %v2215 = vpop.f32.mrb[0].mxu0
        %v2216 = vadd.f32 %v2084, %v2215
        %v2217 = vpop.f32.mrb[0].mxu0
        %v2218 = vpop.f32.mrb[0].mxu0
        %v2219 = vadd.f32 %v2084, %v2218
        %v2220 = vpop.f32.mrb[0].mxu0
        %2221 = vmatprep.mubr.bf16.mxu0 %v2052
        %2222 = vmatmul.mubr.bf16.gmra.mrb[0].mxu0 %v2051
        %v2223 = vpop.f32.mrb[0].mxu0
        %v2224 = vadd.f32 %v2084, %v2223
        %v2225 = vpop.f32.mrb[0].mxu0
        %v2226 = vpop.f32.mrb[0].mxu0
        %v2227 = vadd.f32 %v2084, %v2226
        %v2228 = vpop.f32.mrb[0].mxu0
        %2229 = vmatprep.mubr.bf16.mxu0 %v2054
        %2230 = vmatmul.mubr.bf16.gmra.mrb[0].mxu0 %v2053
        %v2231 = vpop.f32.mrb[0].mxu0
        %v2232 = vadd.f32 %v2084, %v2231
        %v2233 = vpop.f32.mrb[0].mxu0
        %v2234 = vpop.f32.mrb[0].mxu0
        %v2235 = vadd.f32 %v2084, %v2234
        %v2236 = vpop.f32.mrb[0].mxu0
        %2237 = vmatprep.mubr.bf16.mxu0 %v2056
        %2238 = vmatmul.mubr.bf16.gmra.mrb[0].mxu0 %v2055
        %v2239 = vpop.f32.mrb[0].mxu0
        %v2240 = vadd.f32 %v2084, %v2239
        %v2241 = vpop.f32.mrb[0].mxu0
        %v2242 = vpop.f32.mrb[0].mxu0
        %v2243 = vadd.f32 %v2084, %v2242
        %v2244 = vpop.f32.mrb[0].mxu0
        %2245 = vmatprep.mubr.bf16.mxu0 %v2058
        %2246 = vmatmul.mubr.bf16.gmra.mrb[0].mxu0 %v2057
        %v2247 = vpop.f32.mrb[0].mxu0
        %v2248 = vadd.f32 %v2084, %v2247
        %v2249 = vpop.f32.mrb[0].mxu0
        %v2250 = vpop.f32.mrb[0].mxu0
        %v2251 = vadd.f32 %v2084, %v2250
        %v2252 = vpop.f32.mrb[0].mxu0
        %2253 = vmatprep.mubr.bf16.mxu0 %v2060
        %2254 = vmatmul.mubr.bf16.gmra.mrb[0].mxu0 %v2059
        %v2255 = vpop.f32.mrb[0].mxu0
        %v2256 = vadd.f32 %v2084, %v2255
        %v2257 = vpop.f32.mrb[0].mxu0
        %v2258 = vpop.f32.mrb[0].mxu0
        %v2259 = vadd.f32 %v2084, %v2258
        %v2260 = vpop.f32.mrb[0].mxu0
        %2261 = vmatprep.mubr.bf16.mxu0 %v2062
        %2262 = vmatmul.mubr.bf16.gmra.mrb[0].mxu0 %v2061
        %v2263 = vpop.f32.mrb[0].mxu0
        %v2264 = vadd.f32 %v2084, %v2263
        %v2265 = vpop.f32.mrb[0].mxu0
        %v2266 = vpop.f32.mrb[0].mxu0
        %v2267 = vadd.f32 %v2084, %v2266
        %v2268 = vpop.f32.mrb[0].mxu0
        %2269 = vmatprep.mubr.bf16.mxu0 %v2064
        %2270 = vmatmul.mubr.bf16.gmra.mrb[0].mxu0 %v2063
        %v2271 = vpop.f32.mrb[0].mxu0
        %v2272 = vadd.f32 %v2084, %v2271
        %v2273 = vpop.f32.mrb[0].mxu0
        %v2274 = vpop.f32.mrb[0].mxu0
        %v2275 = vadd.f32 %v2084, %v2274
        %v2276 = vpop.f32.mrb[0].mxu0
        %2277 = vmatprep.mubr.bf16.mxu0 %v2066
        %2278 = vmatmul.mubr.bf16.gmra.mrb[0].mxu0 %v2065
        %v2279 = vpop.f32.mrb[0].mxu0
        %v2280 = vadd.f32 %v2084, %v2279
        %v2281 = vpop.f32.mrb[0].mxu0
        %v2282 = vpop.f32.mrb[0].mxu0
        %v2283 = vadd.f32 %v2084, %v2282
        %v2284 = vpop.f32.mrb[0].mxu0
        %2285 = vmatprep.mubr.bf16.mxu0 %v2068
        %2286 = vmatmul.mubr.bf16.gmra.mrb[0].mxu0 %v2067
        %v2287 = vpop.f32.mrb[0].mxu0
        %v2288 = vadd.f32 %v2084, %v2287
        %v2289 = vpop.f32.mrb[0].mxu0
        %v2290 = vpop.f32.mrb[0].mxu0
        %v2291 = vadd.f32 %v2084, %v2290
        %v2292 = vpop.f32.mrb[0].mxu0
        %2293 = vmatprep.mubr.bf16.mxu0 %v2070
        %2294 = vmatmul.mubr.bf16.gmra.mrb[0].mxu0 %v2069
        %v2295 = vpop.f32.mrb[0].mxu0
        %v2296 = vadd.f32 %v2084, %v2295
        %v2297 = vpop.f32.mrb[0].mxu0
        %v2298 = vpop.f32.mrb[0].mxu0
        %v2299 = vadd.f32 %v2084, %v2298
        %v2300 = vpop.f32.mrb[0].mxu0
        %2301 = vmatprep.mubr.bf16.mxu0 %v2072
        %2302 = vmatmul.mubr.bf16.gmra.mrb[0].mxu0 %v2071
        %v2303 = vpop.f32.mrb[0].mxu0
        %v2304 = vadd.f32 %v2084, %v2303
        %v2305 = vpop.f32.mrb[0].mxu0
        %v2306 = vpop.f32.mrb[0].mxu0
        %v2307 = vadd.f32 %v2084, %v2306
        %v2308 = vpop.f32.mrb[0].mxu0
        %2309 = vmatprep.mubr.bf16.mxu0 %v2074
        %2310 = vmatmul.mubr.bf16.gmra.mrb[0].mxu0 %v2073
        %v2311 = vpop.f32.mrb[0].mxu0
        %v2312 = vadd.f32 %v2084, %v2311
        %v2313 = vpop.f32.mrb[0].mxu0
        %v2314 = vpop.f32.mrb[0].mxu0
        %v2315 = vadd.f32 %v2084, %v2314
        %v2316 = vpop.f32.mrb[0].mxu0
        %2317 = vmatprep.mubr.bf16.mxu0 %v2076
        %2318 = vmatmul.mubr.bf16.gmra.mrb[0].mxu0 %v2075
        %v2319 = vpop.f32.mrb[0].mxu0
        %v2320 = vadd.f32 %v2084, %v2319
        %v2321 = vpop.f32.mrb[0].mxu0
        %v2322 = vpop.f32.mrb[0].mxu0
        %v2323 = vadd.f32 %v2084, %v2322
        %v2324 = vpop.f32.mrb[0].mxu0
        %2325 = vmatprep.mubr.bf16.mxu0 %v2078
        %2326 = vmatmul.mubr.bf16.gmra.mrb[0].mxu0 %v2077
        %v2327 = vpop.f32.mrb[0].mxu0
        %v2328 = vadd.f32 %v2084, %v2327
        %v2329 = vpop.f32.mrb[0].mxu0
        %v2330 = vpop.f32.mrb[0].mxu0
        %v2331 = vadd.f32 %v2084, %v2330
        %v2332 = vpop.f32.mrb[0].mxu0
        %2333 = vmatprep.mubr.bf16.mxu0 %v2080
        %2334 = vmatmul.mubr.bf16.gmra.mrb[0].mxu0 %v2079
        %v2335 = vpop.f32.mrb[0].mxu0
        %v2336 = vadd.f32 %v2084, %v2335
        %v2337 = vpop.f32.mrb[0].mxu0
        %v2338 = vpop.f32.mrb[0].mxu0
        %v2339 = vadd.f32 %v2084, %v2338
        %v2340 = vpop.f32.mrb[0].mxu0
        %2341 = vdwg.mxu0
        %v2342 = vadd.f32 %v416, %v2216
        %v2343 = vadd.f32 %v417, %v2219
        %v2344 = vadd.f32 %v418, %v2224
        %v2345 = vadd.f32 %v419, %v2227
        %v2346 = vadd.f32 %v420, %v2232
        %v2347 = vadd.f32 %v421, %v2235
        %v2348 = vadd.f32 %v422, %v2240
        %v2349 = vadd.f32 %v423, %v2243
        %v2350 = vadd.f32 %v424, %v2248
        %v2351 = vadd.f32 %v425, %v2251
        %v2352 = vadd.f32 %v426, %v2256
        %v2353 = vadd.f32 %v427, %v2259
        %v2354 = vadd.f32 %v428, %v2264
        %v2355 = vadd.f32 %v429, %v2267
        %v2356 = vadd.f32 %v430, %v2272
        %v2357 = vadd.f32 %v431, %v2275
        %v2358 = vadd.f32 %v432, %v2280
        %v2359 = vadd.f32 %v433, %v2283
        %v2360 = vadd.f32 %v434, %v2288
        %v2361 = vadd.f32 %v435, %v2291
        %v2362 = vadd.f32 %v436, %v2296
        %v2363 = vadd.f32 %v437, %v2299
        %v2364 = vadd.f32 %v438, %v2304
        %v2365 = vadd.f32 %v439, %v2307
        %v2366 = vadd.f32 %v440, %v2312
        %v2367 = vadd.f32 %v441, %v2315
        %v2368 = vadd.f32 %v442, %v2320
        %v2369 = vadd.f32 %v443, %v2323
        %v2370 = vadd.f32 %v444, %v2328
        %v2371 = vadd.f32 %v445, %v2331
        %v2372 = vadd.f32 %v446, %v2336
        %v2373 = vadd.f32 %v447, %v2339
        %s2374 = scalar_lea.vmem [#allocation5], 128
        %v2375 = vld [vmem:[%s2374] sm:$0xff]
        %v2376 = vld [vmem:[%s2374 + $0x8] sm:$0xff]
        %v2377 = vld [vmem:[%s2374 + $0x10] sm:$0xff]
        %v2378 = vld [vmem:[%s2374 + $0x18] sm:$0xff]
        %v2379 = vld [vmem:[%s2374 + $0x20] sm:$0xff]
        %v2380 = vld [vmem:[%s2374 + $0x28] sm:$0xff]
        %v2381 = vld [vmem:[%s2374 + $0x30] sm:$0xff]
        %v2382 = vld [vmem:[%s2374 + $0x38] sm:$0xff]
        %v2383 = vld [vmem:[%s2374 + $0x40] sm:$0xff]
        %v2384 = vld [vmem:[%s2374 + $0x48] sm:$0xff]
        %v2385 = vld [vmem:[%s2374 + $0x50] sm:$0xff]
        %v2386 = vld [vmem:[%s2374 + $0x58] sm:$0xff]
        %v2387 = vld [vmem:[%s2374 + $0x60] sm:$0xff]
        %v2388 = vld [vmem:[%s2374 + $0x68] sm:$0xff]
        %v2389 = vld [vmem:[%s2374 + $0x70] sm:$0xff]
        %v2390 = vld [vmem:[%s2374 + $0x78] sm:$0xff]
        %s2391 = scalar_lea.vmem %s2, 1
        %v2392 = vld [vmem:[%s2391] ss:$2 sm:$0x3]
        %s2393 = scalar_lea.vmem [#allocation7], 128
        %v2394 = vld [vmem:[%s2393] sm:$0xf]
        %v2395 = vld [vmem:[%s2393 + $0x4] sm:$0xf]
        %v2396 = vld [vmem:[%s2393 + $0x8] sm:$0xf]
        %v2397 = vld [vmem:[%s2393 + $0xc] sm:$0xf]
        %v2398 = vld [vmem:[%s2393 + $0x10] sm:$0xf]
        %v2399 = vld [vmem:[%s2393 + $0x14] sm:$0xf]
        %v2400 = vld [vmem:[%s2393 + $0x18] sm:$0xf]
        %v2401 = vld [vmem:[%s2393 + $0x1c] sm:$0xf]
        %v2402 = vld [vmem:[%s2393 + $0x20] sm:$0xf]
        %v2403 = vld [vmem:[%s2393 + $0x24] sm:$0xf]
        %v2404 = vld [vmem:[%s2393 + $0x28] sm:$0xf]
        %v2405 = vld [vmem:[%s2393 + $0x2c] sm:$0xf]
        %v2406 = vld [vmem:[%s2393 + $0x30] sm:$0xf]
        %v2407 = vld [vmem:[%s2393 + $0x34] sm:$0xf]
        %v2408 = vld [vmem:[%s2393 + $0x38] sm:$0xf]
        %v2409 = vld [vmem:[%s2393 + $0x3c] sm:$0xf]
        %v2410 = vld [vmem:[%s2393 + $0x40] sm:$0xf]
        %v2411 = vld [vmem:[%s2393 + $0x44] sm:$0xf]
        %v2412 = vld [vmem:[%s2393 + $0x48] sm:$0xf]
        %v2413 = vld [vmem:[%s2393 + $0x4c] sm:$0xf]
        %v2414 = vld [vmem:[%s2393 + $0x50] sm:$0xf]
        %v2415 = vld [vmem:[%s2393 + $0x54] sm:$0xf]
        %v2416 = vld [vmem:[%s2393 + $0x58] sm:$0xf]
        %v2417 = vld [vmem:[%s2393 + $0x5c] sm:$0xf]
        %v2418 = vld [vmem:[%s2393 + $0x60] sm:$0xf]
        %v2419 = vld [vmem:[%s2393 + $0x64] sm:$0xf]
        %v2420 = vld [vmem:[%s2393 + $0x68] sm:$0xf]
        %v2421 = vld [vmem:[%s2393 + $0x6c] sm:$0xf]
        %v2422 = vld [vmem:[%s2393 + $0x70] sm:$0xf]
        %v2423 = vld [vmem:[%s2393 + $0x74] sm:$0xf]
        %v2424 = vld [vmem:[%s2393 + $0x78] sm:$0xf]
        %v2425 = vld [vmem:[%s2393 + $0x7c] sm:$0xf]
        %v2426 = vld [vmem:[%s4 + $0x1] sm:$0x1]
        %v2427 = vpack.c.bf16 %v2343, %v2342
        %v2428 = vpack.c.bf16 %v2345, %v2344
        %v2429 = vpack.c.bf16 %v2347, %v2346
        %v2430 = vpack.c.bf16 %v2349, %v2348
        %v2431 = vpack.c.bf16 %v2351, %v2350
        %v2432 = vpack.c.bf16 %v2353, %v2352
        %v2433 = vpack.c.bf16 %v2355, %v2354
        %v2434 = vpack.c.bf16 %v2357, %v2356
        %v2435 = vpack.c.bf16 %v2359, %v2358
        %v2436 = vpack.c.bf16 %v2361, %v2360
        %v2437 = vpack.c.bf16 %v2363, %v2362
        %v2438 = vpack.c.bf16 %v2365, %v2364
        %v2439 = vpack.c.bf16 %v2367, %v2366
        %v2440 = vpack.c.bf16 %v2369, %v2368
        %v2441 = vpack.c.bf16 %v2371, %v2370
        %v2442 = vpack.c.bf16 %v2373, %v2372
        %v2444 = vlaneseq
        %v2445 = vshrl.u32 %v2444, 7
        %v2446 = vsub.s32 0, %v2445
        %v2447 = vrot.slane %v2392, %v2446
        %v2448 = vlaneseq
        %v2449 = vshrl.u32 %v2448, 7
        %v2450 = vsub.s32 1, %v2449
        %v2451 = vrot.slane %v2392, %v2450
        %v2470 = vunpack.c.l.b16 %v2375
        %v2471 = vunpack.c.h.b16 %v2375
        %v2472 = vunpack.c.l.b16 %v2376
        %v2473 = vunpack.c.h.b16 %v2376
        %v2474 = vunpack.c.l.b16 %v2377
        %v2475 = vunpack.c.h.b16 %v2377
        %v2476 = vunpack.c.l.b16 %v2378
        %v2477 = vunpack.c.h.b16 %v2378
        %v2478 = vunpack.c.l.b16 %v2379
        %v2479 = vunpack.c.h.b16 %v2379
        %v2480 = vunpack.c.l.b16 %v2380
        %v2481 = vunpack.c.h.b16 %v2380
        %v2482 = vunpack.c.l.b16 %v2381
        %v2483 = vunpack.c.h.b16 %v2381
        %v2484 = vunpack.c.l.b16 %v2382
        %v2485 = vunpack.c.h.b16 %v2382
        %v2486 = vunpack.c.l.b16 %v2383
        %v2487 = vunpack.c.h.b16 %v2383
        %v2488 = vunpack.c.l.b16 %v2384
        %v2489 = vunpack.c.h.b16 %v2384
        %v2490 = vunpack.c.l.b16 %v2385
        %v2491 = vunpack.c.h.b16 %v2385
        %v2492 = vunpack.c.l.b16 %v2386
        %v2493 = vunpack.c.h.b16 %v2386
        %v2494 = vunpack.c.l.b16 %v2387
        %v2495 = vunpack.c.h.b16 %v2387
        %v2496 = vunpack.c.l.b16 %v2388
        %v2497 = vunpack.c.h.b16 %v2388
        %v2498 = vunpack.c.l.b16 %v2389
        %v2499 = vunpack.c.h.b16 %v2389
        %v2500 = vunpack.c.l.b16 %v2390
        %v2501 = vunpack.c.h.b16 %v2390
        %v2502 = vpack.c.b16 %v2472, %v2470
        %v2503 = vpack.c.b16 %v2473, %v2471
        %v2504 = vpack.c.b16 %v2476, %v2474
        %v2505 = vpack.c.b16 %v2477, %v2475
        %v2506 = vpack.c.b16 %v2480, %v2478
        %v2507 = vpack.c.b16 %v2481, %v2479
        %v2508 = vpack.c.b16 %v2484, %v2482
        %v2509 = vpack.c.b16 %v2485, %v2483
        %v2510 = vpack.c.b16 %v2488, %v2486
        %v2511 = vpack.c.b16 %v2489, %v2487
        %v2512 = vpack.c.b16 %v2492, %v2490
        %v2513 = vpack.c.b16 %v2493, %v2491
        %v2514 = vpack.c.b16 %v2496, %v2494
        %v2515 = vpack.c.b16 %v2497, %v2495
        %v2516 = vpack.c.b16 %v2500, %v2498
        %v2517 = vpack.c.b16 %v2501, %v2499
        %2534 = vmatprep.subr.bf16.mxu0 %v2503
        %2535 = vmatpush1.bf16.msra.mxu0 %v2502
        %2536 = vmatprep.subr.bf16.mxu0 %v2505
        %2537 = vmatpush1.bf16.msra.mxu0 %v2504
        %2538 = vmatprep.subr.bf16.mxu0 %v2507
        %2539 = vmatpush1.bf16.msra.mxu0 %v2506
        %2540 = vmatprep.subr.bf16.mxu0 %v2509
        %2541 = vmatpush1.bf16.msra.mxu0 %v2508
        %2542 = vmatprep.subr.bf16.mxu0 %v2511
        %2543 = vmatpush1.bf16.msra.mxu0 %v2510
        %2544 = vmatprep.subr.bf16.mxu0 %v2513
        %2545 = vmatpush1.bf16.msra.mxu0 %v2512
        %2546 = vmatprep.subr.bf16.mxu0 %v2515
        %2547 = vmatpush1.bf16.msra.mxu0 %v2514
        %2548 = vmatprep.subr.bf16.mxu0 %v2517
        %2549 = vmatpush1.bf16.msra.mxu0 %v2516
        %2550 = vmatprep.subr.bf16.mxu0 0
        %2551 = vmatpush1.bf16.msra.mxu0 0
        %2552 = vmatprep.subr.bf16.mxu0 0
        %2553 = vmatpush1.bf16.msra.mxu0 0
        %2554 = vmatprep.subr.bf16.mxu0 0
        %2555 = vmatpush1.bf16.msra.mxu0 0
        %2556 = vmatprep.subr.bf16.mxu0 0
        %2557 = vmatpush1.bf16.msra.mxu0 0
        %2558 = vmatprep.subr.bf16.mxu0 0
        %2559 = vmatpush1.bf16.msra.mxu0 0
        %2560 = vmatprep.subr.bf16.mxu0 0
        %2561 = vmatpush1.bf16.msra.mxu0 0
        %2562 = vmatprep.subr.bf16.mxu0 0
        %2563 = vmatpush1.bf16.msra.mxu0 0
        %2564 = vmatprep.subr.bf16.mxu0 0
        %2565 = vmatpush1.bf16.msra.mxu0 0
        %2566 = vmatprep.mubr.bf16.mxu0 0
        %2567 = vmatmul.mubr.bf16.gmra.mrb[0].mxu0 %v2427
        %v2568 = vpop.f32.mrb[0].mxu0
        %v2569 = vadd.f32 %v2447, %v2568
        %v2570 = vpop.f32.mrb[0].mxu0
        %v2571 = vadd.f32 %v2451, %v2570
        %v2572 = vpop.f32.mrb[0].mxu0
        %v2573 = vadd.f32 %v2447, %v2572
        %v2574 = vpop.f32.mrb[0].mxu0
        %v2575 = vadd.f32 %v2451, %v2574
        %2576 = vmatprep.mubr.bf16.mxu0 0
        %2577 = vmatmul.mubr.bf16.gmra.mrb[0].mxu0 %v2428
        %v2578 = vpop.f32.mrb[0].mxu0
        %v2579 = vadd.f32 %v2447, %v2578
        %v2580 = vpop.f32.mrb[0].mxu0
        %v2581 = vadd.f32 %v2451, %v2580
        %v2582 = vpop.f32.mrb[0].mxu0
        %v2583 = vadd.f32 %v2447, %v2582
        %v2584 = vpop.f32.mrb[0].mxu0
        %v2585 = vadd.f32 %v2451, %v2584
        %2586 = vmatprep.mubr.bf16.mxu0 0
        %2587 = vmatmul.mubr.bf16.gmra.mrb[0].mxu0 %v2429
        %v2588 = vpop.f32.mrb[0].mxu0
        %v2589 = vadd.f32 %v2447, %v2588
        %v2590 = vpop.f32.mrb[0].mxu0
        %v2591 = vadd.f32 %v2451, %v2590
        %v2592 = vpop.f32.mrb[0].mxu0
        %v2593 = vadd.f32 %v2447, %v2592
        %v2594 = vpop.f32.mrb[0].mxu0
        %v2595 = vadd.f32 %v2451, %v2594
        %2596 = vmatprep.mubr.bf16.mxu0 0
        %2597 = vmatmul.mubr.bf16.gmra.mrb[0].mxu0 %v2430
        %v2598 = vpop.f32.mrb[0].mxu0
        %v2599 = vadd.f32 %v2447, %v2598
        %v2600 = vpop.f32.mrb[0].mxu0
        %v2601 = vadd.f32 %v2451, %v2600
        %v2602 = vpop.f32.mrb[0].mxu0
        %v2603 = vadd.f32 %v2447, %v2602
        %v2604 = vpop.f32.mrb[0].mxu0
        %v2605 = vadd.f32 %v2451, %v2604
        %2606 = vmatprep.mubr.bf16.mxu0 0
        %2607 = vmatmul.mubr.bf16.gmra.mrb[0].mxu0 %v2431
        %v2608 = vpop.f32.mrb[0].mxu0
        %v2609 = vadd.f32 %v2447, %v2608
        %v2610 = vpop.f32.mrb[0].mxu0
        %v2611 = vadd.f32 %v2451, %v2610
        %v2612 = vpop.f32.mrb[0].mxu0
        %v2613 = vadd.f32 %v2447, %v2612
        %v2614 = vpop.f32.mrb[0].mxu0
        %v2615 = vadd.f32 %v2451, %v2614
        %2616 = vmatprep.mubr.bf16.mxu0 0
        %2617 = vmatmul.mubr.bf16.gmra.mrb[0].mxu0 %v2432
        %v2618 = vpop.f32.mrb[0].mxu0
        %v2619 = vadd.f32 %v2447, %v2618
        %v2620 = vpop.f32.mrb[0].mxu0
        %v2621 = vadd.f32 %v2451, %v2620
        %v2622 = vpop.f32.mrb[0].mxu0
        %v2623 = vadd.f32 %v2447, %v2622
        %v2624 = vpop.f32.mrb[0].mxu0
        %v2625 = vadd.f32 %v2451, %v2624
        %2626 = vmatprep.mubr.bf16.mxu0 0
        %2627 = vmatmul.mubr.bf16.gmra.mrb[0].mxu0 %v2433
        %v2628 = vpop.f32.mrb[0].mxu0
        %v2629 = vadd.f32 %v2447, %v2628
        %v2630 = vpop.f32.mrb[0].mxu0
        %v2631 = vadd.f32 %v2451, %v2630
        %v2632 = vpop.f32.mrb[0].mxu0
        %v2633 = vadd.f32 %v2447, %v2632
        %v2634 = vpop.f32.mrb[0].mxu0
        %v2635 = vadd.f32 %v2451, %v2634
        %2636 = vmatprep.mubr.bf16.mxu0 0
        %2637 = vmatmul.mubr.bf16.gmra.mrb[0].mxu0 %v2434
        %v2638 = vpop.f32.mrb[0].mxu0
        %v2639 = vadd.f32 %v2447, %v2638
        %v2640 = vpop.f32.mrb[0].mxu0
        %v2641 = vadd.f32 %v2451, %v2640
        %v2642 = vpop.f32.mrb[0].mxu0
        %v2643 = vadd.f32 %v2447, %v2642
        %v2644 = vpop.f32.mrb[0].mxu0
        %v2645 = vadd.f32 %v2451, %v2644
        %2646 = vmatprep.mubr.bf16.mxu0 0
        %2647 = vmatmul.mubr.bf16.gmra.mrb[0].mxu0 %v2435
        %v2648 = vpop.f32.mrb[0].mxu0
        %v2649 = vadd.f32 %v2447, %v2648
        %v2650 = vpop.f32.mrb[0].mxu0
        %v2651 = vadd.f32 %v2451, %v2650
        %v2652 = vpop.f32.mrb[0].mxu0
        %v2653 = vadd.f32 %v2447, %v2652
        %v2654 = vpop.f32.mrb[0].mxu0
        %v2655 = vadd.f32 %v2451, %v2654
        %2656 = vmatprep.mubr.bf16.mxu0 0
        %2657 = vmatmul.mubr.bf16.gmra.mrb[0].mxu0 %v2436
        %v2658 = vpop.f32.mrb[0].mxu0
        %v2659 = vadd.f32 %v2447, %v2658
        %v2660 = vpop.f32.mrb[0].mxu0
        %v2661 = vadd.f32 %v2451, %v2660
        %v2662 = vpop.f32.mrb[0].mxu0
        %v2663 = vadd.f32 %v2447, %v2662
        %v2664 = vpop.f32.mrb[0].mxu0
        %v2665 = vadd.f32 %v2451, %v2664
        %2666 = vmatprep.mubr.bf16.mxu0 0
        %2667 = vmatmul.mubr.bf16.gmra.mrb[0].mxu0 %v2437
        %v2668 = vpop.f32.mrb[0].mxu0
        %v2669 = vadd.f32 %v2447, %v2668
        %v2670 = vpop.f32.mrb[0].mxu0
        %v2671 = vadd.f32 %v2451, %v2670
        %v2672 = vpop.f32.mrb[0].mxu0
        %v2673 = vadd.f32 %v2447, %v2672
        %v2674 = vpop.f32.mrb[0].mxu0
        %v2675 = vadd.f32 %v2451, %v2674
        %2676 = vmatprep.mubr.bf16.mxu0 0
        %2677 = vmatmul.mubr.bf16.gmra.mrb[0].mxu0 %v2438
        %v2678 = vpop.f32.mrb[0].mxu0
        %v2679 = vadd.f32 %v2447, %v2678
        %v2680 = vpop.f32.mrb[0].mxu0
        %v2681 = vadd.f32 %v2451, %v2680
        %v2682 = vpop.f32.mrb[0].mxu0
        %v2683 = vadd.f32 %v2447, %v2682
        %v2684 = vpop.f32.mrb[0].mxu0
        %v2685 = vadd.f32 %v2451, %v2684
        %2686 = vmatprep.mubr.bf16.mxu0 0
        %2687 = vmatmul.mubr.bf16.gmra.mrb[0].mxu0 %v2439
        %v2688 = vpop.f32.mrb[0].mxu0
        %v2689 = vadd.f32 %v2447, %v2688
        %v2690 = vpop.f32.mrb[0].mxu0
        %v2691 = vadd.f32 %v2451, %v2690
        %v2692 = vpop.f32.mrb[0].mxu0
        %v2693 = vadd.f32 %v2447, %v2692
        %v2694 = vpop.f32.mrb[0].mxu0
        %v2695 = vadd.f32 %v2451, %v2694
        %2696 = vmatprep.mubr.bf16.mxu0 0
        %2697 = vmatmul.mubr.bf16.gmra.mrb[0].mxu0 %v2440
        %v2698 = vpop.f32.mrb[0].mxu0
        %v2699 = vadd.f32 %v2447, %v2698
        %v2700 = vpop.f32.mrb[0].mxu0
        %v2701 = vadd.f32 %v2451, %v2700
        %v2702 = vpop.f32.mrb[0].mxu0
        %v2703 = vadd.f32 %v2447, %v2702
        %v2704 = vpop.f32.mrb[0].mxu0
        %v2705 = vadd.f32 %v2451, %v2704
        %2706 = vmatprep.mubr.bf16.mxu0 0
        %2707 = vmatmul.mubr.bf16.gmra.mrb[0].mxu0 %v2441
        %v2708 = vpop.f32.mrb[0].mxu0
        %v2709 = vadd.f32 %v2447, %v2708
        %v2710 = vpop.f32.mrb[0].mxu0
        %v2711 = vadd.f32 %v2451, %v2710
        %v2712 = vpop.f32.mrb[0].mxu0
        %v2713 = vadd.f32 %v2447, %v2712
        %v2714 = vpop.f32.mrb[0].mxu0
        %v2715 = vadd.f32 %v2451, %v2714
        %2716 = vmatprep.mubr.bf16.mxu0 0
        %2717 = vmatmul.mubr.bf16.gmra.mrb[0].mxu0 %v2442
        %v2718 = vpop.f32.mrb[0].mxu0
        %v2719 = vadd.f32 %v2447, %v2718
        %v2720 = vpop.f32.mrb[0].mxu0
        %v2721 = vadd.f32 %v2451, %v2720
        %v2722 = vpop.f32.mrb[0].mxu0
        %v2723 = vadd.f32 %v2447, %v2722
        %v2724 = vpop.f32.mrb[0].mxu0
        %v2725 = vadd.f32 %v2451, %v2724
        %2726 = vdwg.mxu0
        %v2727 = vpack.c.bf16 %v2573, %v2569
        %v2728 = vpack.c.bf16 %v2575, %v2571
        %v2729 = vpack.c.bf16 %v2583, %v2579
        %v2730 = vpack.c.bf16 %v2585, %v2581
        %v2731 = vpack.c.bf16 %v2593, %v2589
        %v2732 = vpack.c.bf16 %v2595, %v2591
        %v2733 = vpack.c.bf16 %v2603, %v2599
        %v2734 = vpack.c.bf16 %v2605, %v2601
        %v2735 = vpack.c.bf16 %v2613, %v2609
        %v2736 = vpack.c.bf16 %v2615, %v2611
        %v2737 = vpack.c.bf16 %v2623, %v2619
        %v2738 = vpack.c.bf16 %v2625, %v2621
        %v2739 = vpack.c.bf16 %v2633, %v2629
        %v2740 = vpack.c.bf16 %v2635, %v2631
        %v2741 = vpack.c.bf16 %v2643, %v2639
        %v2742 = vpack.c.bf16 %v2645, %v2641
        %v2743 = vpack.c.bf16 %v2653, %v2649
        %v2744 = vpack.c.bf16 %v2655, %v2651
        %v2745 = vpack.c.bf16 %v2663, %v2659
        %v2746 = vpack.c.bf16 %v2665, %v2661
        %v2747 = vpack.c.bf16 %v2673, %v2669
        %v2748 = vpack.c.bf16 %v2675, %v2671
        %v2749 = vpack.c.bf16 %v2683, %v2679
        %v2750 = vpack.c.bf16 %v2685, %v2681
        %v2751 = vpack.c.bf16 %v2693, %v2689
        %v2752 = vpack.c.bf16 %v2695, %v2691
        %v2753 = vpack.c.bf16 %v2703, %v2699
        %v2754 = vpack.c.bf16 %v2705, %v2701
        %v2755 = vpack.c.bf16 %v2713, %v2709
        %v2756 = vpack.c.bf16 %v2715, %v2711
        %v2757 = vpack.c.bf16 %v2723, %v2719
        %v2758 = vpack.c.bf16 %v2725, %v2721
        %v2759 = vmul.bf16 %v2727, %v2727
        %v2760 = vmul.bf16 %v2728, %v2728
        %v2761 = vmul.bf16 %v2729, %v2729
        %v2762 = vmul.bf16 %v2730, %v2730
        %v2763 = vmul.bf16 %v2731, %v2731
        %v2764 = vmul.bf16 %v2732, %v2732
        %v2765 = vmul.bf16 %v2733, %v2733
        %v2766 = vmul.bf16 %v2734, %v2734
        %v2767 = vmul.bf16 %v2735, %v2735
        %v2768 = vmul.bf16 %v2736, %v2736
        %v2769 = vmul.bf16 %v2737, %v2737
        %v2770 = vmul.bf16 %v2738, %v2738
        %v2771 = vmul.bf16 %v2739, %v2739
        %v2772 = vmul.bf16 %v2740, %v2740
        %v2773 = vmul.bf16 %v2741, %v2741
        %v2774 = vmul.bf16 %v2742, %v2742
        %v2775 = vmul.bf16 %v2743, %v2743
        %v2776 = vmul.bf16 %v2744, %v2744
        %v2777 = vmul.bf16 %v2745, %v2745
        %v2778 = vmul.bf16 %v2746, %v2746
        %v2779 = vmul.bf16 %v2747, %v2747
        %v2780 = vmul.bf16 %v2748, %v2748
        %v2781 = vmul.bf16 %v2749, %v2749
        %v2782 = vmul.bf16 %v2750, %v2750
        %v2783 = vmul.bf16 %v2751, %v2751
        %v2784 = vmul.bf16 %v2752, %v2752
        %v2785 = vmul.bf16 %v2753, %v2753
        %v2786 = vmul.bf16 %v2754, %v2754
        %v2787 = vmul.bf16 %v2755, %v2755
        %v2788 = vmul.bf16 %v2756, %v2756
        %v2789 = vmul.bf16 %v2757, %v2757
        %v2790 = vmul.bf16 %v2758, %v2758
        %v2791 = vmul.bf16 %v2727, %v2759
        %v2792 = vmul.bf16 %v2728, %v2760
        %v2793 = vmul.bf16 %v2729, %v2761
        %v2794 = vmul.bf16 %v2730, %v2762
        %v2795 = vmul.bf16 %v2731, %v2763
        %v2796 = vmul.bf16 %v2732, %v2764
        %v2797 = vmul.bf16 %v2733, %v2765
        %v2798 = vmul.bf16 %v2734, %v2766
        %v2799 = vmul.bf16 %v2735, %v2767
        %v2800 = vmul.bf16 %v2736, %v2768
        %v2801 = vmul.bf16 %v2737, %v2769
        %v2802 = vmul.bf16 %v2738, %v2770
        %v2803 = vmul.bf16 %v2739, %v2771
        %v2804 = vmul.bf16 %v2740, %v2772
        %v2805 = vmul.bf16 %v2741, %v2773
        %v2806 = vmul.bf16 %v2742, %v2774
        %v2807 = vmul.bf16 %v2743, %v2775
        %v2808 = vmul.bf16 %v2744, %v2776
        %v2809 = vmul.bf16 %v2745, %v2777
        %v2810 = vmul.bf16 %v2746, %v2778
        %v2811 = vmul.bf16 %v2747, %v2779
        %v2812 = vmul.bf16 %v2748, %v2780
        %v2813 = vmul.bf16 %v2749, %v2781
        %v2814 = vmul.bf16 %v2750, %v2782
        %v2815 = vmul.bf16 %v2751, %v2783
        %v2816 = vmul.bf16 %v2752, %v2784
        %v2817 = vmul.bf16 %v2753, %v2785
        %v2818 = vmul.bf16 %v2754, %v2786
        %v2819 = vmul.bf16 %v2755, %v2787
        %v2820 = vmul.bf16 %v2756, %v2788
        %v2821 = vmul.bf16 %v2757, %v2789
        %v2822 = vmul.bf16 %v2758, %v2790
        %v2823 = vmul.bf16 %v2791, 1027030327
        %v2824 = vmul.bf16 %v2792, 1027030327
        %v2825 = vmul.bf16 %v2793, 1027030327
        %v2826 = vmul.bf16 %v2794, 1027030327
        %v2827 = vmul.bf16 %v2795, 1027030327
        %v2828 = vmul.bf16 %v2796, 1027030327
        %v2829 = vmul.bf16 %v2797, 1027030327
        %v2830 = vmul.bf16 %v2798, 1027030327
        %v2831 = vmul.bf16 %v2799, 1027030327
        %v2832 = vmul.bf16 %v2800, 1027030327
        %v2833 = vmul.bf16 %v2801, 1027030327
        %v2834 = vmul.bf16 %v2802, 1027030327
        %v2835 = vmul.bf16 %v2803, 1027030327
        %v2836 = vmul.bf16 %v2804, 1027030327
        %v2837 = vmul.bf16 %v2805, 1027030327
        %v2838 = vmul.bf16 %v2806, 1027030327
        %v2839 = vmul.bf16 %v2807, 1027030327
        %v2840 = vmul.bf16 %v2808, 1027030327
        %v2841 = vmul.bf16 %v2809, 1027030327
        %v2842 = vmul.bf16 %v2810, 1027030327
        %v2843 = vmul.bf16 %v2811, 1027030327
        %v2844 = vmul.bf16 %v2812, 1027030327
        %v2845 = vmul.bf16 %v2813, 1027030327
        %v2846 = vmul.bf16 %v2814, 1027030327
        %v2847 = vmul.bf16 %v2815, 1027030327
        %v2848 = vmul.bf16 %v2816, 1027030327
        %v2849 = vmul.bf16 %v2817, 1027030327
        %v2850 = vmul.bf16 %v2818, 1027030327
        %v2851 = vmul.bf16 %v2819, 1027030327
        %v2852 = vmul.bf16 %v2820, 1027030327
        %v2853 = vmul.bf16 %v2821, 1027030327
        %v2854 = vmul.bf16 %v2822, 1027030327
        %v2855 = vadd.bf16 %v2727, %v2823
        %v2856 = vadd.bf16 %v2728, %v2824
        %v2857 = vadd.bf16 %v2729, %v2825
        %v2858 = vadd.bf16 %v2730, %v2826
        %v2859 = vadd.bf16 %v2731, %v2827
        %v2860 = vadd.bf16 %v2732, %v2828
        %v2861 = vadd.bf16 %v2733, %v2829
        %v2862 = vadd.bf16 %v2734, %v2830
        %v2863 = vadd.bf16 %v2735, %v2831
        %v2864 = vadd.bf16 %v2736, %v2832
        %v2865 = vadd.bf16 %v2737, %v2833
        %v2866 = vadd.bf16 %v2738, %v2834
        %v2867 = vadd.bf16 %v2739, %v2835
        %v2868 = vadd.bf16 %v2740, %v2836
        %v2869 = vadd.bf16 %v2741, %v2837
        %v2870 = vadd.bf16 %v2742, %v2838
        %v2871 = vadd.bf16 %v2743, %v2839
        %v2872 = vadd.bf16 %v2744, %v2840
        %v2873 = vadd.bf16 %v2745, %v2841
        %v2874 = vadd.bf16 %v2746, %v2842
        %v2875 = vadd.bf16 %v2747, %v2843
        %v2876 = vadd.bf16 %v2748, %v2844
        %v2877 = vadd.bf16 %v2749, %v2845
        %v2878 = vadd.bf16 %v2750, %v2846
        %v2879 = vadd.bf16 %v2751, %v2847
        %v2880 = vadd.bf16 %v2752, %v2848
        %v2881 = vadd.bf16 %v2753, %v2849
        %v2882 = vadd.bf16 %v2754, %v2850
        %v2883 = vadd.bf16 %v2755, %v2851
        %v2884 = vadd.bf16 %v2756, %v2852
        %v2885 = vadd.bf16 %v2757, %v2853
        %v2886 = vadd.bf16 %v2758, %v2854
        %v2887 = vmul.bf16 %v2855, 1061961548
        %v2888 = vmul.bf16 %v2856, 1061961548
        %v2889 = vmul.bf16 %v2857, 1061961548
        %v2890 = vmul.bf16 %v2858, 1061961548
        %v2891 = vmul.bf16 %v2859, 1061961548
        %v2892 = vmul.bf16 %v2860, 1061961548
        %v2893 = vmul.bf16 %v2861, 1061961548
        %v2894 = vmul.bf16 %v2862, 1061961548
        %v2895 = vmul.bf16 %v2863, 1061961548
        %v2896 = vmul.bf16 %v2864, 1061961548
        %v2897 = vmul.bf16 %v2865, 1061961548
        %v2898 = vmul.bf16 %v2866, 1061961548
        %v2899 = vmul.bf16 %v2867, 1061961548
        %v2900 = vmul.bf16 %v2868, 1061961548
        %v2901 = vmul.bf16 %v2869, 1061961548
        %v2902 = vmul.bf16 %v2870, 1061961548
        %v2903 = vmul.bf16 %v2871, 1061961548
        %v2904 = vmul.bf16 %v2872, 1061961548
        %v2905 = vmul.bf16 %v2873, 1061961548
        %v2906 = vmul.bf16 %v2874, 1061961548
        %v2907 = vmul.bf16 %v2875, 1061961548
        %v2908 = vmul.bf16 %v2876, 1061961548
        %v2909 = vmul.bf16 %v2877, 1061961548
        %v2910 = vmul.bf16 %v2878, 1061961548
        %v2911 = vmul.bf16 %v2879, 1061961548
        %v2912 = vmul.bf16 %v2880, 1061961548
        %v2913 = vmul.bf16 %v2881, 1061961548
        %v2914 = vmul.bf16 %v2882, 1061961548
        %v2915 = vmul.bf16 %v2883, 1061961548
        %v2916 = vmul.bf16 %v2884, 1061961548
        %v2917 = vmul.bf16 %v2885, 1061961548
        %v2918 = vmul.bf16 %v2886, 1061961548
        %v2919 = vtanh.bf16.pop %v2887
        %v2920 = vtanh.bf16.pop %v2888
        %v2921 = vtanh.bf16.pop %v2889
        %v2922 = vtanh.bf16.pop %v2890
        %v2923 = vtanh.bf16.pop %v2891
        %v2924 = vtanh.bf16.pop %v2892
        %v2925 = vtanh.bf16.pop %v2893
        %v2926 = vtanh.bf16.pop %v2894
        %v2927 = vtanh.bf16.pop %v2895
        %v2928 = vtanh.bf16.pop %v2896
        %v2929 = vtanh.bf16.pop %v2897
        %v2930 = vtanh.bf16.pop %v2898
        %v2931 = vtanh.bf16.pop %v2899
        %v2932 = vtanh.bf16.pop %v2900
        %v2933 = vtanh.bf16.pop %v2901
        %v2934 = vtanh.bf16.pop %v2902
        %v2935 = vtanh.bf16.pop %v2903
        %v2936 = vtanh.bf16.pop %v2904
        %v2937 = vtanh.bf16.pop %v2905
        %v2938 = vtanh.bf16.pop %v2906
        %v2939 = vtanh.bf16.pop %v2907
        %v2940 = vtanh.bf16.pop %v2908
        %v2941 = vtanh.bf16.pop %v2909
        %v2942 = vtanh.bf16.pop %v2910
        %v2943 = vtanh.bf16.pop %v2911
        %v2944 = vtanh.bf16.pop %v2912
        %v2945 = vtanh.bf16.pop %v2913
        %v2946 = vtanh.bf16.pop %v2914
        %v2947 = vtanh.bf16.pop %v2915
        %v2948 = vtanh.bf16.pop %v2916
        %v2949 = vtanh.bf16.pop %v2917
        %v2950 = vtanh.bf16.pop %v2918
        %v2951 = vadd.bf16 %v2919, 1065369472
        %v2952 = vadd.bf16 %v2920, 1065369472
        %v2953 = vadd.bf16 %v2921, 1065369472
        %v2954 = vadd.bf16 %v2922, 1065369472
        %v2955 = vadd.bf16 %v2923, 1065369472
        %v2956 = vadd.bf16 %v2924, 1065369472
        %v2957 = vadd.bf16 %v2925, 1065369472
        %v2958 = vadd.bf16 %v2926, 1065369472
        %v2959 = vadd.bf16 %v2927, 1065369472
        %v2960 = vadd.bf16 %v2928, 1065369472
        %v2961 = vadd.bf16 %v2929, 1065369472
        %v2962 = vadd.bf16 %v2930, 1065369472
        %v2963 = vadd.bf16 %v2931, 1065369472
        %v2964 = vadd.bf16 %v2932, 1065369472
        %v2965 = vadd.bf16 %v2933, 1065369472
        %v2966 = vadd.bf16 %v2934, 1065369472
        %v2967 = vadd.bf16 %v2935, 1065369472
        %v2968 = vadd.bf16 %v2936, 1065369472
        %v2969 = vadd.bf16 %v2937, 1065369472
        %v2970 = vadd.bf16 %v2938, 1065369472
        %v2971 = vadd.bf16 %v2939, 1065369472
        %v2972 = vadd.bf16 %v2940, 1065369472
        %v2973 = vadd.bf16 %v2941, 1065369472
        %v2974 = vadd.bf16 %v2942, 1065369472
        %v2975 = vadd.bf16 %v2943, 1065369472
        %v2976 = vadd.bf16 %v2944, 1065369472
        %v2977 = vadd.bf16 %v2945, 1065369472
        %v2978 = vadd.bf16 %v2946, 1065369472
        %v2979 = vadd.bf16 %v2947, 1065369472
        %v2980 = vadd.bf16 %v2948, 1065369472
        %v2981 = vadd.bf16 %v2949, 1065369472
        %v2982 = vadd.bf16 %v2950, 1065369472
        %v2983 = vmul.bf16 %v2951, 1056980736
        %v2984 = vmul.bf16 %v2952, 1056980736
        %v2985 = vmul.bf16 %v2953, 1056980736
        %v2986 = vmul.bf16 %v2954, 1056980736
        %v2987 = vmul.bf16 %v2955, 1056980736
        %v2988 = vmul.bf16 %v2956, 1056980736
        %v2989 = vmul.bf16 %v2957, 1056980736
        %v2990 = vmul.bf16 %v2958, 1056980736
        %v2991 = vmul.bf16 %v2959, 1056980736
        %v2992 = vmul.bf16 %v2960, 1056980736
        %v2993 = vmul.bf16 %v2961, 1056980736
        %v2994 = vmul.bf16 %v2962, 1056980736
        %v2995 = vmul.bf16 %v2963, 1056980736
        %v2996 = vmul.bf16 %v2964, 1056980736
        %v2997 = vmul.bf16 %v2965, 1056980736
        %v2998 = vmul.bf16 %v2966, 1056980736
        %v2999 = vmul.bf16 %v2967, 1056980736
        %v3000 = vmul.bf16 %v2968, 1056980736
        %v3001 = vmul.bf16 %v2969, 1056980736
        %v3002 = vmul.bf16 %v2970, 1056980736
        %v3003 = vmul.bf16 %v2971, 1056980736
        %v3004 = vmul.bf16 %v2972, 1056980736
        %v3005 = vmul.bf16 %v2973, 1056980736
        %v3006 = vmul.bf16 %v2974, 1056980736
        %v3007 = vmul.bf16 %v2975, 1056980736
        %v3008 = vmul.bf16 %v2976, 1056980736
        %v3009 = vmul.bf16 %v2977, 1056980736
        %v3010 = vmul.bf16 %v2978, 1056980736
        %v3011 = vmul.bf16 %v2979, 1056980736
        %v3012 = vmul.bf16 %v2980, 1056980736
        %v3013 = vmul.bf16 %v2981, 1056980736
        %v3014 = vmul.bf16 %v2982, 1056980736
        %v3015 = vmul.bf16 %v2727, %v2983
        %v3016 = vmul.bf16 %v2728, %v2984
        %v3017 = vmul.bf16 %v2729, %v2985
        %v3018 = vmul.bf16 %v2730, %v2986
        %v3019 = vmul.bf16 %v2731, %v2987
        %v3020 = vmul.bf16 %v2732, %v2988
        %v3021 = vmul.bf16 %v2733, %v2989
        %v3022 = vmul.bf16 %v2734, %v2990
        %v3023 = vmul.bf16 %v2735, %v2991
        %v3024 = vmul.bf16 %v2736, %v2992
        %v3025 = vmul.bf16 %v2737, %v2993
        %v3026 = vmul.bf16 %v2738, %v2994
        %v3027 = vmul.bf16 %v2739, %v2995
        %v3028 = vmul.bf16 %v2740, %v2996
        %v3029 = vmul.bf16 %v2741, %v2997
        %v3030 = vmul.bf16 %v2742, %v2998
        %v3031 = vmul.bf16 %v2743, %v2999
        %v3032 = vmul.bf16 %v2744, %v3000
        %v3033 = vmul.bf16 %v2745, %v3001
        %v3034 = vmul.bf16 %v2746, %v3002
        %v3035 = vmul.bf16 %v2747, %v3003
        %v3036 = vmul.bf16 %v2748, %v3004
        %v3037 = vmul.bf16 %v2749, %v3005
        %v3038 = vmul.bf16 %v2750, %v3006
        %v3039 = vmul.bf16 %v2751, %v3007
        %v3040 = vmul.bf16 %v2752, %v3008
        %v3041 = vmul.bf16 %v2753, %v3009
        %v3042 = vmul.bf16 %v2754, %v3010
        %v3043 = vmul.bf16 %v2755, %v3011
        %v3044 = vmul.bf16 %v2756, %v3012
        %v3045 = vmul.bf16 %v2757, %v3013
        %v3046 = vmul.bf16 %v2758, %v3014
        %v3047 = vlaneseq
        %v3048 = vshrl.u32 %v3047, 7
        %v3049 = vsub.s32 0, %v3048
        %v3050 = vrot.slane %v2426, %v3049
        %v3083 = vunpack.c.l.b16 %v2394
        %v3084 = vunpack.c.l.b16 %v2395
        %v3085 = vunpack.c.l.b16 %v2396
        %v3086 = vunpack.c.l.b16 %v2397
        %v3087 = vunpack.c.l.b16 %v2398
        %v3088 = vunpack.c.l.b16 %v2399
        %v3089 = vunpack.c.l.b16 %v2400
        %v3090 = vunpack.c.l.b16 %v2401
        %v3091 = vunpack.c.l.b16 %v2402
        %v3092 = vunpack.c.l.b16 %v2403
        %v3093 = vunpack.c.l.b16 %v2404
        %v3094 = vunpack.c.l.b16 %v2405
        %v3095 = vunpack.c.l.b16 %v2406
        %v3096 = vunpack.c.l.b16 %v2407
        %v3097 = vunpack.c.l.b16 %v2408
        %v3098 = vunpack.c.l.b16 %v2409
        %v3099 = vunpack.c.l.b16 %v2410
        %v3100 = vunpack.c.l.b16 %v2411
        %v3101 = vunpack.c.l.b16 %v2412
        %v3102 = vunpack.c.l.b16 %v2413
        %v3103 = vunpack.c.l.b16 %v2414
        %v3104 = vunpack.c.l.b16 %v2415
        %v3105 = vunpack.c.l.b16 %v2416
        %v3106 = vunpack.c.l.b16 %v2417
        %v3107 = vunpack.c.l.b16 %v2418
        %v3108 = vunpack.c.l.b16 %v2419
        %v3109 = vunpack.c.l.b16 %v2420
        %v3110 = vunpack.c.l.b16 %v2421
        %v3111 = vunpack.c.l.b16 %v2422
        %v3112 = vunpack.c.l.b16 %v2423
        %v3113 = vunpack.c.l.b16 %v2424
        %v3114 = vunpack.c.l.b16 %v2425
        %v3115 = vpack.c.b16 %v3084, %v3083
        %v3116 = vpack.c.b16 %v3086, %v3085
        %v3117 = vpack.c.b16 %v3088, %v3087
        %v3118 = vpack.c.b16 %v3090, %v3089
        %v3119 = vpack.c.b16 %v3092, %v3091
        %v3120 = vpack.c.b16 %v3094, %v3093
        %v3121 = vpack.c.b16 %v3096, %v3095
        %v3122 = vpack.c.b16 %v3098, %v3097
        %v3123 = vpack.c.b16 %v3100, %v3099
        %v3124 = vpack.c.b16 %v3102, %v3101
        %v3125 = vpack.c.b16 %v3104, %v3103
        %v3126 = vpack.c.b16 %v3106, %v3105
        %v3127 = vpack.c.b16 %v3108, %v3107
        %v3128 = vpack.c.b16 %v3110, %v3109
        %v3129 = vpack.c.b16 %v3112, %v3111
        %v3130 = vpack.c.b16 %v3114, %v3113
        %3147 = vmatprep.subr.bf16.mxu0 0
        %3148 = vmatpush1.bf16.msra.mxu0 %v3115
        %3149 = vmatprep.subr.bf16.mxu0 0
        %3150 = vmatpush1.bf16.msra.mxu0 %v3116
        %3151 = vmatprep.subr.bf16.mxu0 0
        %3152 = vmatpush1.bf16.msra.mxu0 %v3117
        %3153 = vmatprep.subr.bf16.mxu0 0
        %3154 = vmatpush1.bf16.msra.mxu0 %v3118
        %3155 = vmatprep.subr.bf16.mxu0 0
        %3156 = vmatpush1.bf16.msra.mxu0 %v3119
        %3157 = vmatprep.subr.bf16.mxu0 0
        %3158 = vmatpush1.bf16.msra.mxu0 %v3120
        %3159 = vmatprep.subr.bf16.mxu0 0
        %3160 = vmatpush1.bf16.msra.mxu0 %v3121
        %3161 = vmatprep.subr.bf16.mxu0 0
        %3162 = vmatpush1.bf16.msra.mxu0 %v3122
        %3163 = vmatprep.subr.bf16.mxu0 0
        %3164 = vmatpush1.bf16.msra.mxu0 %v3123
        %3165 = vmatprep.subr.bf16.mxu0 0
        %3166 = vmatpush1.bf16.msra.mxu0 %v3124
        %3167 = vmatprep.subr.bf16.mxu0 0
        %3168 = vmatpush1.bf16.msra.mxu0 %v3125
        %3169 = vmatprep.subr.bf16.mxu0 0
        %3170 = vmatpush1.bf16.msra.mxu0 %v3126
        %3171 = vmatprep.subr.bf16.mxu0 0
        %3172 = vmatpush1.bf16.msra.mxu0 %v3127
        %3173 = vmatprep.subr.bf16.mxu0 0
        %3174 = vmatpush1.bf16.msra.mxu0 %v3128
        %3175 = vmatprep.subr.bf16.mxu0 0
        %3176 = vmatpush1.bf16.msra.mxu0 %v3129
        %3177 = vmatprep.subr.bf16.mxu0 0
        %3178 = vmatpush1.bf16.msra.mxu0 %v3130
        %3179 = vmatprep.mubr.bf16.mxu0 %v3016
        %3180 = vmatmul.mubr.bf16.gmra.mrb[0].mxu0 %v3015
        %v3181 = vpop.f32.mrb[0].mxu0
        %v3182 = vadd.f32 %v3050, %v3181
        %v3183 = vpop.f32.mrb[0].mxu0
        %v3184 = vpop.f32.mrb[0].mxu0
        %v3185 = vadd.f32 %v3050, %v3184
        %v3186 = vpop.f32.mrb[0].mxu0
        %3187 = vmatprep.mubr.bf16.mxu0 %v3018
        %3188 = vmatmul.mubr.bf16.gmra.mrb[0].mxu0 %v3017
        %v3189 = vpop.f32.mrb[0].mxu0
        %v3190 = vadd.f32 %v3050, %v3189
        %v3191 = vpop.f32.mrb[0].mxu0
        %v3192 = vpop.f32.mrb[0].mxu0
        %v3193 = vadd.f32 %v3050, %v3192
        %v3194 = vpop.f32.mrb[0].mxu0
        %3195 = vmatprep.mubr.bf16.mxu0 %v3020
        %3196 = vmatmul.mubr.bf16.gmra.mrb[0].mxu0 %v3019
        %v3197 = vpop.f32.mrb[0].mxu0
        %v3198 = vadd.f32 %v3050, %v3197
        %v3199 = vpop.f32.mrb[0].mxu0
        %v3200 = vpop.f32.mrb[0].mxu0
        %v3201 = vadd.f32 %v3050, %v3200
        %v3202 = vpop.f32.mrb[0].mxu0
        %3203 = vmatprep.mubr.bf16.mxu0 %v3022
        %3204 = vmatmul.mubr.bf16.gmra.mrb[0].mxu0 %v3021
        %v3205 = vpop.f32.mrb[0].mxu0
        %v3206 = vadd.f32 %v3050, %v3205
        %v3207 = vpop.f32.mrb[0].mxu0
        %v3208 = vpop.f32.mrb[0].mxu0
        %v3209 = vadd.f32 %v3050, %v3208
        %v3210 = vpop.f32.mrb[0].mxu0
        %3211 = vmatprep.mubr.bf16.mxu0 %v3024
        %3212 = vmatmul.mubr.bf16.gmra.mrb[0].mxu0 %v3023
        %v3213 = vpop.f32.mrb[0].mxu0
        %v3214 = vadd.f32 %v3050, %v3213
        %v3215 = vpop.f32.mrb[0].mxu0
        %v3216 = vpop.f32.mrb[0].mxu0
        %v3217 = vadd.f32 %v3050, %v3216
        %v3218 = vpop.f32.mrb[0].mxu0
        %3219 = vmatprep.mubr.bf16.mxu0 %v3026
        %3220 = vmatmul.mubr.bf16.gmra.mrb[0].mxu0 %v3025
        %v3221 = vpop.f32.mrb[0].mxu0
        %v3222 = vadd.f32 %v3050, %v3221
        %v3223 = vpop.f32.mrb[0].mxu0
        %v3224 = vpop.f32.mrb[0].mxu0
        %v3225 = vadd.f32 %v3050, %v3224
        %v3226 = vpop.f32.mrb[0].mxu0
        %3227 = vmatprep.mubr.bf16.mxu0 %v3028
        %3228 = vmatmul.mubr.bf16.gmra.mrb[0].mxu0 %v3027
        %v3229 = vpop.f32.mrb[0].mxu0
        %v3230 = vadd.f32 %v3050, %v3229
        %v3231 = vpop.f32.mrb[0].mxu0
        %v3232 = vpop.f32.mrb[0].mxu0
        %v3233 = vadd.f32 %v3050, %v3232
        %v3234 = vpop.f32.mrb[0].mxu0
        %3235 = vmatprep.mubr.bf16.mxu0 %v3030
        %3236 = vmatmul.mubr.bf16.gmra.mrb[0].mxu0 %v3029
        %v3237 = vpop.f32.mrb[0].mxu0
        %v3238 = vadd.f32 %v3050, %v3237
        %v3239 = vpop.f32.mrb[0].mxu0
        %v3240 = vpop.f32.mrb[0].mxu0
        %v3241 = vadd.f32 %v3050, %v3240
        %v3242 = vpop.f32.mrb[0].mxu0
        %3243 = vmatprep.mubr.bf16.mxu0 %v3032
        %3244 = vmatmul.mubr.bf16.gmra.mrb[0].mxu0 %v3031
        %v3245 = vpop.f32.mrb[0].mxu0
        %v3246 = vadd.f32 %v3050, %v3245
        %v3247 = vpop.f32.mrb[0].mxu0
        %v3248 = vpop.f32.mrb[0].mxu0
        %v3249 = vadd.f32 %v3050, %v3248
        %v3250 = vpop.f32.mrb[0].mxu0
        %3251 = vmatprep.mubr.bf16.mxu0 %v3034
        %3252 = vmatmul.mubr.bf16.gmra.mrb[0].mxu0 %v3033
        %v3253 = vpop.f32.mrb[0].mxu0
        %v3254 = vadd.f32 %v3050, %v3253
        %v3255 = vpop.f32.mrb[0].mxu0
        %v3256 = vpop.f32.mrb[0].mxu0
        %v3257 = vadd.f32 %v3050, %v3256
        %v3258 = vpop.f32.mrb[0].mxu0
        %3259 = vmatprep.mubr.bf16.mxu0 %v3036
        %3260 = vmatmul.mubr.bf16.gmra.mrb[0].mxu0 %v3035
        %v3261 = vpop.f32.mrb[0].mxu0
        %v3262 = vadd.f32 %v3050, %v3261
        %v3263 = vpop.f32.mrb[0].mxu0
        %v3264 = vpop.f32.mrb[0].mxu0
        %v3265 = vadd.f32 %v3050, %v3264
        %v3266 = vpop.f32.mrb[0].mxu0
        %3267 = vmatprep.mubr.bf16.mxu0 %v3038
        %3268 = vmatmul.mubr.bf16.gmra.mrb[0].mxu0 %v3037
        %v3269 = vpop.f32.mrb[0].mxu0
        %v3270 = vadd.f32 %v3050, %v3269
        %v3271 = vpop.f32.mrb[0].mxu0
        %v3272 = vpop.f32.mrb[0].mxu0
        %v3273 = vadd.f32 %v3050, %v3272
        %v3274 = vpop.f32.mrb[0].mxu0
        %3275 = vmatprep.mubr.bf16.mxu0 %v3040
        %3276 = vmatmul.mubr.bf16.gmra.mrb[0].mxu0 %v3039
        %v3277 = vpop.f32.mrb[0].mxu0
        %v3278 = vadd.f32 %v3050, %v3277
        %v3279 = vpop.f32.mrb[0].mxu0
        %v3280 = vpop.f32.mrb[0].mxu0
        %v3281 = vadd.f32 %v3050, %v3280
        %v3282 = vpop.f32.mrb[0].mxu0
        %3283 = vmatprep.mubr.bf16.mxu0 %v3042
        %3284 = vmatmul.mubr.bf16.gmra.mrb[0].mxu0 %v3041
        %v3285 = vpop.f32.mrb[0].mxu0
        %v3286 = vadd.f32 %v3050, %v3285
        %v3287 = vpop.f32.mrb[0].mxu0
        %v3288 = vpop.f32.mrb[0].mxu0
        %v3289 = vadd.f32 %v3050, %v3288
        %v3290 = vpop.f32.mrb[0].mxu0
        %3291 = vmatprep.mubr.bf16.mxu0 %v3044
        %3292 = vmatmul.mubr.bf16.gmra.mrb[0].mxu0 %v3043
        %v3293 = vpop.f32.mrb[0].mxu0
        %v3294 = vadd.f32 %v3050, %v3293
        %v3295 = vpop.f32.mrb[0].mxu0
        %v3296 = vpop.f32.mrb[0].mxu0
        %v3297 = vadd.f32 %v3050, %v3296
        %v3298 = vpop.f32.mrb[0].mxu0
        %3299 = vmatprep.mubr.bf16.mxu0 %v3046
        %3300 = vmatmul.mubr.bf16.gmra.mrb[0].mxu0 %v3045
        %v3301 = vpop.f32.mrb[0].mxu0
        %v3302 = vadd.f32 %v3050, %v3301
        %v3303 = vpop.f32.mrb[0].mxu0
        %v3304 = vpop.f32.mrb[0].mxu0
        %v3305 = vadd.f32 %v3050, %v3304
        %v3306 = vpop.f32.mrb[0].mxu0
        %3307 = vdwg.mxu0
        %v3308 = vadd.f32 %v1379, %v3182
        %v3309 = vadd.f32 %v1380, %v3185
        %v3310 = vadd.f32 %v1381, %v3190
        %v3311 = vadd.f32 %v1382, %v3193
        %v3312 = vadd.f32 %v1383, %v3198
        %v3313 = vadd.f32 %v1384, %v3201
        %v3314 = vadd.f32 %v1385, %v3206
        %v3315 = vadd.f32 %v1386, %v3209
        %v3316 = vadd.f32 %v1387, %v3214
        %v3317 = vadd.f32 %v1388, %v3217
        %v3318 = vadd.f32 %v1389, %v3222
        %v3319 = vadd.f32 %v1390, %v3225
        %v3320 = vadd.f32 %v1391, %v3230
        %v3321 = vadd.f32 %v1392, %v3233
        %v3322 = vadd.f32 %v1393, %v3238
        %v3323 = vadd.f32 %v1394, %v3241
        %v3324 = vadd.f32 %v1395, %v3246
        %v3325 = vadd.f32 %v1396, %v3249
        %v3326 = vadd.f32 %v1397, %v3254
        %v3327 = vadd.f32 %v1398, %v3257
        %v3328 = vadd.f32 %v1399, %v3262
        %v3329 = vadd.f32 %v1400, %v3265
        %v3330 = vadd.f32 %v1401, %v3270
        %v3331 = vadd.f32 %v1402, %v3273
        %v3332 = vadd.f32 %v1403, %v3278
        %v3333 = vadd.f32 %v1404, %v3281
        %v3334 = vadd.f32 %v1405, %v3286
        %v3335 = vadd.f32 %v1406, %v3289
        %v3336 = vadd.f32 %v1407, %v3294
        %v3337 = vadd.f32 %v1408, %v3297
        %v3338 = vadd.f32 %v1409, %v3302
        %v3339 = vadd.f32 %v1410, %v3305
        %s3340 = scalar_lea.vmem [#allocation8], 128
        %v3341 = vld [vmem:[%s3340] sm:$0xff]
        %v3342 = vld [vmem:[%s3340 + $0x8] sm:$0xff]
        %v3343 = vld [vmem:[%s3340 + $0x10] sm:$0xff]
        %v3344 = vld [vmem:[%s3340 + $0x18] sm:$0xff]
        %v3345 = vld [vmem:[%s3340 + $0x20] sm:$0xff]
        %v3346 = vld [vmem:[%s3340 + $0x28] sm:$0xff]
        %v3347 = vld [vmem:[%s3340 + $0x30] sm:$0xff]
        %v3348 = vld [vmem:[%s3340 + $0x38] sm:$0xff]
        %v3349 = vld [vmem:[%s3340 + $0x40] sm:$0xff]
        %v3350 = vld [vmem:[%s3340 + $0x48] sm:$0xff]
        %v3351 = vld [vmem:[%s3340 + $0x50] sm:$0xff]
        %v3352 = vld [vmem:[%s3340 + $0x58] sm:$0xff]
        %v3353 = vld [vmem:[%s3340 + $0x60] sm:$0xff]
        %v3354 = vld [vmem:[%s3340 + $0x68] sm:$0xff]
        %v3355 = vld [vmem:[%s3340 + $0x70] sm:$0xff]
        %v3356 = vld [vmem:[%s3340 + $0x78] sm:$0xff]
        %s3357 = scalar_lea.vmem %s6, 1
        %v3358 = vld [vmem:[%s3357] ss:$2 sm:$0x3]
        %s3359 = scalar_lea.vmem [#allocation10], 128
        %v3360 = vld [vmem:[%s3359] sm:$0xf]
        %v3361 = vld [vmem:[%s3359 + $0x4] sm:$0xf]
        %v3362 = vld [vmem:[%s3359 + $0x8] sm:$0xf]
        %v3363 = vld [vmem:[%s3359 + $0xc] sm:$0xf]
        %v3364 = vld [vmem:[%s3359 + $0x10] sm:$0xf]
        %v3365 = vld [vmem:[%s3359 + $0x14] sm:$0xf]
        %v3366 = vld [vmem:[%s3359 + $0x18] sm:$0xf]
        %v3367 = vld [vmem:[%s3359 + $0x1c] sm:$0xf]
        %v3368 = vld [vmem:[%s3359 + $0x20] sm:$0xf]
        %v3369 = vld [vmem:[%s3359 + $0x24] sm:$0xf]
        %v3370 = vld [vmem:[%s3359 + $0x28] sm:$0xf]
        %v3371 = vld [vmem:[%s3359 + $0x2c] sm:$0xf]
        %v3372 = vld [vmem:[%s3359 + $0x30] sm:$0xf]
        %v3373 = vld [vmem:[%s3359 + $0x34] sm:$0xf]
        %v3374 = vld [vmem:[%s3359 + $0x38] sm:$0xf]
        %v3375 = vld [vmem:[%s3359 + $0x3c] sm:$0xf]
        %v3376 = vld [vmem:[%s3359 + $0x40] sm:$0xf]
        %v3377 = vld [vmem:[%s3359 + $0x44] sm:$0xf]
        %v3378 = vld [vmem:[%s3359 + $0x48] sm:$0xf]
        %v3379 = vld [vmem:[%s3359 + $0x4c] sm:$0xf]
        %v3380 = vld [vmem:[%s3359 + $0x50] sm:$0xf]
        %v3381 = vld [vmem:[%s3359 + $0x54] sm:$0xf]
        %v3382 = vld [vmem:[%s3359 + $0x58] sm:$0xf]
        %v3383 = vld [vmem:[%s3359 + $0x5c] sm:$0xf]
        %v3384 = vld [vmem:[%s3359 + $0x60] sm:$0xf]
        %v3385 = vld [vmem:[%s3359 + $0x64] sm:$0xf]
        %v3386 = vld [vmem:[%s3359 + $0x68] sm:$0xf]
        %v3387 = vld [vmem:[%s3359 + $0x6c] sm:$0xf]
        %v3388 = vld [vmem:[%s3359 + $0x70] sm:$0xf]
        %v3389 = vld [vmem:[%s3359 + $0x74] sm:$0xf]
        %v3390 = vld [vmem:[%s3359 + $0x78] sm:$0xf]
        %v3391 = vld [vmem:[%s3359 + $0x7c] sm:$0xf]
        %v3392 = vld [vmem:[%s8 + $0x1] sm:$0x1]
        %v3393 = vpack.c.bf16 %v3309, %v3308
        %v3394 = vpack.c.bf16 %v3311, %v3310
        %v3395 = vpack.c.bf16 %v3313, %v3312
        %v3396 = vpack.c.bf16 %v3315, %v3314
        %v3397 = vpack.c.bf16 %v3317, %v3316
        %v3398 = vpack.c.bf16 %v3319, %v3318
        %v3399 = vpack.c.bf16 %v3321, %v3320
        %v3400 = vpack.c.bf16 %v3323, %v3322
        %v3401 = vpack.c.bf16 %v3325, %v3324
        %v3402 = vpack.c.bf16 %v3327, %v3326
        %v3403 = vpack.c.bf16 %v3329, %v3328
        %v3404 = vpack.c.bf16 %v3331, %v3330
        %v3405 = vpack.c.bf16 %v3333, %v3332
        %v3406 = vpack.c.bf16 %v3335, %v3334
        %v3407 = vpack.c.bf16 %v3337, %v3336
        %v3408 = vpack.c.bf16 %v3339, %v3338
        %v3410 = vlaneseq
        %v3411 = vshrl.u32 %v3410, 7
        %v3412 = vsub.s32 0, %v3411
        %v3413 = vrot.slane %v3358, %v3412
        %v3414 = vlaneseq
        %v3415 = vshrl.u32 %v3414, 7
        %v3416 = vsub.s32 1, %v3415
        %v3417 = vrot.slane %v3358, %v3416
        %v3436 = vunpack.c.l.b16 %v3341
        %v3437 = vunpack.c.h.b16 %v3341
        %v3438 = vunpack.c.l.b16 %v3342
        %v3439 = vunpack.c.h.b16 %v3342
        %v3440 = vunpack.c.l.b16 %v3343
        %v3441 = vunpack.c.h.b16 %v3343
        %v3442 = vunpack.c.l.b16 %v3344
        %v3443 = vunpack.c.h.b16 %v3344
        %v3444 = vunpack.c.l.b16 %v3345
        %v3445 = vunpack.c.h.b16 %v3345
        %v3446 = vunpack.c.l.b16 %v3346
        %v3447 = vunpack.c.h.b16 %v3346
        %v3448 = vunpack.c.l.b16 %v3347
        %v3449 = vunpack.c.h.b16 %v3347
        %v3450 = vunpack.c.l.b16 %v3348
        %v3451 = vunpack.c.h.b16 %v3348
        %v3452 = vunpack.c.l.b16 %v3349
        %v3453 = vunpack.c.h.b16 %v3349
        %v3454 = vunpack.c.l.b16 %v3350
        %v3455 = vunpack.c.h.b16 %v3350
        %v3456 = vunpack.c.l.b16 %v3351
        %v3457 = vunpack.c.h.b16 %v3351
        %v3458 = vunpack.c.l.b16 %v3352
        %v3459 = vunpack.c.h.b16 %v3352
        %v3460 = vunpack.c.l.b16 %v3353
        %v3461 = vunpack.c.h.b16 %v3353
        %v3462 = vunpack.c.l.b16 %v3354
        %v3463 = vunpack.c.h.b16 %v3354
        %v3464 = vunpack.c.l.b16 %v3355
        %v3465 = vunpack.c.h.b16 %v3355
        %v3466 = vunpack.c.l.b16 %v3356
        %v3467 = vunpack.c.h.b16 %v3356
        %v3468 = vpack.c.b16 %v3438, %v3436
        %v3469 = vpack.c.b16 %v3439, %v3437
        %v3470 = vpack.c.b16 %v3442, %v3440
        %v3471 = vpack.c.b16 %v3443, %v3441
        %v3472 = vpack.c.b16 %v3446, %v3444
        %v3473 = vpack.c.b16 %v3447, %v3445
        %v3474 = vpack.c.b16 %v3450, %v3448
        %v3475 = vpack.c.b16 %v3451, %v3449
        %v3476 = vpack.c.b16 %v3454, %v3452
        %v3477 = vpack.c.b16 %v3455, %v3453
        %v3478 = vpack.c.b16 %v3458, %v3456
        %v3479 = vpack.c.b16 %v3459, %v3457
        %v3480 = vpack.c.b16 %v3462, %v3460
        %v3481 = vpack.c.b16 %v3463, %v3461
        %v3482 = vpack.c.b16 %v3466, %v3464
        %v3483 = vpack.c.b16 %v3467, %v3465
        %3500 = vmatprep.subr.bf16.mxu0 %v3469
        %3501 = vmatpush1.bf16.msra.mxu0 %v3468
        %3502 = vmatprep.subr.bf16.mxu0 %v3471
        %3503 = vmatpush1.bf16.msra.mxu0 %v3470
        %3504 = vmatprep.subr.bf16.mxu0 %v3473
        %3505 = vmatpush1.bf16.msra.mxu0 %v3472
        %3506 = vmatprep.subr.bf16.mxu0 %v3475
        %3507 = vmatpush1.bf16.msra.mxu0 %v3474
        %3508 = vmatprep.subr.bf16.mxu0 %v3477
        %3509 = vmatpush1.bf16.msra.mxu0 %v3476
        %3510 = vmatprep.subr.bf16.mxu0 %v3479
        %3511 = vmatpush1.bf16.msra.mxu0 %v3478
        %3512 = vmatprep.subr.bf16.mxu0 %v3481
        %3513 = vmatpush1.bf16.msra.mxu0 %v3480
        %3514 = vmatprep.subr.bf16.mxu0 %v3483
        %3515 = vmatpush1.bf16.msra.mxu0 %v3482
        %3516 = vmatprep.subr.bf16.mxu0 0
        %3517 = vmatpush1.bf16.msra.mxu0 0
        %3518 = vmatprep.subr.bf16.mxu0 0
        %3519 = vmatpush1.bf16.msra.mxu0 0
        %3520 = vmatprep.subr.bf16.mxu0 0
        %3521 = vmatpush1.bf16.msra.mxu0 0
        %3522 = vmatprep.subr.bf16.mxu0 0
        %3523 = vmatpush1.bf16.msra.mxu0 0
        %3524 = vmatprep.subr.bf16.mxu0 0
        %3525 = vmatpush1.bf16.msra.mxu0 0
        %3526 = vmatprep.subr.bf16.mxu0 0
        %3527 = vmatpush1.bf16.msra.mxu0 0
        %3528 = vmatprep.subr.bf16.mxu0 0
        %3529 = vmatpush1.bf16.msra.mxu0 0
        %3530 = vmatprep.subr.bf16.mxu0 0
        %3531 = vmatpush1.bf16.msra.mxu0 0
        %3532 = vmatprep.mubr.bf16.mxu0 0
        %3533 = vmatmul.mubr.bf16.gmra.mrb[0].mxu0 %v3393
        %v3534 = vpop.f32.mrb[0].mxu0
        %v3535 = vadd.f32 %v3413, %v3534
        %v3536 = vpop.f32.mrb[0].mxu0
        %v3537 = vadd.f32 %v3417, %v3536
        %v3538 = vpop.f32.mrb[0].mxu0
        %v3539 = vadd.f32 %v3413, %v3538
        %v3540 = vpop.f32.mrb[0].mxu0
        %v3541 = vadd.f32 %v3417, %v3540
        %3542 = vmatprep.mubr.bf16.mxu0 0
        %3543 = vmatmul.mubr.bf16.gmra.mrb[0].mxu0 %v3394
        %v3544 = vpop.f32.mrb[0].mxu0
        %v3545 = vadd.f32 %v3413, %v3544
        %v3546 = vpop.f32.mrb[0].mxu0
        %v3547 = vadd.f32 %v3417, %v3546
        %v3548 = vpop.f32.mrb[0].mxu0
        %v3549 = vadd.f32 %v3413, %v3548
        %v3550 = vpop.f32.mrb[0].mxu0
        %v3551 = vadd.f32 %v3417, %v3550
        %3552 = vmatprep.mubr.bf16.mxu0 0
        %3553 = vmatmul.mubr.bf16.gmra.mrb[0].mxu0 %v3395
        %v3554 = vpop.f32.mrb[0].mxu0
        %v3555 = vadd.f32 %v3413, %v3554
        %v3556 = vpop.f32.mrb[0].mxu0
        %v3557 = vadd.f32 %v3417, %v3556
        %v3558 = vpop.f32.mrb[0].mxu0
        %v3559 = vadd.f32 %v3413, %v3558
        %v3560 = vpop.f32.mrb[0].mxu0
        %v3561 = vadd.f32 %v3417, %v3560
        %3562 = vmatprep.mubr.bf16.mxu0 0
        %3563 = vmatmul.mubr.bf16.gmra.mrb[0].mxu0 %v3396
        %v3564 = vpop.f32.mrb[0].mxu0
        %v3565 = vadd.f32 %v3413, %v3564
        %v3566 = vpop.f32.mrb[0].mxu0
        %v3567 = vadd.f32 %v3417, %v3566
        %v3568 = vpop.f32.mrb[0].mxu0
        %v3569 = vadd.f32 %v3413, %v3568
        %v3570 = vpop.f32.mrb[0].mxu0
        %v3571 = vadd.f32 %v3417, %v3570
        %3572 = vmatprep.mubr.bf16.mxu0 0
        %3573 = vmatmul.mubr.bf16.gmra.mrb[0].mxu0 %v3397
        %v3574 = vpop.f32.mrb[0].mxu0
        %v3575 = vadd.f32 %v3413, %v3574
        %v3576 = vpop.f32.mrb[0].mxu0
        %v3577 = vadd.f32 %v3417, %v3576
        %v3578 = vpop.f32.mrb[0].mxu0
        %v3579 = vadd.f32 %v3413, %v3578
        %v3580 = vpop.f32.mrb[0].mxu0
        %v3581 = vadd.f32 %v3417, %v3580
        %3582 = vmatprep.mubr.bf16.mxu0 0
        %3583 = vmatmul.mubr.bf16.gmra.mrb[0].mxu0 %v3398
        %v3584 = vpop.f32.mrb[0].mxu0
        %v3585 = vadd.f32 %v3413, %v3584
        %v3586 = vpop.f32.mrb[0].mxu0
        %v3587 = vadd.f32 %v3417, %v3586
        %v3588 = vpop.f32.mrb[0].mxu0
        %v3589 = vadd.f32 %v3413, %v3588
        %v3590 = vpop.f32.mrb[0].mxu0
        %v3591 = vadd.f32 %v3417, %v3590
        %3592 = vmatprep.mubr.bf16.mxu0 0
        %3593 = vmatmul.mubr.bf16.gmra.mrb[0].mxu0 %v3399
        %v3594 = vpop.f32.mrb[0].mxu0
        %v3595 = vadd.f32 %v3413, %v3594
        %v3596 = vpop.f32.mrb[0].mxu0
        %v3597 = vadd.f32 %v3417, %v3596
        %v3598 = vpop.f32.mrb[0].mxu0
        %v3599 = vadd.f32 %v3413, %v3598
        %v3600 = vpop.f32.mrb[0].mxu0
        %v3601 = vadd.f32 %v3417, %v3600
        %3602 = vmatprep.mubr.bf16.mxu0 0
        %3603 = vmatmul.mubr.bf16.gmra.mrb[0].mxu0 %v3400
        %v3604 = vpop.f32.mrb[0].mxu0
        %v3605 = vadd.f32 %v3413, %v3604
        %v3606 = vpop.f32.mrb[0].mxu0
        %v3607 = vadd.f32 %v3417, %v3606
        %v3608 = vpop.f32.mrb[0].mxu0
        %v3609 = vadd.f32 %v3413, %v3608
        %v3610 = vpop.f32.mrb[0].mxu0
        %v3611 = vadd.f32 %v3417, %v3610
        %3612 = vmatprep.mubr.bf16.mxu0 0
        %3613 = vmatmul.mubr.bf16.gmra.mrb[0].mxu0 %v3401
        %v3614 = vpop.f32.mrb[0].mxu0
        %v3615 = vadd.f32 %v3413, %v3614
        %v3616 = vpop.f32.mrb[0].mxu0
        %v3617 = vadd.f32 %v3417, %v3616
        %v3618 = vpop.f32.mrb[0].mxu0
        %v3619 = vadd.f32 %v3413, %v3618
        %v3620 = vpop.f32.mrb[0].mxu0
        %v3621 = vadd.f32 %v3417, %v3620
        %3622 = vmatprep.mubr.bf16.mxu0 0
        %3623 = vmatmul.mubr.bf16.gmra.mrb[0].mxu0 %v3402
        %v3624 = vpop.f32.mrb[0].mxu0
        %v3625 = vadd.f32 %v3413, %v3624
        %v3626 = vpop.f32.mrb[0].mxu0
        %v3627 = vadd.f32 %v3417, %v3626
        %v3628 = vpop.f32.mrb[0].mxu0
        %v3629 = vadd.f32 %v3413, %v3628
        %v3630 = vpop.f32.mrb[0].mxu0
        %v3631 = vadd.f32 %v3417, %v3630
        %3632 = vmatprep.mubr.bf16.mxu0 0
        %3633 = vmatmul.mubr.bf16.gmra.mrb[0].mxu0 %v3403
        %v3634 = vpop.f32.mrb[0].mxu0
        %v3635 = vadd.f32 %v3413, %v3634
        %v3636 = vpop.f32.mrb[0].mxu0
        %v3637 = vadd.f32 %v3417, %v3636
        %v3638 = vpop.f32.mrb[0].mxu0
        %v3639 = vadd.f32 %v3413, %v3638
        %v3640 = vpop.f32.mrb[0].mxu0
        %v3641 = vadd.f32 %v3417, %v3640
        %3642 = vmatprep.mubr.bf16.mxu0 0
        %3643 = vmatmul.mubr.bf16.gmra.mrb[0].mxu0 %v3404
        %v3644 = vpop.f32.mrb[0].mxu0
        %v3645 = vadd.f32 %v3413, %v3644
        %v3646 = vpop.f32.mrb[0].mxu0
        %v3647 = vadd.f32 %v3417, %v3646
        %v3648 = vpop.f32.mrb[0].mxu0
        %v3649 = vadd.f32 %v3413, %v3648
        %v3650 = vpop.f32.mrb[0].mxu0
        %v3651 = vadd.f32 %v3417, %v3650
        %3652 = vmatprep.mubr.bf16.mxu0 0
        %3653 = vmatmul.mubr.bf16.gmra.mrb[0].mxu0 %v3405
        %v3654 = vpop.f32.mrb[0].mxu0
        %v3655 = vadd.f32 %v3413, %v3654
        %v3656 = vpop.f32.mrb[0].mxu0
        %v3657 = vadd.f32 %v3417, %v3656
        %v3658 = vpop.f32.mrb[0].mxu0
        %v3659 = vadd.f32 %v3413, %v3658
        %v3660 = vpop.f32.mrb[0].mxu0
        %v3661 = vadd.f32 %v3417, %v3660
        %3662 = vmatprep.mubr.bf16.mxu0 0
        %3663 = vmatmul.mubr.bf16.gmra.mrb[0].mxu0 %v3406
        %v3664 = vpop.f32.mrb[0].mxu0
        %v3665 = vadd.f32 %v3413, %v3664
        %v3666 = vpop.f32.mrb[0].mxu0
        %v3667 = vadd.f32 %v3417, %v3666
        %v3668 = vpop.f32.mrb[0].mxu0
        %v3669 = vadd.f32 %v3413, %v3668
        %v3670 = vpop.f32.mrb[0].mxu0
        %v3671 = vadd.f32 %v3417, %v3670
        %3672 = vmatprep.mubr.bf16.mxu0 0
        %3673 = vmatmul.mubr.bf16.gmra.mrb[0].mxu0 %v3407
        %v3674 = vpop.f32.mrb[0].mxu0
        %v3675 = vadd.f32 %v3413, %v3674
        %v3676 = vpop.f32.mrb[0].mxu0
        %v3677 = vadd.f32 %v3417, %v3676
        %v3678 = vpop.f32.mrb[0].mxu0
        %v3679 = vadd.f32 %v3413, %v3678
        %v3680 = vpop.f32.mrb[0].mxu0
        %v3681 = vadd.f32 %v3417, %v3680
        %3682 = vmatprep.mubr.bf16.mxu0 0
        %3683 = vmatmul.mubr.bf16.gmra.mrb[0].mxu0 %v3408
        %v3684 = vpop.f32.mrb[0].mxu0
        %v3685 = vadd.f32 %v3413, %v3684
        %v3686 = vpop.f32.mrb[0].mxu0
        %v3687 = vadd.f32 %v3417, %v3686
        %v3688 = vpop.f32.mrb[0].mxu0
        %v3689 = vadd.f32 %v3413, %v3688
        %v3690 = vpop.f32.mrb[0].mxu0
        %v3691 = vadd.f32 %v3417, %v3690
        %3692 = vdwg.mxu0
        %v3693 = vpack.c.bf16 %v3539, %v3535
        %v3694 = vpack.c.bf16 %v3541, %v3537
        %v3695 = vpack.c.bf16 %v3549, %v3545
        %v3696 = vpack.c.bf16 %v3551, %v3547
        %v3697 = vpack.c.bf16 %v3559, %v3555
        %v3698 = vpack.c.bf16 %v3561, %v3557
        %v3699 = vpack.c.bf16 %v3569, %v3565
        %v3700 = vpack.c.bf16 %v3571, %v3567
        %v3701 = vpack.c.bf16 %v3579, %v3575
        %v3702 = vpack.c.bf16 %v3581, %v3577
        %v3703 = vpack.c.bf16 %v3589, %v3585
        %v3704 = vpack.c.bf16 %v3591, %v3587
        %v3705 = vpack.c.bf16 %v3599, %v3595
        %v3706 = vpack.c.bf16 %v3601, %v3597
        %v3707 = vpack.c.bf16 %v3609, %v3605
        %v3708 = vpack.c.bf16 %v3611, %v3607
        %v3709 = vpack.c.bf16 %v3619, %v3615
        %v3710 = vpack.c.bf16 %v3621, %v3617
        %v3711 = vpack.c.bf16 %v3629, %v3625
        %v3712 = vpack.c.bf16 %v3631, %v3627
        %v3713 = vpack.c.bf16 %v3639, %v3635
        %v3714 = vpack.c.bf16 %v3641, %v3637
        %v3715 = vpack.c.bf16 %v3649, %v3645
        %v3716 = vpack.c.bf16 %v3651, %v3647
        %v3717 = vpack.c.bf16 %v3659, %v3655
        %v3718 = vpack.c.bf16 %v3661, %v3657
        %v3719 = vpack.c.bf16 %v3669, %v3665
        %v3720 = vpack.c.bf16 %v3671, %v3667
        %v3721 = vpack.c.bf16 %v3679, %v3675
        %v3722 = vpack.c.bf16 %v3681, %v3677
        %v3723 = vpack.c.bf16 %v3689, %v3685
        %v3724 = vpack.c.bf16 %v3691, %v3687
        %v3725 = vmul.bf16 %v3693, %v3693
        %v3726 = vmul.bf16 %v3694, %v3694
        %v3727 = vmul.bf16 %v3695, %v3695
        %v3728 = vmul.bf16 %v3696, %v3696
        %v3729 = vmul.bf16 %v3697, %v3697
        %v3730 = vmul.bf16 %v3698, %v3698
        %v3731 = vmul.bf16 %v3699, %v3699
        %v3732 = vmul.bf16 %v3700, %v3700
        %v3733 = vmul.bf16 %v3701, %v3701
        %v3734 = vmul.bf16 %v3702, %v3702
        %v3735 = vmul.bf16 %v3703, %v3703
        %v3736 = vmul.bf16 %v3704, %v3704
        %v3737 = vmul.bf16 %v3705, %v3705
        %v3738 = vmul.bf16 %v3706, %v3706
        %v3739 = vmul.bf16 %v3707, %v3707
        %v3740 = vmul.bf16 %v3708, %v3708
        %v3741 = vmul.bf16 %v3709, %v3709
        %v3742 = vmul.bf16 %v3710, %v3710
        %v3743 = vmul.bf16 %v3711, %v3711
        %v3744 = vmul.bf16 %v3712, %v3712
        %v3745 = vmul.bf16 %v3713, %v3713
        %v3746 = vmul.bf16 %v3714, %v3714
        %v3747 = vmul.bf16 %v3715, %v3715
        %v3748 = vmul.bf16 %v3716, %v3716
        %v3749 = vmul.bf16 %v3717, %v3717
        %v3750 = vmul.bf16 %v3718, %v3718
        %v3751 = vmul.bf16 %v3719, %v3719
        %v3752 = vmul.bf16 %v3720, %v3720
        %v3753 = vmul.bf16 %v3721, %v3721
        %v3754 = vmul.bf16 %v3722, %v3722
        %v3755 = vmul.bf16 %v3723, %v3723
        %v3756 = vmul.bf16 %v3724, %v3724
        %v3757 = vmul.bf16 %v3693, %v3725
        %v3758 = vmul.bf16 %v3694, %v3726
        %v3759 = vmul.bf16 %v3695, %v3727
        %v3760 = vmul.bf16 %v3696, %v3728
        %v3761 = vmul.bf16 %v3697, %v3729
        %v3762 = vmul.bf16 %v3698, %v3730
        %v3763 = vmul.bf16 %v3699, %v3731
        %v3764 = vmul.bf16 %v3700, %v3732
        %v3765 = vmul.bf16 %v3701, %v3733
        %v3766 = vmul.bf16 %v3702, %v3734
        %v3767 = vmul.bf16 %v3703, %v3735
        %v3768 = vmul.bf16 %v3704, %v3736
        %v3769 = vmul.bf16 %v3705, %v3737
        %v3770 = vmul.bf16 %v3706, %v3738
        %v3771 = vmul.bf16 %v3707, %v3739
        %v3772 = vmul.bf16 %v3708, %v3740
        %v3773 = vmul.bf16 %v3709, %v3741
        %v3774 = vmul.bf16 %v3710, %v3742
        %v3775 = vmul.bf16 %v3711, %v3743
        %v3776 = vmul.bf16 %v3712, %v3744
        %v3777 = vmul.bf16 %v3713, %v3745
        %v3778 = vmul.bf16 %v3714, %v3746
        %v3779 = vmul.bf16 %v3715, %v3747
        %v3780 = vmul.bf16 %v3716, %v3748
        %v3781 = vmul.bf16 %v3717, %v3749
        %v3782 = vmul.bf16 %v3718, %v3750
        %v3783 = vmul.bf16 %v3719, %v3751
        %v3784 = vmul.bf16 %v3720, %v3752
        %v3785 = vmul.bf16 %v3721, %v3753
        %v3786 = vmul.bf16 %v3722, %v3754
        %v3787 = vmul.bf16 %v3723, %v3755
        %v3788 = vmul.bf16 %v3724, %v3756
        %v3789 = vmul.bf16 %v3757, 1027030327
        %v3790 = vmul.bf16 %v3758, 1027030327
        %v3791 = vmul.bf16 %v3759, 1027030327
        %v3792 = vmul.bf16 %v3760, 1027030327
        %v3793 = vmul.bf16 %v3761, 1027030327
        %v3794 = vmul.bf16 %v3762, 1027030327
        %v3795 = vmul.bf16 %v3763, 1027030327
        %v3796 = vmul.bf16 %v3764, 1027030327
        %v3797 = vmul.bf16 %v3765, 1027030327
        %v3798 = vmul.bf16 %v3766, 1027030327
        %v3799 = vmul.bf16 %v3767, 1027030327
        %v3800 = vmul.bf16 %v3768, 1027030327
        %v3801 = vmul.bf16 %v3769, 1027030327
        %v3802 = vmul.bf16 %v3770, 1027030327
        %v3803 = vmul.bf16 %v3771, 1027030327
        %v3804 = vmul.bf16 %v3772, 1027030327
        %v3805 = vmul.bf16 %v3773, 1027030327
        %v3806 = vmul.bf16 %v3774, 1027030327
        %v3807 = vmul.bf16 %v3775, 1027030327
        %v3808 = vmul.bf16 %v3776, 1027030327
        %v3809 = vmul.bf16 %v3777, 1027030327
        %v3810 = vmul.bf16 %v3778, 1027030327
        %v3811 = vmul.bf16 %v3779, 1027030327
        %v3812 = vmul.bf16 %v3780, 1027030327
        %v3813 = vmul.bf16 %v3781, 1027030327
        %v3814 = vmul.bf16 %v3782, 1027030327
        %v3815 = vmul.bf16 %v3783, 1027030327
        %v3816 = vmul.bf16 %v3784, 1027030327
        %v3817 = vmul.bf16 %v3785, 1027030327
        %v3818 = vmul.bf16 %v3786, 1027030327
        %v3819 = vmul.bf16 %v3787, 1027030327
        %v3820 = vmul.bf16 %v3788, 1027030327
        %v3821 = vadd.bf16 %v3693, %v3789
        %v3822 = vadd.bf16 %v3694, %v3790
        %v3823 = vadd.bf16 %v3695, %v3791
        %v3824 = vadd.bf16 %v3696, %v3792
        %v3825 = vadd.bf16 %v3697, %v3793
        %v3826 = vadd.bf16 %v3698, %v3794
        %v3827 = vadd.bf16 %v3699, %v3795
        %v3828 = vadd.bf16 %v3700, %v3796
        %v3829 = vadd.bf16 %v3701, %v3797
        %v3830 = vadd.bf16 %v3702, %v3798
        %v3831 = vadd.bf16 %v3703, %v3799
        %v3832 = vadd.bf16 %v3704, %v3800
        %v3833 = vadd.bf16 %v3705, %v3801
        %v3834 = vadd.bf16 %v3706, %v3802
        %v3835 = vadd.bf16 %v3707, %v3803
        %v3836 = vadd.bf16 %v3708, %v3804
        %v3837 = vadd.bf16 %v3709, %v3805
        %v3838 = vadd.bf16 %v3710, %v3806
        %v3839 = vadd.bf16 %v3711, %v3807
        %v3840 = vadd.bf16 %v3712, %v3808
        %v3841 = vadd.bf16 %v3713, %v3809
        %v3842 = vadd.bf16 %v3714, %v3810
        %v3843 = vadd.bf16 %v3715, %v3811
        %v3844 = vadd.bf16 %v3716, %v3812
        %v3845 = vadd.bf16 %v3717, %v3813
        %v3846 = vadd.bf16 %v3718, %v3814
        %v3847 = vadd.bf16 %v3719, %v3815
        %v3848 = vadd.bf16 %v3720, %v3816
        %v3849 = vadd.bf16 %v3721, %v3817
        %v3850 = vadd.bf16 %v3722, %v3818
        %v3851 = vadd.bf16 %v3723, %v3819
        %v3852 = vadd.bf16 %v3724, %v3820
        %v3853 = vmul.bf16 %v3821, 1061961548
        %v3854 = vmul.bf16 %v3822, 1061961548
        %v3855 = vmul.bf16 %v3823, 1061961548
        %v3856 = vmul.bf16 %v3824, 1061961548
        %v3857 = vmul.bf16 %v3825, 1061961548
        %v3858 = vmul.bf16 %v3826, 1061961548
        %v3859 = vmul.bf16 %v3827, 1061961548
        %v3860 = vmul.bf16 %v3828, 1061961548
        %v3861 = vmul.bf16 %v3829, 1061961548
        %v3862 = vmul.bf16 %v3830, 1061961548
        %v3863 = vmul.bf16 %v3831, 1061961548
        %v3864 = vmul.bf16 %v3832, 1061961548
        %v3865 = vmul.bf16 %v3833, 1061961548
        %v3866 = vmul.bf16 %v3834, 1061961548
        %v3867 = vmul.bf16 %v3835, 1061961548
        %v3868 = vmul.bf16 %v3836, 1061961548
        %v3869 = vmul.bf16 %v3837, 1061961548
        %v3870 = vmul.bf16 %v3838, 1061961548
        %v3871 = vmul.bf16 %v3839, 1061961548
        %v3872 = vmul.bf16 %v3840, 1061961548
        %v3873 = vmul.bf16 %v3841, 1061961548
        %v3874 = vmul.bf16 %v3842, 1061961548
        %v3875 = vmul.bf16 %v3843, 1061961548
        %v3876 = vmul.bf16 %v3844, 1061961548
        %v3877 = vmul.bf16 %v3845, 1061961548
        %v3878 = vmul.bf16 %v3846, 1061961548
        %v3879 = vmul.bf16 %v3847, 1061961548
        %v3880 = vmul.bf16 %v3848, 1061961548
        %v3881 = vmul.bf16 %v3849, 1061961548
        %v3882 = vmul.bf16 %v3850, 1061961548
        %v3883 = vmul.bf16 %v3851, 1061961548
        %v3884 = vmul.bf16 %v3852, 1061961548
        %v3885 = vtanh.bf16.pop %v3853
        %v3886 = vtanh.bf16.pop %v3854
        %v3887 = vtanh.bf16.pop %v3855
        %v3888 = vtanh.bf16.pop %v3856
        %v3889 = vtanh.bf16.pop %v3857
        %v3890 = vtanh.bf16.pop %v3858
        %v3891 = vtanh.bf16.pop %v3859
        %v3892 = vtanh.bf16.pop %v3860
        %v3893 = vtanh.bf16.pop %v3861
        %v3894 = vtanh.bf16.pop %v3862
        %v3895 = vtanh.bf16.pop %v3863
        %v3896 = vtanh.bf16.pop %v3864
        %v3897 = vtanh.bf16.pop %v3865
        %v3898 = vtanh.bf16.pop %v3866
        %v3899 = vtanh.bf16.pop %v3867
        %v3900 = vtanh.bf16.pop %v3868
        %v3901 = vtanh.bf16.pop %v3869
        %v3902 = vtanh.bf16.pop %v3870
        %v3903 = vtanh.bf16.pop %v3871
        %v3904 = vtanh.bf16.pop %v3872
        %v3905 = vtanh.bf16.pop %v3873
        %v3906 = vtanh.bf16.pop %v3874
        %v3907 = vtanh.bf16.pop %v3875
        %v3908 = vtanh.bf16.pop %v3876
        %v3909 = vtanh.bf16.pop %v3877
        %v3910 = vtanh.bf16.pop %v3878
        %v3911 = vtanh.bf16.pop %v3879
        %v3912 = vtanh.bf16.pop %v3880
        %v3913 = vtanh.bf16.pop %v3881
        %v3914 = vtanh.bf16.pop %v3882
        %v3915 = vtanh.bf16.pop %v3883
        %v3916 = vtanh.bf16.pop %v3884
        %v3917 = vadd.bf16 %v3885, 1065369472
        %v3918 = vadd.bf16 %v3886, 1065369472
        %v3919 = vadd.bf16 %v3887, 1065369472
        %v3920 = vadd.bf16 %v3888, 1065369472
        %v3921 = vadd.bf16 %v3889, 1065369472
        %v3922 = vadd.bf16 %v3890, 1065369472
        %v3923 = vadd.bf16 %v3891, 1065369472
        %v3924 = vadd.bf16 %v3892, 1065369472
        %v3925 = vadd.bf16 %v3893, 1065369472
        %v3926 = vadd.bf16 %v3894, 1065369472
        %v3927 = vadd.bf16 %v3895, 1065369472
        %v3928 = vadd.bf16 %v3896, 1065369472
        %v3929 = vadd.bf16 %v3897, 1065369472
        %v3930 = vadd.bf16 %v3898, 1065369472
        %v3931 = vadd.bf16 %v3899, 1065369472
        %v3932 = vadd.bf16 %v3900, 1065369472
        %v3933 = vadd.bf16 %v3901, 1065369472
        %v3934 = vadd.bf16 %v3902, 1065369472
        %v3935 = vadd.bf16 %v3903, 1065369472
        %v3936 = vadd.bf16 %v3904, 1065369472
        %v3937 = vadd.bf16 %v3905, 1065369472
        %v3938 = vadd.bf16 %v3906, 1065369472
        %v3939 = vadd.bf16 %v3907, 1065369472
        %v3940 = vadd.bf16 %v3908, 1065369472
        %v3941 = vadd.bf16 %v3909, 1065369472
        %v3942 = vadd.bf16 %v3910, 1065369472
        %v3943 = vadd.bf16 %v3911, 1065369472
        %v3944 = vadd.bf16 %v3912, 1065369472
        %v3945 = vadd.bf16 %v3913, 1065369472
        %v3946 = vadd.bf16 %v3914, 1065369472
        %v3947 = vadd.bf16 %v3915, 1065369472
        %v3948 = vadd.bf16 %v3916, 1065369472
        %v3949 = vmul.bf16 %v3917, 1056980736
        %v3950 = vmul.bf16 %v3918, 1056980736
        %v3951 = vmul.bf16 %v3919, 1056980736
        %v3952 = vmul.bf16 %v3920, 1056980736
        %v3953 = vmul.bf16 %v3921, 1056980736
        %v3954 = vmul.bf16 %v3922, 1056980736
        %v3955 = vmul.bf16 %v3923, 1056980736
        %v3956 = vmul.bf16 %v3924, 1056980736
        %v3957 = vmul.bf16 %v3925, 1056980736
        %v3958 = vmul.bf16 %v3926, 1056980736
        %v3959 = vmul.bf16 %v3927, 1056980736
        %v3960 = vmul.bf16 %v3928, 1056980736
        %v3961 = vmul.bf16 %v3929, 1056980736
        %v3962 = vmul.bf16 %v3930, 1056980736
        %v3963 = vmul.bf16 %v3931, 1056980736
        %v3964 = vmul.bf16 %v3932, 1056980736
        %v3965 = vmul.bf16 %v3933, 1056980736
        %v3966 = vmul.bf16 %v3934, 1056980736
        %v3967 = vmul.bf16 %v3935, 1056980736
        %v3968 = vmul.bf16 %v3936, 1056980736
        %v3969 = vmul.bf16 %v3937, 1056980736
        %v3970 = vmul.bf16 %v3938, 1056980736
        %v3971 = vmul.bf16 %v3939, 1056980736
        %v3972 = vmul.bf16 %v3940, 1056980736
        %v3973 = vmul.bf16 %v3941, 1056980736
        %v3974 = vmul.bf16 %v3942, 1056980736
        %v3975 = vmul.bf16 %v3943, 1056980736
        %v3976 = vmul.bf16 %v3944, 1056980736
        %v3977 = vmul.bf16 %v3945, 1056980736
        %v3978 = vmul.bf16 %v3946, 1056980736
        %v3979 = vmul.bf16 %v3947, 1056980736
        %v3980 = vmul.bf16 %v3948, 1056980736
        %v3981 = vmul.bf16 %v3693, %v3949
        %v3982 = vmul.bf16 %v3694, %v3950
        %v3983 = vmul.bf16 %v3695, %v3951
        %v3984 = vmul.bf16 %v3696, %v3952
        %v3985 = vmul.bf16 %v3697, %v3953
        %v3986 = vmul.bf16 %v3698, %v3954
        %v3987 = vmul.bf16 %v3699, %v3955
        %v3988 = vmul.bf16 %v3700, %v3956
        %v3989 = vmul.bf16 %v3701, %v3957
        %v3990 = vmul.bf16 %v3702, %v3958
        %v3991 = vmul.bf16 %v3703, %v3959
        %v3992 = vmul.bf16 %v3704, %v3960
        %v3993 = vmul.bf16 %v3705, %v3961
        %v3994 = vmul.bf16 %v3706, %v3962
        %v3995 = vmul.bf16 %v3707, %v3963
        %v3996 = vmul.bf16 %v3708, %v3964
        %v3997 = vmul.bf16 %v3709, %v3965
        %v3998 = vmul.bf16 %v3710, %v3966
        %v3999 = vmul.bf16 %v3711, %v3967
        %v4000 = vmul.bf16 %v3712, %v3968
        %v4001 = vmul.bf16 %v3713, %v3969
        %v4002 = vmul.bf16 %v3714, %v3970
        %v4003 = vmul.bf16 %v3715, %v3971
        %v4004 = vmul.bf16 %v3716, %v3972
        %v4005 = vmul.bf16 %v3717, %v3973
        %v4006 = vmul.bf16 %v3718, %v3974
        %v4007 = vmul.bf16 %v3719, %v3975
        %v4008 = vmul.bf16 %v3720, %v3976
        %v4009 = vmul.bf16 %v3721, %v3977
        %v4010 = vmul.bf16 %v3722, %v3978
        %v4011 = vmul.bf16 %v3723, %v3979
        %v4012 = vmul.bf16 %v3724, %v3980
        %v4013 = vlaneseq
        %v4014 = vshrl.u32 %v4013, 7
        %v4015 = vsub.s32 0, %v4014
        %v4016 = vrot.slane %v3392, %v4015
        %v4049 = vunpack.c.l.b16 %v3360
        %v4050 = vunpack.c.l.b16 %v3361
        %v4051 = vunpack.c.l.b16 %v3362
        %v4052 = vunpack.c.l.b16 %v3363
        %v4053 = vunpack.c.l.b16 %v3364
        %v4054 = vunpack.c.l.b16 %v3365
        %v4055 = vunpack.c.l.b16 %v3366
        %v4056 = vunpack.c.l.b16 %v3367
        %v4057 = vunpack.c.l.b16 %v3368
        %v4058 = vunpack.c.l.b16 %v3369
        %v4059 = vunpack.c.l.b16 %v3370
        %v4060 = vunpack.c.l.b16 %v3371
        %v4061 = vunpack.c.l.b16 %v3372
        %v4062 = vunpack.c.l.b16 %v3373
        %v4063 = vunpack.c.l.b16 %v3374
        %v4064 = vunpack.c.l.b16 %v3375
        %v4065 = vunpack.c.l.b16 %v3376
        %v4066 = vunpack.c.l.b16 %v3377
        %v4067 = vunpack.c.l.b16 %v3378
        %v4068 = vunpack.c.l.b16 %v3379
        %v4069 = vunpack.c.l.b16 %v3380
        %v4070 = vunpack.c.l.b16 %v3381
        %v4071 = vunpack.c.l.b16 %v3382
        %v4072 = vunpack.c.l.b16 %v3383
        %v4073 = vunpack.c.l.b16 %v3384
        %v4074 = vunpack.c.l.b16 %v3385
        %v4075 = vunpack.c.l.b16 %v3386
        %v4076 = vunpack.c.l.b16 %v3387
        %v4077 = vunpack.c.l.b16 %v3388
        %v4078 = vunpack.c.l.b16 %v3389
        %v4079 = vunpack.c.l.b16 %v3390
        %v4080 = vunpack.c.l.b16 %v3391
        %v4081 = vpack.c.b16 %v4050, %v4049
        %v4082 = vpack.c.b16 %v4052, %v4051
        %v4083 = vpack.c.b16 %v4054, %v4053
        %v4084 = vpack.c.b16 %v4056, %v4055
        %v4085 = vpack.c.b16 %v4058, %v4057
        %v4086 = vpack.c.b16 %v4060, %v4059
        %v4087 = vpack.c.b16 %v4062, %v4061
        %v4088 = vpack.c.b16 %v4064, %v4063
        %v4089 = vpack.c.b16 %v4066, %v4065
        %v4090 = vpack.c.b16 %v4068, %v4067
        %v4091 = vpack.c.b16 %v4070, %v4069
        %v4092 = vpack.c.b16 %v4072, %v4071
        %v4093 = vpack.c.b16 %v4074, %v4073
        %v4094 = vpack.c.b16 %v4076, %v4075
        %v4095 = vpack.c.b16 %v4078, %v4077
        %v4096 = vpack.c.b16 %v4080, %v4079
        %4113 = vmatprep.subr.bf16.mxu0 0
        %4114 = vmatpush1.bf16.msra.mxu0 %v4081
        %4115 = vmatprep.subr.bf16.mxu0 0
        %4116 = vmatpush1.bf16.msra.mxu0 %v4082
        %4117 = vmatprep.subr.bf16.mxu0 0
        %4118 = vmatpush1.bf16.msra.mxu0 %v4083
        %4119 = vmatprep.subr.bf16.mxu0 0
        %4120 = vmatpush1.bf16.msra.mxu0 %v4084
        %4121 = vmatprep.subr.bf16.mxu0 0
        %4122 = vmatpush1.bf16.msra.mxu0 %v4085
        %4123 = vmatprep.subr.bf16.mxu0 0
        %4124 = vmatpush1.bf16.msra.mxu0 %v4086
        %4125 = vmatprep.subr.bf16.mxu0 0
        %4126 = vmatpush1.bf16.msra.mxu0 %v4087
        %4127 = vmatprep.subr.bf16.mxu0 0
        %4128 = vmatpush1.bf16.msra.mxu0 %v4088
        %4129 = vmatprep.subr.bf16.mxu0 0
        %4130 = vmatpush1.bf16.msra.mxu0 %v4089
        %4131 = vmatprep.subr.bf16.mxu0 0
        %4132 = vmatpush1.bf16.msra.mxu0 %v4090
        %4133 = vmatprep.subr.bf16.mxu0 0
        %4134 = vmatpush1.bf16.msra.mxu0 %v4091
        %4135 = vmatprep.subr.bf16.mxu0 0
        %4136 = vmatpush1.bf16.msra.mxu0 %v4092
        %4137 = vmatprep.subr.bf16.mxu0 0
        %4138 = vmatpush1.bf16.msra.mxu0 %v4093
        %4139 = vmatprep.subr.bf16.mxu0 0
        %4140 = vmatpush1.bf16.msra.mxu0 %v4094
        %4141 = vmatprep.subr.bf16.mxu0 0
        %4142 = vmatpush1.bf16.msra.mxu0 %v4095
        %4143 = vmatprep.subr.bf16.mxu0 0
        %4144 = vmatpush1.bf16.msra.mxu0 %v4096
        %4145 = vmatprep.mubr.bf16.mxu0 %v3982
        %4146 = vmatmul.mubr.bf16.gmra.mrb[0].mxu0 %v3981
        %v4147 = vpop.f32.mrb[0].mxu0
        %v4148 = vadd.f32 %v4016, %v4147
        %v4149 = vpop.f32.mrb[0].mxu0
        %v4150 = vpop.f32.mrb[0].mxu0
        %v4151 = vadd.f32 %v4016, %v4150
        %v4152 = vpop.f32.mrb[0].mxu0
        %4153 = vmatprep.mubr.bf16.mxu0 %v3984
        %4154 = vmatmul.mubr.bf16.gmra.mrb[0].mxu0 %v3983
        %v4155 = vpop.f32.mrb[0].mxu0
        %v4156 = vadd.f32 %v4016, %v4155
        %v4157 = vpop.f32.mrb[0].mxu0
        %v4158 = vpop.f32.mrb[0].mxu0
        %v4159 = vadd.f32 %v4016, %v4158
        %v4160 = vpop.f32.mrb[0].mxu0
        %4161 = vmatprep.mubr.bf16.mxu0 %v3986
        %4162 = vmatmul.mubr.bf16.gmra.mrb[0].mxu0 %v3985
        %v4163 = vpop.f32.mrb[0].mxu0
        %v4164 = vadd.f32 %v4016, %v4163
        %v4165 = vpop.f32.mrb[0].mxu0
        %v4166 = vpop.f32.mrb[0].mxu0
        %v4167 = vadd.f32 %v4016, %v4166
        %v4168 = vpop.f32.mrb[0].mxu0
        %4169 = vmatprep.mubr.bf16.mxu0 %v3988
        %4170 = vmatmul.mubr.bf16.gmra.mrb[0].mxu0 %v3987
        %v4171 = vpop.f32.mrb[0].mxu0
        %v4172 = vadd.f32 %v4016, %v4171
        %v4173 = vpop.f32.mrb[0].mxu0
        %v4174 = vpop.f32.mrb[0].mxu0
        %v4175 = vadd.f32 %v4016, %v4174
        %v4176 = vpop.f32.mrb[0].mxu0
        %4177 = vmatprep.mubr.bf16.mxu0 %v3990
        %4178 = vmatmul.mubr.bf16.gmra.mrb[0].mxu0 %v3989
        %v4179 = vpop.f32.mrb[0].mxu0
        %v4180 = vadd.f32 %v4016, %v4179
        %v4181 = vpop.f32.mrb[0].mxu0
        %v4182 = vpop.f32.mrb[0].mxu0
        %v4183 = vadd.f32 %v4016, %v4182
        %v4184 = vpop.f32.mrb[0].mxu0
        %4185 = vmatprep.mubr.bf16.mxu0 %v3992
        %4186 = vmatmul.mubr.bf16.gmra.mrb[0].mxu0 %v3991
        %v4187 = vpop.f32.mrb[0].mxu0
        %v4188 = vadd.f32 %v4016, %v4187
        %v4189 = vpop.f32.mrb[0].mxu0
        %v4190 = vpop.f32.mrb[0].mxu0
        %v4191 = vadd.f32 %v4016, %v4190
        %v4192 = vpop.f32.mrb[0].mxu0
        %4193 = vmatprep.mubr.bf16.mxu0 %v3994
        %4194 = vmatmul.mubr.bf16.gmra.mrb[0].mxu0 %v3993
        %v4195 = vpop.f32.mrb[0].mxu0
        %v4196 = vadd.f32 %v4016, %v4195
        %v4197 = vpop.f32.mrb[0].mxu0
        %v4198 = vpop.f32.mrb[0].mxu0
        %v4199 = vadd.f32 %v4016, %v4198
        %v4200 = vpop.f32.mrb[0].mxu0
        %4201 = vmatprep.mubr.bf16.mxu0 %v3996
        %4202 = vmatmul.mubr.bf16.gmra.mrb[0].mxu0 %v3995
        %v4203 = vpop.f32.mrb[0].mxu0
        %v4204 = vadd.f32 %v4016, %v4203
        %v4205 = vpop.f32.mrb[0].mxu0
        %v4206 = vpop.f32.mrb[0].mxu0
        %v4207 = vadd.f32 %v4016, %v4206
        %v4208 = vpop.f32.mrb[0].mxu0
        %4209 = vmatprep.mubr.bf16.mxu0 %v3998
        %4210 = vmatmul.mubr.bf16.gmra.mrb[0].mxu0 %v3997
        %v4211 = vpop.f32.mrb[0].mxu0
        %v4212 = vadd.f32 %v4016, %v4211
        %v4213 = vpop.f32.mrb[0].mxu0
        %v4214 = vpop.f32.mrb[0].mxu0
        %v4215 = vadd.f32 %v4016, %v4214
        %v4216 = vpop.f32.mrb[0].mxu0
        %4217 = vmatprep.mubr.bf16.mxu0 %v4000
        %4218 = vmatmul.mubr.bf16.gmra.mrb[0].mxu0 %v3999
        %v4219 = vpop.f32.mrb[0].mxu0
        %v4220 = vadd.f32 %v4016, %v4219
        %v4221 = vpop.f32.mrb[0].mxu0
        %v4222 = vpop.f32.mrb[0].mxu0
        %v4223 = vadd.f32 %v4016, %v4222
        %v4224 = vpop.f32.mrb[0].mxu0
        %4225 = vmatprep.mubr.bf16.mxu0 %v4002
        %4226 = vmatmul.mubr.bf16.gmra.mrb[0].mxu0 %v4001
        %v4227 = vpop.f32.mrb[0].mxu0
        %v4228 = vadd.f32 %v4016, %v4227
        %v4229 = vpop.f32.mrb[0].mxu0
        %v4230 = vpop.f32.mrb[0].mxu0
        %v4231 = vadd.f32 %v4016, %v4230
        %v4232 = vpop.f32.mrb[0].mxu0
        %4233 = vmatprep.mubr.bf16.mxu0 %v4004
        %4234 = vmatmul.mubr.bf16.gmra.mrb[0].mxu0 %v4003
        %v4235 = vpop.f32.mrb[0].mxu0
        %v4236 = vadd.f32 %v4016, %v4235
        %v4237 = vpop.f32.mrb[0].mxu0
        %v4238 = vpop.f32.mrb[0].mxu0
        %v4239 = vadd.f32 %v4016, %v4238
        %v4240 = vpop.f32.mrb[0].mxu0
        %4241 = vmatprep.mubr.bf16.mxu0 %v4006
        %4242 = vmatmul.mubr.bf16.gmra.mrb[0].mxu0 %v4005
        %v4243 = vpop.f32.mrb[0].mxu0
        %v4244 = vadd.f32 %v4016, %v4243
        %v4245 = vpop.f32.mrb[0].mxu0
        %v4246 = vpop.f32.mrb[0].mxu0
        %v4247 = vadd.f32 %v4016, %v4246
        %v4248 = vpop.f32.mrb[0].mxu0
        %4249 = vmatprep.mubr.bf16.mxu0 %v4008
        %4250 = vmatmul.mubr.bf16.gmra.mrb[0].mxu0 %v4007
        %v4251 = vpop.f32.mrb[0].mxu0
        %v4252 = vadd.f32 %v4016, %v4251
        %v4253 = vpop.f32.mrb[0].mxu0
        %v4254 = vpop.f32.mrb[0].mxu0
        %v4255 = vadd.f32 %v4016, %v4254
        %v4256 = vpop.f32.mrb[0].mxu0
        %4257 = vmatprep.mubr.bf16.mxu0 %v4010
        %4258 = vmatmul.mubr.bf16.gmra.mrb[0].mxu0 %v4009
        %v4259 = vpop.f32.mrb[0].mxu0
        %v4260 = vadd.f32 %v4016, %v4259
        %v4261 = vpop.f32.mrb[0].mxu0
        %v4262 = vpop.f32.mrb[0].mxu0
        %v4263 = vadd.f32 %v4016, %v4262
        %v4264 = vpop.f32.mrb[0].mxu0
        %4265 = vmatprep.mubr.bf16.mxu0 %v4012
        %4266 = vmatmul.mubr.bf16.gmra.mrb[0].mxu0 %v4011
        %v4267 = vpop.f32.mrb[0].mxu0
        %v4268 = vadd.f32 %v4016, %v4267
        %v4269 = vpop.f32.mrb[0].mxu0
        %v4270 = vpop.f32.mrb[0].mxu0
        %v4271 = vadd.f32 %v4016, %v4270
        %v4272 = vpop.f32.mrb[0].mxu0
        %4273 = vdwg.mxu0
        %v4274 = vadd.f32 %v2342, %v4148
        %v4275 = vadd.f32 %v2343, %v4151
        %v4276 = vadd.f32 %v2344, %v4156
        %v4277 = vadd.f32 %v2345, %v4159
        %v4278 = vadd.f32 %v2346, %v4164
        %v4279 = vadd.f32 %v2347, %v4167
        %v4280 = vadd.f32 %v2348, %v4172
        %v4281 = vadd.f32 %v2349, %v4175
        %v4282 = vadd.f32 %v2350, %v4180
        %v4283 = vadd.f32 %v2351, %v4183
        %v4284 = vadd.f32 %v2352, %v4188
        %v4285 = vadd.f32 %v2353, %v4191
        %v4286 = vadd.f32 %v2354, %v4196
        %v4287 = vadd.f32 %v2355, %v4199
        %v4288 = vadd.f32 %v2356, %v4204
        %v4289 = vadd.f32 %v2357, %v4207
        %v4290 = vadd.f32 %v2358, %v4212
        %v4291 = vadd.f32 %v2359, %v4215
        %v4292 = vadd.f32 %v2360, %v4220
        %v4293 = vadd.f32 %v2361, %v4223
        %v4294 = vadd.f32 %v2362, %v4228
        %v4295 = vadd.f32 %v2363, %v4231
        %v4296 = vadd.f32 %v2364, %v4236
        %v4297 = vadd.f32 %v2365, %v4239
        %v4298 = vadd.f32 %v2366, %v4244
        %v4299 = vadd.f32 %v2367, %v4247
        %v4300 = vadd.f32 %v2368, %v4252
        %v4301 = vadd.f32 %v2369, %v4255
        %v4302 = vadd.f32 %v2370, %v4260
        %v4303 = vadd.f32 %v2371, %v4263
        %v4304 = vadd.f32 %v2372, %v4268
        %v4305 = vadd.f32 %v2373, %v4271
        %v4306 = vadd.f32 %v3308, %v4274
        %v4307 = vadd.f32 %v3309, %v4275
        %v4308 = vadd.f32 %v3310, %v4276
        %v4309 = vadd.f32 %v3311, %v4277
        %v4310 = vadd.f32 %v3312, %v4278
        %v4311 = vadd.f32 %v3313, %v4279
        %v4312 = vadd.f32 %v3314, %v4280
        %v4313 = vadd.f32 %v3315, %v4281
        %v4314 = vadd.f32 %v3316, %v4282
        %v4315 = vadd.f32 %v3317, %v4283
        %v4316 = vadd.f32 %v3318, %v4284
        %v4317 = vadd.f32 %v3319, %v4285
        %v4318 = vadd.f32 %v3320, %v4286
        %v4319 = vadd.f32 %v3321, %v4287
        %v4320 = vadd.f32 %v3322, %v4288
        %v4321 = vadd.f32 %v3323, %v4289
        %v4322 = vadd.f32 %v3324, %v4290
        %v4323 = vadd.f32 %v3325, %v4291
        %v4324 = vadd.f32 %v3326, %v4292
        %v4325 = vadd.f32 %v3327, %v4293
        %v4326 = vadd.f32 %v3328, %v4294
        %v4327 = vadd.f32 %v3329, %v4295
        %v4328 = vadd.f32 %v3330, %v4296
        %v4329 = vadd.f32 %v3331, %v4297
        %v4330 = vadd.f32 %v3332, %v4298
        %v4331 = vadd.f32 %v3333, %v4299
        %v4332 = vadd.f32 %v3334, %v4300
        %v4333 = vadd.f32 %v3335, %v4301
        %v4334 = vadd.f32 %v3336, %v4302
        %v4335 = vadd.f32 %v3337, %v4303
        %v4336 = vadd.f32 %v3338, %v4304
        %v4337 = vadd.f32 %v3339, %v4305
        %4338 = vst [vmem:[%s408] sm:$0xff] %v4306
        %4339 = vst [vmem:[%s408 + $0x8] sm:$0xff] %v4307
        %4340 = vst [vmem:[%s408 + $0x10] sm:$0xff] %v4308
        %4341 = vst [vmem:[%s408 + $0x18] sm:$0xff] %v4309
        %4342 = vst [vmem:[%s408 + $0x20] sm:$0xff] %v4310
        %4343 = vst [vmem:[%s408 + $0x28] sm:$0xff] %v4311
        %4344 = vst [vmem:[%s408 + $0x30] sm:$0xff] %v4312
        %4345 = vst [vmem:[%s408 + $0x38] sm:$0xff] %v4313
        %4346 = vst [vmem:[%s408 + $0x40] sm:$0xff] %v4314
        %4347 = vst [vmem:[%s408 + $0x48] sm:$0xff] %v4315
        %4348 = vst [vmem:[%s408 + $0x50] sm:$0xff] %v4316
        %4349 = vst [vmem:[%s408 + $0x58] sm:$0xff] %v4317
        %4350 = vst [vmem:[%s408 + $0x60] sm:$0xff] %v4318
        %4351 = vst [vmem:[%s408 + $0x68] sm:$0xff] %v4319
        %4352 = vst [vmem:[%s408 + $0x70] sm:$0xff] %v4320
        %4353 = vst [vmem:[%s408 + $0x78] sm:$0xff] %v4321
        %4354 = vst [vmem:[%s408 + $0x80] sm:$0xff] %v4322
        %4355 = vst [vmem:[%s408 + $0x88] sm:$0xff] %v4323
        %4356 = vst [vmem:[%s408 + $0x90] sm:$0xff] %v4324
        %4357 = vst [vmem:[%s408 + $0x98] sm:$0xff] %v4325
        %4358 = vst [vmem:[%s408 + $0xa0] sm:$0xff] %v4326
        %4359 = vst [vmem:[%s408 + $0xa8] sm:$0xff] %v4327
        %4360 = vst [vmem:[%s408 + $0xb0] sm:$0xff] %v4328
        %4361 = vst [vmem:[%s408 + $0xb8] sm:$0xff] %v4329
        %4362 = vst [vmem:[%s408 + $0xc0] sm:$0xff] %v4330
        %4363 = vst [vmem:[%s408 + $0xc8] sm:$0xff] %v4331
        %4364 = vst [vmem:[%s408 + $0xd0] sm:$0xff] %v4332
        %4365 = vst [vmem:[%s408 + $0xd8] sm:$0xff] %v4333
        %4366 = vst [vmem:[%s408 + $0xe0] sm:$0xff] %v4334
        %4367 = vst [vmem:[%s408 + $0xe8] sm:$0xff] %v4335
        %4368 = vst [vmem:[%s408 + $0xf0] sm:$0xff] %v4336
        %4369 = vst [vmem:[%s408 + $0xf8] sm:$0xff] %v4337
        %s4370 = sand.u32 %s230, 1
        %s4371 = scalar_lea.sflag [#allocation4], %s4370
        %s4372 = sand.u32 %s230, 1
        %s4373 = smul.addr %s4372, 256
        %s4374 = scalar_lea.vmem [#allocation11], %s4373
        // Predicated region
        $region77: #{_reversible_forward.1} parent=55 // pred_check
          %p4375 = pneg %p240
        $region78: #{_reversible_forward.1} parent=55 // pred_check_branch
          %4377 = sbr.rel (%p4375) target = $region80
        $region79: #{_reversible_forward.1} parent=55 // pred_region
          %s4378 = smul.u32 32, %s28
          %s4380 = ssub.s32 4096, 4096
          %4381 = vsyncadd %s4371, %s4380
          %s4382 = smul.addr %s4378, 128
          %s4383 = scalar_lea.hbm %s9, %s4382
          %s4384 = sshll.u32 %s4374, 4
          %s4385 = int_to_ptr.vmem [resolvable:$true] %s4384
          %4390 = dma.vmem_to_hbm [thread:$0]  %s4385, 4096, %s4383, %s4371, 128, 128, 8
        $region80: #{_reversible_forward.1} parent=55 // pred_fallthru
          _
      $region56: #{_reversible_forward.1} parent=5 // pred_fallthru
        _
      %p4391 = scmp.le.s32.totalorder 2, %s23
      // Predicated region
      $region81: #{_reversible_forward.1} parent=5 // pred_check
        %p4392 = pneg %p4391
      $region82: #{_reversible_forward.1} parent=5 // pred_check_branch
        %4394 = sbr.rel (%p4392) target = $region84
      $region83: #{_reversible_forward.1} parent=5 // pred_region
        %s4395 = ssub.s32 %s23, 2
        // Predicated region
        $region85: #{_reversible_forward.1} parent=83 // pred_check
          %p4396 = pneg %p246
        $region86: #{_reversible_forward.1} parent=83 // pred_check_branch
          %4398 = sbr.rel (%p4396) target = $region88
        $region87: #{_reversible_forward.1} parent=83 // pred_region
          %s4399 = sand.u32 %s231, 1
          %s4400 = scalar_lea.sflag [#allocation4], %s4399
          %s4401 = sand.u32 %s231, 1
          %s4402 = smul.addr %s4401, 256
          %s4403 = scalar_lea.vmem [#allocation11], %s4402
          %4404 = dma.done %s4400, 4096
        $region88: #{_reversible_forward.1} parent=83 // pred_fallthru
          _
      $region84: #{_reversible_forward.1} parent=5 // pred_fallthru
        _
    $region6: #{_reversible_forward.1} parent=1 // loop_footer
      %s27 = sadd.s32 1, %s23
    $region7: #{_reversible_forward.1} parent=1 // loop_footer_branch
      %22 = sbr.rel target = $region3
    $region8: #{_reversible_forward.1} parent=1 // loop_exit
      _
    %4405 = vsyncpa [#allocation3], 1
    %s4406 = scalar_lea.sflag [#allocation3], 1
    %4407 = vsyncpa %s4406, 1
    %4408 = vsyncpa [#allocation6], 1
    %4409 = vsyncpa [#allocation9], 1
    %4410 = vsyncpa [#allocation4], 1
    %s4411 = scalar_lea.sflag [#allocation4], 1
    %4412 = vsyncpa %s4411, 1

</llo_original>
